<compile_context>
chip_gen: v6e
topology: v6e:2x2x1
jax: 0.10.0
libtpu: 0.0.40
codegen_flags: <defaults>
</compile_context>

<pallas_src>
import numpy as np

import jax
import jax.numpy as jnp
from jax.experimental import pallas as pl
from jax.experimental.pallas import tpu as pltpu


# ---------------------------------------------------------------------------
# constant-matrix builders (trace/prepare time only)
# ---------------------------------------------------------------------------

def _np_row_gather(Ho, H, stride, pad, ki):
    """RG[ho, h] = 1 iff h == ho*stride - pad + ki (conv / pool row gather)."""
    m = np.zeros((Ho, H), np.float32)
    for ho in range(Ho):
        h = ho * stride - pad + ki
        if 0 <= h < H:
            m[ho, h] = 1.0
    return m


def _np_row_scatter(Ho, Hi, stride, pad, ki):
    """RS[ho, hi] = 1 iff ho == hi*stride - pad + ki (ConvTranspose row scatter)."""
    m = np.zeros((Ho, Hi), np.float32)
    for hi in range(Hi):
        ho = hi * stride - pad + ki
        if 0 <= ho < Ho:
            m[ho, hi] = 1.0
    return m


class _Packer:
    """Packs many small 2-D constants into one (rows, width) slab.

    Each entry's rows are padded to a multiple of 8 so every in-kernel static
    slice starts on a sublane boundary."""

    def __init__(self):
        self.mats = []
        self.slices = []          # (row_offset, rows, cols) -- true sizes
        self._rows = 0

    def add(self, m):
        m = jnp.asarray(m, jnp.float32)
        r, c = m.shape
        self.slices.append((self._rows, r, c))
        self.mats.append(m)
        self._rows += -(-r // 8) * 8
        return len(self.slices) - 1

    def pack(self, width, dtype):
        parts = []
        for m, (_, r, c) in zip(self.mats, self.slices):
            rp = -(-r // 8) * 8
            parts.append(jnp.pad(m, ((0, rp - r), (0, width - c))))
        return jnp.concatenate(parts, axis=0).astype(dtype)


def _conv_entries(pk, wt, b, H, W, stride, pad):
    """Conv2d with PyTorch weight layout (Cout, Cin, K, K)."""
    Cout, Cin, K, _ = wt.shape
    Ho = (H + 2 * pad - K) // stride + 1
    Wo = (W + 2 * pad - K) // stride + 1
    sel = np.zeros((K, W, Wo), np.float32)      # sel[kj, w, wo] = [w == wo*s - p + kj]
    for kj in range(K):
        for wo in range(Wo):
            w_ = wo * stride - pad + kj
            if 0 <= w_ < W:
                sel[kj, w_, wo] = 1.0
    row_ids, mat_ids = [], []
    for ki in range(K):
        row_ids.append(pk.add(_np_row_gather(Ho, H, stride, pad, ki)))
        # M_ki[(w,ci),(wo,co)] = W[co,ci,ki, w - (wo*s - p)] if valid else 0
        m = jnp.einsum('jwv,oij->wivo', sel, wt[:, :, ki, :])   # (W, Cin, Wo, Cout)
        mat_ids.append(pk.add(m.reshape(W * Cin, Wo * Cout)))
    bias_id = pk.add(jnp.tile(b, Wo).reshape(1, Wo * Cout))
    op = dict(kind='affine', row_ids=row_ids, mat_ids=mat_ids,
              bias_id=bias_id, act=None)
    return op, Ho, Wo, Cout


def _convT_entries(pk, wt, b, Hi, Wi, stride, pad):
    """ConvTranspose2d with PyTorch weight layout (Cin, Cout, K, K)."""
    Cin, Cout, K, _ = wt.shape
    Ho = (Hi - 1) * stride - 2 * pad + K
    Wo = (Wi - 1) * stride - 2 * pad + K
    sel = np.zeros((K, Wi, Wo), np.float32)     # sel[kj, wi, wo] = [wo == wi*s - p + kj]
    for kj in range(K):
        for wi in range(Wi):
            wo = wi * stride - pad + kj
            if 0 <= wo < Wo:
                sel[kj, wi, wo] = 1.0
    row_ids, mat_ids = [], []
    for ki in range(K):
        row_ids.append(pk.add(_np_row_scatter(Ho, Hi, stride, pad, ki)))
        # MT_ki[(wi,ci),(wo,co)] = W[ci,co,ki, wo - (wi*s - p)] if valid else 0
        m = jnp.einsum('jwv,ioj->wivo', sel, wt[:, :, ki, :])   # (Wi, Cin, Wo, Cout)
        mat_ids.append(pk.add(m.reshape(Wi * Cin, Wo * Cout)))
    bias_id = pk.add(jnp.tile(b, Wo).reshape(1, Wo * Cout))
    op = dict(kind='affine', row_ids=row_ids, mat_ids=mat_ids,
              bias_id=bias_id, act=None)
    return op, Ho, Wo, Cout


def _pool_entries(pk, C, H, W, k, stride):
    """MaxPool2d(k, stride) -> row gathers + channel-preserving column gathers."""
    Ho = (H - k) // stride + 1
    Wo = (W - k) // stride + 1
    row_ids, col_ids = [], []
    for ki in range(k):
        row_ids.append(pk.add(_np_row_gather(Ho, H, stride, 0, ki)))
    eye_c = np.eye(C, dtype=np.float32)
    for kj in range(k):
        selj = _np_row_gather(Wo, W, stride, 0, kj)        # (Wo, W)
        col_ids.append(pk.add(np.kron(selj.T, eye_c)))     # (W*C, Wo*C)
    op = dict(kind='pool', row_ids=row_ids, col_ids=col_ids)
    return op, Ho, Wo, C


# ---------------------------------------------------------------------------
# prepare: fold weights + spatial structure into one packed constant slab
# ---------------------------------------------------------------------------

def prepare_params(params, H=28, W=28, Cin=3, compute_dtype=jnp.bfloat16):
    pk = _Packer()
    ops = []
    h, w, c = H, W, Cin

    def add_conv(wt, b, stride, pad, act):
        nonlocal h, w, c
        op, h, w, c = _conv_entries(pk, wt, b, h, w, stride, pad)
        op['act'] = act
        ops.append(op)

    def add_convT(wt, b, stride, pad, act):
        nonlocal h, w, c
        op, h, w, c = _convT_entries(pk, wt, b, h, w, stride, pad)
        op['act'] = act
        ops.append(op)

    def add_pool(k, stride):
        nonlocal h, w, c
        op, h, w, c = _pool_entries(pk, c, h, w, k, stride)
        ops.append(op)

    # encoder: Conv(3->16,3,s3,p1)+ReLU, MaxPool(2,2), Conv(16->8,3,s2,p1)+ReLU, MaxPool(2,1)
    add_conv(params['enc_w1'], params['enc_b1'], 3, 1, 'relu')
    add_pool(2, 2)
    add_conv(params['enc_w2'], params['enc_b2'], 2, 1, 'relu')
    add_pool(2, 1)
    enc_idx = len(ops) - 1
    enc_shape = (h, w, c)                                   # (2, 2, 8)
    # decoder: ConvT(8->16,3,s2)+ReLU, ConvT(16->8,5,s3,p1)+ReLU, ConvT(8->3,2,s2,p1)+Tanh
    add_convT(params['dec_w1'], params['dec_b1'], 2, 0, 'relu')
    add_convT(params['dec_w2'], params['dec_b2'], 3, 1, 'relu')
    add_convT(params['dec_w3'], params['dec_b3'], 2, 1, 'tanh')
    dec_shape = (h, w, c)                                   # (28, 28, 3)

    width = max(cc for (_, _, cc) in pk.slices)
    pack = pk.pack(width, compute_dtype)
    meta = dict(ops=ops, slices=pk.slices, enc_idx=enc_idx,
                in_shape=(H, W, Cin), enc_shape=enc_shape, dec_shape=dec_shape,
                compute_dtype=compute_dtype)
    return pack, meta


# ---------------------------------------------------------------------------
# fused Pallas kernel + jitted forward
# ---------------------------------------------------------------------------

def make_forward(meta):
    ops = meta['ops']
    slices = meta['slices']
    enc_idx = meta['enc_idx']
    H0, W0, C0 = meta['in_shape']
    eh, ew, ec = meta['enc_shape']
    dh, dw, dc = meta['dec_shape']
    cdt = meta['compute_dtype']

    def kernel(x_ref, pack_ref, enc_ref, dec_ref):
        def mat(idx):                         # static VMEM slice of the constant slab
            r0, r, c = slices[idx]
            return pack_ref[r0:r0 + r, 0:c]

        a = x_ref[...].astype(cdt)            # (H, W*C) activation slab, one batch elem
        out32 = None
        for oi, op in enumerate(ops):
            if op['kind'] == 'affine':        # Conv2d / ConvTranspose2d (+bias +act)
                acc = None
                for rid, mid in zip(op['row_ids'], op['mat_ids']):
                    y = jnp.dot(mat(rid), a,
                                preferred_element_type=jnp.float32).astype(cdt)
                    t = jnp.dot(y, mat(mid),
                                preferred_element_type=jnp.float32)
                    acc = t if acc is None else acc + t
                acc = acc + mat(op['bias_id']).astype(jnp.float32)
                if op['act'] == 'relu':
                    acc = jnp.maximum(acc, 0.0)
                elif op['act'] == 'tanh':
                    acc = jnp.tanh(acc)
                out32 = acc
            else:                             # MaxPool2d
                u = None
                for rid in op['row_ids']:
                    y = jnp.dot(mat(rid), a, preferred_element_type=jnp.float32)
                    u = y if u is None else jnp.maximum(u, y)
                u = u.astype(cdt)
                v = None
                for cid in op['col_ids']:
                    z = jnp.dot(u, mat(cid), preferred_element_type=jnp.float32)
                    v = z if v is None else jnp.maximum(v, z)
                out32 = v
            a = out32.astype(cdt)
            if oi == enc_idx:
                enc_ref[...] = out32.astype(enc_ref.dtype)
        dec_ref[...] = out32.astype(dec_ref.dtype)

    @jax.jit
    def forward(pack, x):                     # x: (N, 3, H, W) NCHW float32
        N = x.shape[0]
        x2 = x.transpose(0, 2, 3, 1).reshape(N, H0, W0 * C0)
        enc2, dec2 = pl.pallas_call(
            kernel,
            grid=(N,),
            in_specs=[
                pl.BlockSpec((None, H0, W0 * C0), lambda n: (n, 0, 0)),
                pl.BlockSpec(pack.shape, lambda n: (0, 0)),
            ],
            out_specs=[
                pl.BlockSpec((None, eh, ew * ec), lambda n: (n, 0, 0)),
                pl.BlockSpec((None, dh, dw * dc), lambda n: (n, 0, 0)),
            ],
            out_shape=[
                jax.ShapeDtypeStruct((N, eh, ew * ec), jnp.float32),
                jax.ShapeDtypeStruct((N, dh, dw * dc), jnp.float32),
            ],
            compiler_params=pltpu.CompilerParams(
                dimension_semantics=("parallel",)),
        )(x2, pack)
        encode = enc2.reshape(N, eh, ew, ec).transpose(0, 3, 1, 2)
        decode = dec2.reshape(N, dh, dw, dc).transpose(0, 3, 1, 2)
        return encode, decode

    return forward


# ---------------------------------------------------------------------------
# parameters (PyTorch default init, PyTorch weight layouts)
# ---------------------------------------------------------------------------

def init_params(key):
    def conv_init(k, w_shape, fan_in, n_bias):
        bound = 1.0 / (fan_in ** 0.5)
        k1, k2 = jax.random.split(k)
        w = jax.random.uniform(k1, w_shape, jnp.float32, -bound, bound)
        b = jax.random.uniform(k2, (n_bias,), jnp.float32, -bound, bound)
        return w, b

    keys = jax.random.split(key, 5)
    p = {}
    p["enc_w1"], p["enc_b1"] = conv_init(keys[0], (16, 3, 3, 3), 3 * 9, 16)   # Conv2d(3,16,3,s3,p1)
    p["enc_w2"], p["enc_b2"] = conv_init(keys[1], (8, 16, 3, 3), 16 * 9, 8)   # Conv2d(16,8,3,s2,p1)
    p["dec_w1"], p["dec_b1"] = conv_init(keys[2], (8, 16, 3, 3), 16 * 9, 16)  # ConvT(8,16,3,s2)
    p["dec_w2"], p["dec_b2"] = conv_init(keys[3], (16, 8, 5, 5), 8 * 25, 8)   # ConvT(16,8,5,s3,p1)
    p["dec_w3"], p["dec_b3"] = conv_init(keys[4], (8, 3, 2, 2), 3 * 4, 3)     # ConvT(8,3,2,s2,p1)
    return p


# ---------------------------------------------------------------------------
# pure-JAX (XLA) reference of the PyTorch module, for verification
# ---------------------------------------------------------------------------

def _ref_forward(params, x):
    dn = ('NCHW', 'OIHW', 'NCHW')

    def conv(x, w, b, s, p):
        y = jax.lax.conv_general_dilated(x, w, (s, s), ((p, p), (p, p)),
                                         dimension_numbers=dn)
        return y + b[None, :, None, None]

    def convT(x, w, b, s, p):
        K = w.shape[2]
        wf = jnp.flip(w, (2, 3)).transpose(1, 0, 2, 3)
        q = K - 1 - p
        y = jax.lax.conv_general_dilated(x, wf, (1, 1), ((q, q), (q, q)),
                                         lhs_dilation=(s, s),
                                         dimension_numbers=dn)
        return y + b[None, :, None, None]

    def pool(x, k, s):
        return jax.lax.reduce_window(x, -jnp.inf, jax.lax.max,
                                     (1, 1, k, k), (1, 1, s, s), 'VALID')

    h = jax.nn.relu(conv(x, params['enc_w1'], params['enc_b1'], 3, 1))
    h = pool(h, 2, 2)
    h = jax.nn.relu(conv(h, params['enc_w2'], params['enc_b2'], 2, 1))
    enc = pool(h, 2, 1)
    d = jax.nn.relu(convT(enc, params['dec_w1'], params['dec_b1'], 2, 0))
    d = jax.nn.relu(convT(d, params['dec_w2'], params['dec_b2'], 3, 1))
    dec = jnp.tanh(convT(d, params['dec_w3'], params['dec_b3'], 2, 1))
    return enc, dec


# ---------------------------------------------------------------------------

if __name__ == "__main__":
    key = jax.random.PRNGKey(0)
    pkey, xkey = jax.random.split(key)
    params = init_params(pkey)

    # 28x28 RGB input (the size this autoencoder is built for), batch = 2, NCHW.
    x = jax.random.normal(xkey, (2, 3, 28, 28), jnp.float32)

    # One-time weight repacking (gather/scatter + weight-fold constant slab).
    pack, meta = prepare_params(params, H=28, W=28, Cin=3)
    forward = make_forward(meta)

    encode, decode = forward(pack, x)
    jax.block_until_ready((encode, decode))

    assert encode.shape == (2, 8, 2, 2), encode.shape
    assert decode.shape == (2, 3, 28, 28), decode.shape
    assert bool(jnp.all(jnp.isfinite(encode))) and bool(jnp.all(jnp.isfinite(decode)))

    # Verify against a pure-JAX f32 reference (kernel uses bf16 operands / f32 acc).
    enc_ref, dec_ref = _ref_forward(params, x)
    np.testing.assert_allclose(np.asarray(encode), np.asarray(enc_ref),
                               rtol=6e-2, atol=6e-2)
    np.testing.assert_allclose(np.asarray(decode), np.asarray(dec_ref),
                               rtol=6e-2, atol=6e-2)

    print("KERNEL_OK")
</pallas_src>

<mosaic_0001>
module attributes {stable_mosaic.version = 11 : i64} {
  func.func @kernel(%arg0: i32, %arg1: memref<1x28x84xf32, #tpu.memory_space<vmem>>, %arg2: memref<1872x160xbf16, #tpu.memory_space<vmem>>, %arg3: memref<1x2x16xf32, #tpu.memory_space<vmem>>, %arg4: memref<1x28x84xf32, #tpu.memory_space<vmem>>) attributes {dimension_semantics = [#tpu.dimension_semantics<parallel>], iteration_bounds = array<i64: 2>, scalar_prefetch = 0 : i64, scratch_operands = 0 : i64, tpu.core_type = #tpu.core_type<tc>, window_params = [{transform_indices = @transform_0, window_bounds = array<i64: 1, 28, 84>}, {pipeline_mode = #tpu.pipeline_mode<synchronous>, transform_indices = @transform_1, window_bounds = array<i64: 1872, 160>}, {transform_indices = @transform_2, window_bounds = array<i64: 1, 2, 16>}, {transform_indices = @transform_3, window_bounds = array<i64: 1, 28, 84>}]} {
    %c0 = arith.constant 0 : index
    %c0_0 = arith.constant 0 : index
    %c0_1 = arith.constant 0 : index
    %0 = vector.load %arg1[%c0, %c0_0, %c0_1] : memref<1x28x84xf32, #tpu.memory_space<vmem>>, vector<1x28x84xf32>
    %1 = vector.shape_cast %0 : vector<1x28x84xf32> to vector<28x84xf32>
    %2 = arith.truncf %1 : vector<28x84xf32> to vector<28x84xbf16>
    %c0_2 = arith.constant 0 : index
    %c0_3 = arith.constant 0 : index
    %3 = vector.load %arg2[%c0_2, %c0_3] : memref<1872x160xbf16, #tpu.memory_space<vmem>>, vector<10x28xbf16>
    %cst = arith.constant dense<0.000000e+00> : vector<10x84xf32>
    %4 = tpu.matmul %3, %2, %cst {dimension_numbers = #tpu.dot_dimension_numbers<[1], [0], [0], [1], [0, 0, 1, 1], [], []>} : vector<10x28xbf16>, vector<28x84xbf16>, vector<10x84xf32> -> vector<10x84xf32>
    %5 = arith.truncf %4 : vector<10x84xf32> to vector<10x84xbf16>
    %c16 = arith.constant 16 : index
    %c0_4 = arith.constant 0 : index
    %6 = vector.load %arg2[%c16, %c0_4] : memref<1872x160xbf16, #tpu.memory_space<vmem>>, vector<84x160xbf16>
    %cst_5 = arith.constant dense<0.000000e+00> : vector<10x160xf32>
    %7 = tpu.matmul %5, %6, %cst_5 {dimension_numbers = #tpu.dot_dimension_numbers<[1], [0], [0], [1], [0, 0, 1, 1], [], []>} : vector<10x84xbf16>, vector<84x160xbf16>, vector<10x160xf32> -> vector<10x160xf32>
    %c104 = arith.constant 104 : index
    %c0_6 = arith.constant 0 : index
    %8 = vector.load %arg2[%c104, %c0_6] : memref<1872x160xbf16, #tpu.memory_space<vmem>>, vector<10x28xbf16>
    %cst_7 = arith.constant dense<0.000000e+00> : vector<10x84xf32>
    %9 = tpu.matmul %8, %2, %cst_7 {dimension_numbers = #tpu.dot_dimension_numbers<[1], [0], [0], [1], [0, 0, 1, 1], [], []>} : vector<10x28xbf16>, vector<28x84xbf16>, vector<10x84xf32> -> vector<10x84xf32>
    %10 = arith.truncf %9 : vector<10x84xf32> to vector<10x84xbf16>
    %c120 = arith.constant 120 : index
    %c0_8 = arith.constant 0 : index
    %11 = vector.load %arg2[%c120, %c0_8] : memref<1872x160xbf16, #tpu.memory_space<vmem>>, vector<84x160xbf16>
    %cst_9 = arith.constant dense<0.000000e+00> : vector<10x160xf32>
    %12 = tpu.matmul %10, %11, %cst_9 {dimension_numbers = #tpu.dot_dimension_numbers<[1], [0], [0], [1], [0, 0, 1, 1], [], []>} : vector<10x84xbf16>, vector<84x160xbf16>, vector<10x160xf32> -> vector<10x160xf32>
    %13 = arith.addf %7, %12 : vector<10x160xf32>
    %c208 = arith.constant 208 : index
    %c0_10 = arith.constant 0 : index
    %14 = vector.load %arg2[%c208, %c0_10] : memref<1872x160xbf16, #tpu.memory_space<vmem>>, vector<10x28xbf16>
    %cst_11 = arith.constant dense<0.000000e+00> : vector<10x84xf32>
    %15 = tpu.matmul %14, %2, %cst_11 {dimension_numbers = #tpu.dot_dimension_numbers<[1], [0], [0], [1], [0, 0, 1, 1], [], []>} : vector<10x28xbf16>, vector<28x84xbf16>, vector<10x84xf32> -> vector<10x84xf32>
    %16 = arith.truncf %15 : vector<10x84xf32> to vector<10x84xbf16>
    %c224 = arith.constant 224 : index
    %c0_12 = arith.constant 0 : index
    %17 = vector.load %arg2[%c224, %c0_12] : memref<1872x160xbf16, #tpu.memory_space<vmem>>, vector<84x160xbf16>
    %cst_13 = arith.constant dense<0.000000e+00> : vector<10x160xf32>
    %18 = tpu.matmul %16, %17, %cst_13 {dimension_numbers = #tpu.dot_dimension_numbers<[1], [0], [0], [1], [0, 0, 1, 1], [], []>} : vector<10x84xbf16>, vector<84x160xbf16>, vector<10x160xf32> -> vector<10x160xf32>
    %19 = arith.addf %13, %18 : vector<10x160xf32>
    %c312 = arith.constant 312 : index
    %c0_14 = arith.constant 0 : index
    %20 = vector.load %arg2[%c312, %c0_14] : memref<1872x160xbf16, #tpu.memory_space<vmem>>, vector<1x160xbf16>
    %21 = arith.extf %20 : vector<1x160xbf16> to vector<1x160xf32>
    %22 = vector.broadcast %21 : vector<1x160xf32> to vector<10x160xf32>
    %23 = arith.addf %19, %22 : vector<10x160xf32>
    %cst_15 = arith.constant 0.000000e+00 : f32
    %24 = vector.broadcast %cst_15 : f32 to vector<10x160xf32>
    %25 = arith.maximumf %23, %24 : vector<10x160xf32>
    %26 = arith.truncf %25 : vector<10x160xf32> to vector<10x160xbf16>
    %c320 = arith.constant 320 : index
    %c0_16 = arith.constant 0 : index
    %27 = vector.load %arg2[%c320, %c0_16] : memref<1872x160xbf16, #tpu.memory_space<vmem>>, vector<5x10xbf16>
    %cst_17 = arith.constant dense<0.000000e+00> : vector<5x160xf32>
    %28 = tpu.matmul %27, %26, %cst_17 {dimension_numbers = #tpu.dot_dimension_numbers<[1], [0], [0], [1], [0, 0, 1, 1], [], []>} : vector<5x10xbf16>, vector<10x160xbf16>, vector<5x160xf32> -> vector<5x160xf32>
    %c328 = arith.constant 328 : index
    %c0_18 = arith.constant 0 : index
    %29 = vector.load %arg2[%c328, %c0_18] : memref<1872x160xbf16, #tpu.memory_space<vmem>>, vector<5x10xbf16>
    %cst_19 = arith.constant dense<0.000000e+00> : vector<5x160xf32>
    %30 = tpu.matmul %29, %26, %cst_19 {dimension_numbers = #tpu.dot_dimension_numbers<[1], [0], [0], [1], [0, 0, 1, 1], [], []>} : vector<5x10xbf16>, vector<10x160xbf16>, vector<5x160xf32> -> vector<5x160xf32>
    %31 = arith.maximumf %28, %30 : vector<5x160xf32>
    %32 = arith.truncf %31 : vector<5x160xf32> to vector<5x160xbf16>
    %c336 = arith.constant 336 : index
    %c0_20 = arith.constant 0 : index
    %33 = vector.load %arg2[%c336, %c0_20] : memref<1872x160xbf16, #tpu.memory_space<vmem>>, vector<160x80xbf16>
    %cst_21 = arith.constant dense<0.000000e+00> : vector<5x80xf32>
    %34 = tpu.matmul %32, %33, %cst_21 {dimension_numbers = #tpu.dot_dimension_numbers<[1], [0], [0], [1], [0, 0, 1, 1], [], []>} : vector<5x160xbf16>, vector<160x80xbf16>, vector<5x80xf32> -> vector<5x80xf32>
    %c496 = arith.constant 496 : index
    %c0_22 = arith.constant 0 : index
    %35 = vector.load %arg2[%c496, %c0_22] : memref<1872x160xbf16, #tpu.memory_space<vmem>>, vector<160x80xbf16>
    %cst_23 = arith.constant dense<0.000000e+00> : vector<5x80xf32>
    %36 = tpu.matmul %32, %35, %cst_23 {dimension_numbers = #tpu.dot_dimension_numbers<[1], [0], [0], [1], [0, 0, 1, 1], [], []>} : vector<5x160xbf16>, vector<160x80xbf16>, vector<5x80xf32> -> vector<5x80xf32>
    %37 = arith.maximumf %34, %36 : vector<5x80xf32>
    %38 = arith.truncf %37 : vector<5x80xf32> to vector<5x80xbf16>
    %c656 = arith.constant 656 : index
    %c0_24 = arith.constant 0 : index
    %39 = vector.load %arg2[%c656, %c0_24] : memref<1872x160xbf16, #tpu.memory_space<vmem>>, vector<3x5xbf16>
    %cst_25 = arith.constant dense<0.000000e+00> : vector<3x80xf32>
    %40 = tpu.matmul %39, %38, %cst_25 {dimension_numbers = #tpu.dot_dimension_numbers<[1], [0], [0], [1], [0, 0, 1, 1], [], []>} : vector<3x5xbf16>, vector<5x80xbf16>, vector<3x80xf32> -> vector<3x80xf32>
    %41 = arith.truncf %40 : vector<3x80xf32> to vector<3x80xbf16>
    %c664 = arith.constant 664 : index
    %c0_26 = arith.constant 0 : index
    %42 = vector.load %arg2[%c664, %c0_26] : memref<1872x160xbf16, #tpu.memory_space<vmem>>, vector<80x24xbf16>
    %cst_27 = arith.constant dense<0.000000e+00> : vector<3x24xf32>
    %43 = tpu.matmul %41, %42, %cst_27 {dimension_numbers = #tpu.dot_dimension_numbers<[1], [0], [0], [1], [0, 0, 1, 1], [], []>} : vector<3x80xbf16>, vector<80x24xbf16>, vector<3x24xf32> -> vector<3x24xf32>
    %c744 = arith.constant 744 : index
    %c0_28 = arith.constant 0 : index
    %44 = vector.load %arg2[%c744, %c0_28] : memref<1872x160xbf16, #tpu.memory_space<vmem>>, vector<3x5xbf16>
    %cst_29 = arith.constant dense<0.000000e+00> : vector<3x80xf32>
    %45 = tpu.matmul %44, %38, %cst_29 {dimension_numbers = #tpu.dot_dimension_numbers<[1], [0], [0], [1], [0, 0, 1, 1], [], []>} : vector<3x5xbf16>, vector<5x80xbf16>, vector<3x80xf32> -> vector<3x80xf32>
    %46 = arith.truncf %45 : vector<3x80xf32> to vector<3x80xbf16>
    %c752 = arith.constant 752 : index
    %c0_30 = arith.constant 0 : index
    %47 = vector.load %arg2[%c752, %c0_30] : memref<1872x160xbf16, #tpu.memory_space<vmem>>, vector<80x24xbf16>
    %cst_31 = arith.constant dense<0.000000e+00> : vector<3x24xf32>
    %48 = tpu.matmul %46, %47, %cst_31 {dimension_numbers = #tpu.dot_dimension_numbers<[1], [0], [0], [1], [0, 0, 1, 1], [], []>} : vector<3x80xbf16>, vector<80x24xbf16>, vector<3x24xf32> -> vector<3x24xf32>
    %49 = arith.addf %43, %48 : vector<3x24xf32>
    %c832 = arith.constant 832 : index
    %c0_32 = arith.constant 0 : index
    %50 = vector.load %arg2[%c832, %c0_32] : memref<1872x160xbf16, #tpu.memory_space<vmem>>, vector<3x5xbf16>
    %cst_33 = arith.constant dense<0.000000e+00> : vector<3x80xf32>
    %51 = tpu.matmul %50, %38, %cst_33 {dimension_numbers = #tpu.dot_dimension_numbers<[1], [0], [0], [1], [0, 0, 1, 1], [], []>} : vector<3x5xbf16>, vector<5x80xbf16>, vector<3x80xf32> -> vector<3x80xf32>
    %52 = arith.truncf %51 : vector<3x80xf32> to vector<3x80xbf16>
    %c840 = arith.constant 840 : index
    %c0_34 = arith.constant 0 : index
    %53 = vector.load %arg2[%c840, %c0_34] : memref<1872x160xbf16, #tpu.memory_space<vmem>>, vector<80x24xbf16>
    %cst_35 = arith.constant dense<0.000000e+00> : vector<3x24xf32>
    %54 = tpu.matmul %52, %53, %cst_35 {dimension_numbers = #tpu.dot_dimension_numbers<[1], [0], [0], [1], [0, 0, 1, 1], [], []>} : vector<3x80xbf16>, vector<80x24xbf16>, vector<3x24xf32> -> vector<3x24xf32>
    %55 = arith.addf %49, %54 : vector<3x24xf32>
    %c920 = arith.constant 920 : index
    %c0_36 = arith.constant 0 : index
    %56 = vector.load %arg2[%c920, %c0_36] : memref<1872x160xbf16, #tpu.memory_space<vmem>>, vector<1x24xbf16>
    %57 = arith.extf %56 : vector<1x24xbf16> to vector<1x24xf32>
    %58 = vector.broadcast %57 : vector<1x24xf32> to vector<3x24xf32>
    %59 = arith.addf %55, %58 : vector<3x24xf32>
    %cst_37 = arith.constant 0.000000e+00 : f32
    %60 = vector.broadcast %cst_37 : f32 to vector<3x24xf32>
    %61 = arith.maximumf %59, %60 : vector<3x24xf32>
    %62 = arith.truncf %61 : vector<3x24xf32> to vector<3x24xbf16>
    %c928 = arith.constant 928 : index
    %c0_38 = arith.constant 0 : index
    %63 = vector.load %arg2[%c928, %c0_38] : memref<1872x160xbf16, #tpu.memory_space<vmem>>, vector<2x3xbf16>
    %cst_39 = arith.constant dense<0.000000e+00> : vector<2x24xf32>
    %64 = tpu.matmul %63, %62, %cst_39 {dimension_numbers = #tpu.dot_dimension_numbers<[1], [0], [0], [1], [0, 0, 1, 1], [], []>} : vector<2x3xbf16>, vector<3x24xbf16>, vector<2x24xf32> -> vector<2x24xf32>
    %c936 = arith.constant 936 : index
    %c0_40 = arith.constant 0 : index
    %65 = vector.load %arg2[%c936, %c0_40] : memref<1872x160xbf16, #tpu.memory_space<vmem>>, vector<2x3xbf16>
    %cst_41 = arith.constant dense<0.000000e+00> : vector<2x24xf32>
    %66 = tpu.matmul %65, %62, %cst_41 {dimension_numbers = #tpu.dot_dimension_numbers<[1], [0], [0], [1], [0, 0, 1, 1], [], []>} : vector<2x3xbf16>, vector<3x24xbf16>, vector<2x24xf32> -> vector<2x24xf32>
    %67 = arith.maximumf %64, %66 : vector<2x24xf32>
    %68 = arith.truncf %67 : vector<2x24xf32> to vector<2x24xbf16>
    %c944 = arith.constant 944 : index
    %c0_42 = arith.constant 0 : index
    %69 = vector.load %arg2[%c944, %c0_42] : memref<1872x160xbf16, #tpu.memory_space<vmem>>, vector<24x16xbf16>
    %cst_43 = arith.constant dense<0.000000e+00> : vector<2x16xf32>
    %70 = tpu.matmul %68, %69, %cst_43 {dimension_numbers = #tpu.dot_dimension_numbers<[1], [0], [0], [1], [0, 0, 1, 1], [], []>} : vector<2x24xbf16>, vector<24x16xbf16>, vector<2x16xf32> -> vector<2x16xf32>
    %c968 = arith.constant 968 : index
    %c0_44 = arith.constant 0 : index
    %71 = vector.load %arg2[%c968, %c0_44] : memref<1872x160xbf16, #tpu.memory_space<vmem>>, vector<24x16xbf16>
    %cst_45 = arith.constant dense<0.000000e+00> : vector<2x16xf32>
    %72 = tpu.matmul %68, %71, %cst_45 {dimension_numbers = #tpu.dot_dimension_numbers<[1], [0], [0], [1], [0, 0, 1, 1], [], []>} : vector<2x24xbf16>, vector<24x16xbf16>, vector<2x16xf32> -> vector<2x16xf32>
    %73 = arith.maximumf %70, %72 : vector<2x16xf32>
    %74 = arith.truncf %73 : vector<2x16xf32> to vector<2x16xbf16>
    %c0_46 = arith.constant 0 : index
    %c0_47 = arith.constant 0 : index
    %c0_48 = arith.constant 0 : index
    %75 = vector.load %arg3[%c0_46, %c0_47, %c0_48] : memref<1x2x16xf32, #tpu.memory_space<vmem>>, vector<1x2x16xf32>
    %76 = vector.shape_cast %75 : vector<1x2x16xf32> to vector<2x16xf32>
    %77 = vector.shape_cast %73 : vector<2x16xf32> to vector<1x2x16xf32>
    tpu.vector_store %arg3[%c0_46, %c0_47, %c0_48], %77 {strides = array<i32>} : memref<1x2x16xf32, #tpu.memory_space<vmem>>, vector<1x2x16xf32>,
    %c992 = arith.constant 992 : index
    %c0_49 = arith.constant 0 : index
    %78 = vector.load %arg2[%c992, %c0_49] : memref<1872x160xbf16, #tpu.memory_space<vmem>>, vector<5x2xbf16>
    %cst_50 = arith.constant dense<0.000000e+00> : vector<5x16xf32>
    %79 = tpu.matmul %78, %74, %cst_50 {dimension_numbers = #tpu.dot_dimension_numbers<[1], [0], [0], [1], [0, 0, 1, 1], [], []>} : vector<5x2xbf16>, vector<2x16xbf16>, vector<5x16xf32> -> vector<5x16xf32>
    %80 = arith.truncf %79 : vector<5x16xf32> to vector<5x16xbf16>
    %c1000 = arith.constant 1000 : index
    %c0_51 = arith.constant 0 : index
    %81 = vector.load %arg2[%c1000, %c0_51] : memref<1872x160xbf16, #tpu.memory_space<vmem>>, vector<16x80xbf16>
    %cst_52 = arith.constant dense<0.000000e+00> : vector<5x80xf32>
    %82 = tpu.matmul %80, %81, %cst_52 {dimension_numbers = #tpu.dot_dimension_numbers<[1], [0], [0], [1], [0, 0, 1, 1], [], []>} : vector<5x16xbf16>, vector<16x80xbf16>, vector<5x80xf32> -> vector<5x80xf32>
    %c1016 = arith.constant 1016 : index
    %c0_53 = arith.constant 0 : index
    %83 = vector.load %arg2[%c1016, %c0_53] : memref<1872x160xbf16, #tpu.memory_space<vmem>>, vector<5x2xbf16>
    %cst_54 = arith.constant dense<0.000000e+00> : vector<5x16xf32>
    %84 = tpu.matmul %83, %74, %cst_54 {dimension_numbers = #tpu.dot_dimension_numbers<[1], [0], [0], [1], [0, 0, 1, 1], [], []>} : vector<5x2xbf16>, vector<2x16xbf16>, vector<5x16xf32> -> vector<5x16xf32>
    %85 = arith.truncf %84 : vector<5x16xf32> to vector<5x16xbf16>
    %c1024 = arith.constant 1024 : index
    %c0_55 = arith.constant 0 : index
    %86 = vector.load %arg2[%c1024, %c0_55] : memref<1872x160xbf16, #tpu.memory_space<vmem>>, vector<16x80xbf16>
    %cst_56 = arith.constant dense<0.000000e+00> : vector<5x80xf32>
    %87 = tpu.matmul %85, %86, %cst_56 {dimension_numbers = #tpu.dot_dimension_numbers<[1], [0], [0], [1], [0, 0, 1, 1], [], []>} : vector<5x16xbf16>, vector<16x80xbf16>, vector<5x80xf32> -> vector<5x80xf32>
    %88 = arith.addf %82, %87 : vector<5x80xf32>
    %c1040 = arith.constant 1040 : index
    %c0_57 = arith.constant 0 : index
    %89 = vector.load %arg2[%c1040, %c0_57] : memref<1872x160xbf16, #tpu.memory_space<vmem>>, vector<5x2xbf16>
    %cst_58 = arith.constant dense<0.000000e+00> : vector<5x16xf32>
    %90 = tpu.matmul %89, %74, %cst_58 {dimension_numbers = #tpu.dot_dimension_numbers<[1], [0], [0], [1], [0, 0, 1, 1], [], []>} : vector<5x2xbf16>, vector<2x16xbf16>, vector<5x16xf32> -> vector<5x16xf32>
    %91 = arith.truncf %90 : vector<5x16xf32> to vector<5x16xbf16>
    %c1048 = arith.constant 1048 : index
    %c0_59 = arith.constant 0 : index
    %92 = vector.load %arg2[%c1048, %c0_59] : memref<1872x160xbf16, #tpu.memory_space<vmem>>, vector<16x80xbf16>
    %cst_60 = arith.constant dense<0.000000e+00> : vector<5x80xf32>
    %93 = tpu.matmul %91, %92, %cst_60 {dimension_numbers = #tpu.dot_dimension_numbers<[1], [0], [0], [1], [0, 0, 1, 1], [], []>} : vector<5x16xbf16>, vector<16x80xbf16>, vector<5x80xf32> -> vector<5x80xf32>
    %94 = arith.addf %88, %93 : vector<5x80xf32>
    %c1064 = arith.constant 1064 : index
    %c0_61 = arith.constant 0 : index
    %95 = vector.load %arg2[%c1064, %c0_61] : memref<1872x160xbf16, #tpu.memory_space<vmem>>, vector<1x80xbf16>
    %96 = arith.extf %95 : vector<1x80xbf16> to vector<1x80xf32>
    %97 = vector.broadcast %96 : vector<1x80xf32> to vector<5x80xf32>
    %98 = arith.addf %94, %97 : vector<5x80xf32>
    %cst_62 = arith.constant 0.000000e+00 : f32
    %99 = vector.broadcast %cst_62 : f32 to vector<5x80xf32>
    %100 = arith.maximumf %98, %99 : vector<5x80xf32>
    %101 = arith.truncf %100 : vector<5x80xf32> to vector<5x80xbf16>
    %c1072 = arith.constant 1072 : index
    %c0_63 = arith.constant 0 : index
    %102 = vector.load %arg2[%c1072, %c0_63] : memref<1872x160xbf16, #tpu.memory_space<vmem>>, vector<15x5xbf16>
    %cst_64 = arith.constant dense<0.000000e+00> : vector<15x80xf32>
    %103 = tpu.matmul %102, %101, %cst_64 {dimension_numbers = #tpu.dot_dimension_numbers<[1], [0], [0], [1], [0, 0, 1, 1], [], []>} : vector<15x5xbf16>, vector<5x80xbf16>, vector<15x80xf32> -> vector<15x80xf32>
    %104 = arith.truncf %103 : vector<15x80xf32> to vector<15x80xbf16>
    %c1088 = arith.constant 1088 : index
    %c0_65 = arith.constant 0 : index
    %105 = vector.load %arg2[%c1088, %c0_65] : memref<1872x160xbf16, #tpu.memory_space<vmem>>, vector<80x120xbf16>
    %cst_66 = arith.constant dense<0.000000e+00> : vector<15x120xf32>
    %106 = tpu.matmul %104, %105, %cst_66 {dimension_numbers = #tpu.dot_dimension_numbers<[1], [0], [0], [1], [0, 0, 1, 1], [], []>} : vector<15x80xbf16>, vector<80x120xbf16>, vector<15x120xf32> -> vector<15x120xf32>
    %c1168 = arith.constant 1168 : index
    %c0_67 = arith.constant 0 : index
    %107 = vector.load %arg2[%c1168, %c0_67] : memref<1872x160xbf16, #tpu.memory_space<vmem>>, vector<15x5xbf16>
    %cst_68 = arith.constant dense<0.000000e+00> : vector<15x80xf32>
    %108 = tpu.matmul %107, %101, %cst_68 {dimension_numbers = #tpu.dot_dimension_numbers<[1], [0], [0], [1], [0, 0, 1, 1], [], []>} : vector<15x5xbf16>, vector<5x80xbf16>, vector<15x80xf32> -> vector<15x80xf32>
    %109 = arith.truncf %108 : vector<15x80xf32> to vector<15x80xbf16>
    %c1184 = arith.constant 1184 : index
    %c0_69 = arith.constant 0 : index
    %110 = vector.load %arg2[%c1184, %c0_69] : memref<1872x160xbf16, #tpu.memory_space<vmem>>, vector<80x120xbf16>
    %cst_70 = arith.constant dense<0.000000e+00> : vector<15x120xf32>
    %111 = tpu.matmul %109, %110, %cst_70 {dimension_numbers = #tpu.dot_dimension_numbers<[1], [0], [0], [1], [0, 0, 1, 1], [], []>} : vector<15x80xbf16>, vector<80x120xbf16>, vector<15x120xf32> -> vector<15x120xf32>
    %112 = arith.addf %106, %111 : vector<15x120xf32>
    %c1264 = arith.constant 1264 : index
    %c0_71 = arith.constant 0 : index
    %113 = vector.load %arg2[%c1264, %c0_71] : memref<1872x160xbf16, #tpu.memory_space<vmem>>, vector<15x5xbf16>
    %cst_72 = arith.constant dense<0.000000e+00> : vector<15x80xf32>
    %114 = tpu.matmul %113, %101, %cst_72 {dimension_numbers = #tpu.dot_dimension_numbers<[1], [0], [0], [1], [0, 0, 1, 1], [], []>} : vector<15x5xbf16>, vector<5x80xbf16>, vector<15x80xf32> -> vector<15x80xf32>
    %115 = arith.truncf %114 : vector<15x80xf32> to vector<15x80xbf16>
    %c1280 = arith.constant 1280 : index
    %c0_73 = arith.constant 0 : index
    %116 = vector.load %arg2[%c1280, %c0_73] : memref<1872x160xbf16, #tpu.memory_space<vmem>>, vector<80x120xbf16>
    %cst_74 = arith.constant dense<0.000000e+00> : vector<15x120xf32>
    %117 = tpu.matmul %115, %116, %cst_74 {dimension_numbers = #tpu.dot_dimension_numbers<[1], [0], [0], [1], [0, 0, 1, 1], [], []>} : vector<15x80xbf16>, vector<80x120xbf16>, vector<15x120xf32> -> vector<15x120xf32>
    %118 = arith.addf %112, %117 : vector<15x120xf32>
    %c1360 = arith.constant 1360 : index
    %c0_75 = arith.constant 0 : index
    %119 = vector.load %arg2[%c1360, %c0_75] : memref<1872x160xbf16, #tpu.memory_space<vmem>>, vector<15x5xbf16>
    %cst_76 = arith.constant dense<0.000000e+00> : vector<15x80xf32>
    %120 = tpu.matmul %119, %101, %cst_76 {dimension_numbers = #tpu.dot_dimension_numbers<[1], [0], [0], [1], [0, 0, 1, 1], [], []>} : vector<15x5xbf16>, vector<5x80xbf16>, vector<15x80xf32> -> vector<15x80xf32>
    %121 = arith.truncf %120 : vector<15x80xf32> to vector<15x80xbf16>
    %c1376 = arith.constant 1376 : index
    %c0_77 = arith.constant 0 : index
    %122 = vector.load %arg2[%c1376, %c0_77] : memref<1872x160xbf16, #tpu.memory_space<vmem>>, vector<80x120xbf16>
    %cst_78 = arith.constant dense<0.000000e+00> : vector<15x120xf32>
    %123 = tpu.matmul %121, %122, %cst_78 {dimension_numbers = #tpu.dot_dimension_numbers<[1], [0], [0], [1], [0, 0, 1, 1], [], []>} : vector<15x80xbf16>, vector<80x120xbf16>, vector<15x120xf32> -> vector<15x120xf32>
    %124 = arith.addf %118, %123 : vector<15x120xf32>
    %c1456 = arith.constant 1456 : index
    %c0_79 = arith.constant 0 : index
    %125 = vector.load %arg2[%c1456, %c0_79] : memref<1872x160xbf16, #tpu.memory_space<vmem>>, vector<15x5xbf16>
    %cst_80 = arith.constant dense<0.000000e+00> : vector<15x80xf32>
    %126 = tpu.matmul %125, %101, %cst_80 {dimension_numbers = #tpu.dot_dimension_numbers<[1], [0], [0], [1], [0, 0, 1, 1], [], []>} : vector<15x5xbf16>, vector<5x80xbf16>, vector<15x80xf32> -> vector<15x80xf32>
    %127 = arith.truncf %126 : vector<15x80xf32> to vector<15x80xbf16>
    %c1472 = arith.constant 1472 : index
    %c0_81 = arith.constant 0 : index
    %128 = vector.load %arg2[%c1472, %c0_81] : memref<1872x160xbf16, #tpu.memory_space<vmem>>, vector<80x120xbf16>
    %cst_82 = arith.constant dense<0.000000e+00> : vector<15x120xf32>
    %129 = tpu.matmul %127, %128, %cst_82 {dimension_numbers = #tpu.dot_dimension_numbers<[1], [0], [0], [1], [0, 0, 1, 1], [], []>} : vector<15x80xbf16>, vector<80x120xbf16>, vector<15x120xf32> -> vector<15x120xf32>
    %130 = arith.addf %124, %129 : vector<15x120xf32>
    %c1552 = arith.constant 1552 : index
    %c0_83 = arith.constant 0 : index
    %131 = vector.load %arg2[%c1552, %c0_83] : memref<1872x160xbf16, #tpu.memory_space<vmem>>, vector<1x120xbf16>
    %132 = arith.extf %131 : vector<1x120xbf16> to vector<1x120xf32>
    %133 = vector.broadcast %132 : vector<1x120xf32> to vector<15x120xf32>
    %134 = arith.addf %130, %133 : vector<15x120xf32>
    %cst_84 = arith.constant 0.000000e+00 : f32
    %135 = vector.broadcast %cst_84 : f32 to vector<15x120xf32>
    %136 = arith.maximumf %134, %135 : vector<15x120xf32>
    %137 = arith.truncf %136 : vector<15x120xf32> to vector<15x120xbf16>
    %c1560 = arith.constant 1560 : index
    %c0_85 = arith.constant 0 : index
    %138 = vector.load %arg2[%c1560, %c0_85] : memref<1872x160xbf16, #tpu.memory_space<vmem>>, vector<28x15xbf16>
    %cst_86 = arith.constant dense<0.000000e+00> : vector<28x120xf32>
    %139 = tpu.matmul %138, %137, %cst_86 {dimension_numbers = #tpu.dot_dimension_numbers<[1], [0], [0], [1], [0, 0, 1, 1], [], []>} : vector<28x15xbf16>, vector<15x120xbf16>, vector<28x120xf32> -> vector<28x120xf32>
    %140 = arith.truncf %139 : vector<28x120xf32> to vector<28x120xbf16>
    %c1592 = arith.constant 1592 : index
    %c0_87 = arith.constant 0 : index
    %141 = vector.load %arg2[%c1592, %c0_87] : memref<1872x160xbf16, #tpu.memory_space<vmem>>, vector<120x84xbf16>
    %cst_88 = arith.constant dense<0.000000e+00> : vector<28x84xf32>
    %142 = tpu.matmul %140, %141, %cst_88 {dimension_numbers = #tpu.dot_dimension_numbers<[1], [0], [0], [1], [0, 0, 1, 1], [], []>} : vector<28x120xbf16>, vector<120x84xbf16>, vector<28x84xf32> -> vector<28x84xf32>
    %c1712 = arith.constant 1712 : index
    %c0_89 = arith.constant 0 : index
    %143 = vector.load %arg2[%c1712, %c0_89] : memref<1872x160xbf16, #tpu.memory_space<vmem>>, vector<28x15xbf16>
    %cst_90 = arith.constant dense<0.000000e+00> : vector<28x120xf32>
    %144 = tpu.matmul %143, %137, %cst_90 {dimension_numbers = #tpu.dot_dimension_numbers<[1], [0], [0], [1], [0, 0, 1, 1], [], []>} : vector<28x15xbf16>, vector<15x120xbf16>, vector<28x120xf32> -> vector<28x120xf32>
    %145 = arith.truncf %144 : vector<28x120xf32> to vector<28x120xbf16>
    %c1744 = arith.constant 1744 : index
    %c0_91 = arith.constant 0 : index
    %146 = vector.load %arg2[%c1744, %c0_91] : memref<1872x160xbf16, #tpu.memory_space<vmem>>, vector<120x84xbf16>
    %cst_92 = arith.constant dense<0.000000e+00> : vector<28x84xf32>
    %147 = tpu.matmul %145, %146, %cst_92 {dimension_numbers = #tpu.dot_dimension_numbers<[1], [0], [0], [1], [0, 0, 1, 1], [], []>} : vector<28x120xbf16>, vector<120x84xbf16>, vector<28x84xf32> -> vector<28x84xf32>
    %148 = arith.addf %142, %147 : vector<28x84xf32>
    %c1864 = arith.constant 1864 : index
    %c0_93 = arith.constant 0 : index
    %149 = vector.load %arg2[%c1864, %c0_93] : memref<1872x160xbf16, #tpu.memory_space<vmem>>, vector<1x84xbf16>
    %150 = arith.extf %149 : vector<1x84xbf16> to vector<1x84xf32>
    %151 = vector.broadcast %150 : vector<1x84xf32> to vector<28x84xf32>
    %152 = arith.addf %148, %151 : vector<28x84xf32>
    %153 = math.tanh %152 : vector<28x84xf32>
    %c0_94 = arith.constant 0 : index
    %c0_95 = arith.constant 0 : index
    %c0_96 = arith.constant 0 : index
    %154 = vector.load %arg4[%c0_94, %c0_95, %c0_96] : memref<1x28x84xf32, #tpu.memory_space<vmem>>, vector<1x28x84xf32>
    %155 = vector.shape_cast %154 : vector<1x28x84xf32> to vector<28x84xf32>
    %156 = vector.shape_cast %153 : vector<28x84xf32> to vector<1x28x84xf32>
    tpu.vector_store %arg4[%c0_94, %c0_95, %c0_96], %156 {strides = array<i32>} : memref<1x28x84xf32, #tpu.memory_space<vmem>>, vector<1x28x84xf32>,
    return
  }
  func.func @transform_0(%arg0: i32) -> (i32, i32, i32) {
    %c0_i32 = arith.constant 0 : i32
    %c0_i32_0 = arith.constant 0 : i32
    %c0_i32_1 = arith.constant 0 : i32
    return %arg0, %c0_i32, %c0_i32_0 : i32, i32, i32
  }
  func.func @transform_1(%arg0: i32) -> (i32, i32) {
    %c0_i32 = arith.constant 0 : i32
    %c0_i32_0 = arith.constant 0 : i32
    %c0_i32_1 = arith.constant 0 : i32
    return %c0_i32, %c0_i32_0 : i32, i32
  }
  func.func @transform_2(%arg0: i32) -> (i32, i32, i32) {
    %c0_i32 = arith.constant 0 : i32
    %c0_i32_0 = arith.constant 0 : i32
    %c0_i32_1 = arith.constant 0 : i32
    return %arg0, %c0_i32, %c0_i32_0 : i32, i32, i32
  }
  func.func @transform_3(%arg0: i32) -> (i32, i32, i32) {
    %c0_i32 = arith.constant 0 : i32
    %c0_i32_0 = arith.constant 0 : i32
    %c0_i32_1 = arith.constant 0 : i32
    return %arg0, %c0_i32, %c0_i32_0 : i32, i32, i32
  }
}

</mosaic_0001>

<llo_original>
// kernel: forward.1
$region0: #{forward.1}
  #allocation0 [shape = 'u32[]', space=smem, size = 0x4, offset = 0x4, fixed_abs, tag = 'smem constant byte address 0x4 - core index']
  #allocation1 [shape = 'u32[144,128]{1,0:T(1,128)}', space=vmem, size = 0x12000, scoped, tag = 'internal scratch']
  %s0 = inlined_call_operand.vmem [shape: f32[2,28,84], index: 0, kind: input, shape index: {}]
  %s1 = inlined_call_operand.vmem [shape: bf16[1872,160], index: 1, kind: input, shape index: {}]
  %s2 = inlined_call_operand.vmem [shape: f32[2,2,16], index: 2, kind: output, shape index: {0}]
  %s3 = inlined_call_operand.vmem [shape: f32[2,28,84], index: 3, kind: output, shape index: {1}]
  %4 = xla_tuple %s2, %s3
  %s5 = sld [smem:[#allocation0]]
  $region49: #{forward.1} parent=0
    _
  %s7 = ssub.s32 1, %s5
  %s8 = scalar_select 0, %s7, %s5
  loop: start=0, step=1, limit=4
  $region2: #{forward.1} parent=0 // loop_pre_header
    _
  $region3: #{forward.1} parent=0 // loop_header
    %s10 = sphi 0, %s14
    %p11 = scmp.ge.s32.totalorder %s10, 4
    %s20 = sphi 0, %s22
    %s23 = sphi 0, %s20
    %s24 = sphi 0, %s23
    %s40 = sphi 0, %s24
    %s44 = sphi 0, %s44
    %s46 = sphi 0, %s44
    %s47 = sphi 0, %s46
    %s61 = sphi 0, %s47
    %s67 = sphi 0, %s69
    %s70 = sphi 0, %s67
    %s71 = sphi 0, %s70
    %s87 = sphi 0, %s71
    %s93 = sphi 0, %s95
    %s96 = sphi 0, %s93
    %s97 = sphi 0, %s96
    %s113 = sphi 0, %s97
  $region4: #{forward.1} parent=0 // loop_header_branch
    %13 = sbr.rel (%p11) target = $region8
  $region5: #{forward.1} parent=0 // loop_body
    %s15 = ssub.s32 %s10, 1
    %s16 = ssub.s32 %s10, 2
    %s17 = sadd.s32 %s10, 1
    %s18 = ssub.s32 %s10, %s17
    %p19 = scmp.eq.s32.totalorder %s18, 0
    %s21 = sadd.s32 %s20, 1
    %s22 = scalar_select %p19, %s20, %s21
    %p25 = pneg %p19
    %p26 = scmp.eq.s32.totalorder %s10, 1
    %p27 = por %p25, %p26
    %p28 = scmp.ne.s32.totalorder %s20, %s23
    %p29 = scmp.eq.s32.totalorder %s10, 0
    %p30 = por %p28, %p29
    %p31 = scmp.ne.s32.totalorder %s20, %s23
    %p32 = scmp.eq.s32.totalorder %s15, 1
    %p33 = por %p31, %p32
    %p34 = scmp.ne.s32.totalorder %s23, %s24
    %p35 = scmp.eq.s32.totalorder %s15, 0
    %p36 = por %p34, %p35
    %p37 = scmp.ne.s32.totalorder %s23, %s24
    %p38 = scmp.eq.s32.totalorder %s16, 1
    %p39 = por %p37, %p38
    %p41 = scmp.ne.s32.totalorder %s24, %s40
    %p42 = scmp.eq.s32.totalorder %s16, 0
    %p43 = por %p41, %p42
    %s45 = sadd.s32 %s44, 1
    %p48 = scmp.eq.s32.totalorder %s10, 1
    %p49 = scmp.ne.s32.totalorder %s44, %s46
    %p50 = scmp.eq.s32.totalorder %s10, 0
    %p51 = por %p49, %p50
    %p52 = scmp.ne.s32.totalorder %s44, %s46
    %p53 = scmp.eq.s32.totalorder %s15, 1
    %p54 = por %p52, %p53
    %p55 = scmp.ne.s32.totalorder %s46, %s47
    %p56 = scmp.eq.s32.totalorder %s15, 0
    %p57 = por %p55, %p56
    %p58 = scmp.ne.s32.totalorder %s46, %s47
    %p59 = scmp.eq.s32.totalorder %s16, 1
    %p60 = por %p58, %p59
    %p62 = scmp.ne.s32.totalorder %s47, %s61
    %p63 = scmp.eq.s32.totalorder %s16, 0
    %p64 = por %p62, %p63
    %s65 = ssub.s32 %s10, %s17
    %p66 = scmp.eq.s32.totalorder %s65, 0
    %s68 = sadd.s32 %s67, 1
    %s69 = scalar_select %p66, %s67, %s68
    %p72 = pneg %p66
    %p73 = scmp.eq.s32.totalorder %s10, 1
    %p74 = por %p72, %p73
    %p75 = scmp.ne.s32.totalorder %s67, %s70
    %p76 = scmp.eq.s32.totalorder %s10, 0
    %p77 = por %p75, %p76
    %p78 = scmp.ne.s32.totalorder %s67, %s70
    %p79 = scmp.eq.s32.totalorder %s15, 1
    %p80 = por %p78, %p79
    %p81 = scmp.ne.s32.totalorder %s70, %s71
    %p82 = scmp.eq.s32.totalorder %s15, 0
    %p83 = por %p81, %p82
    %p84 = scmp.ne.s32.totalorder %s70, %s71
    %p85 = scmp.eq.s32.totalorder %s16, 1
    %p86 = por %p84, %p85
    %p88 = scmp.ne.s32.totalorder %s71, %s87
    %p89 = scmp.eq.s32.totalorder %s16, 0
    %p90 = por %p88, %p89
    %s91 = ssub.s32 %s10, %s17
    %p92 = scmp.eq.s32.totalorder %s91, 0
    %s94 = sadd.s32 %s93, 1
    %s95 = scalar_select %p92, %s93, %s94
    %p98 = pneg %p92
    %p99 = scmp.eq.s32.totalorder %s10, 1
    %p100 = por %p98, %p99
    %p101 = scmp.ne.s32.totalorder %s93, %s96
    %p102 = scmp.eq.s32.totalorder %s10, 0
    %p103 = por %p101, %p102
    %p104 = scmp.ne.s32.totalorder %s93, %s96
    %p105 = scmp.eq.s32.totalorder %s15, 1
    %p106 = por %p104, %p105
    %p107 = scmp.ne.s32.totalorder %s96, %s97
    %p108 = scmp.eq.s32.totalorder %s15, 0
    %p109 = por %p107, %p108
    %p110 = scmp.ne.s32.totalorder %s96, %s97
    %p111 = scmp.eq.s32.totalorder %s16, 1
    %p112 = por %p110, %p111
    %p114 = scmp.ne.s32.totalorder %s97, %s113
    %p115 = scmp.eq.s32.totalorder %s16, 0
    %p116 = por %p114, %p115
    %p117 = scmp.le.s32.totalorder 1, %s10
    %p118 = scmp.lt.s32.totalorder %s10, 3
    %p119 = pnand %p117, %p118
    %p120 = pneg %p119
    // Predicated region
    $region9: #{forward.1} parent=5 // pred_check
      _
    $region10: #{forward.1} parent=5 // pred_check_branch
      %122 = sbr.rel (%p119) target = $region12
    $region11: #{forward.1} parent=5 // pred_region
      %s123 = ssub.s32 %s10, 1
      // Predicated region
      $region13: #{forward.1} parent=11 // pred_check
        %p124 = pneg %p57
      $region14: #{forward.1} parent=11 // pred_check_branch
        %126 = sbr.rel (%p124) target = $region16
      $region15: #{forward.1} parent=11 // pred_region
        _
      $region16: #{forward.1} parent=11 // pred_fallthru
        _
    $region12: #{forward.1} parent=5 // pred_fallthru
      _
    %p127 = scmp.lt.s32.totalorder %s10, 2
    // Predicated region
    $region17: #{forward.1} parent=5 // pred_check
      %p128 = pneg %p127
    $region18: #{forward.1} parent=5 // pred_check_branch
      %130 = sbr.rel (%p128) target = $region20
    $region19: #{forward.1} parent=5 // pred_region
      // Predicated region
      $region21: #{forward.1} parent=19 // pred_check
        %p131 = pneg %p30
      $region22: #{forward.1} parent=19 // pred_check_branch
        %133 = sbr.rel (%p131) target = $region24
      $region23: #{forward.1} parent=19 // pred_region
        %p134 = scmp.lt.s32.totalorder %s10, 1
        %s135 = scalar_select %p134, %s10, 1
        %s136 = smul.addr %s135, 4
        %s137 = smul.addr %s136, 8
        %s138 = scalar_lea.vmem %s0, %s137
      $region24: #{forward.1} parent=19 // pred_fallthru
        _
    $region20: #{forward.1} parent=5 // pred_fallthru
      _
    %p139 = scmp.le.s32.totalorder 1, %s10
    %p140 = scmp.lt.s32.totalorder %s10, 3
    %p141 = pnand %p139, %p140
    %p142 = pneg %p141
    // Predicated region
    $region25: #{forward.1} parent=5 // pred_check
      _
    $region26: #{forward.1} parent=5 // pred_check_branch
      %144 = sbr.rel (%p141) target = $region28
    $region27: #{forward.1} parent=5 // pred_region
      %s145 = ssub.s32 %s10, 1
      %p146 = scmp.lt.s32.totalorder %s15, 1
      %s147 = scalar_select %p146, %s15, 1
      %s148 = smul.addr %s147, 4
      %s149 = smul.addr %s148, 8
      %s150 = scalar_lea.vmem %s0, %s149
      %p151 = pneg %p36
      %p152 = pneg %p33
      %p153 = pneg %p57
      %p154 = pneg %p54
      %p155 = pneg %p83
      %p156 = pneg %p80
      %p157 = scmp.lt.s32.totalorder %s15, 1
      %s158 = scalar_select %p157, %s15, 1
      %s159 = smul.addr %s158, 2
      %s160 = scalar_lea.vmem %s2, %s159
      %p161 = pneg %p109
      %p162 = pneg %p106
      %p163 = scmp.lt.s32.totalorder %s15, 1
      %s164 = scalar_select %p163, %s15, 1
      %s165 = smul.addr %s164, 4
      %s166 = smul.addr %s165, 8
      %s167 = scalar_lea.vmem %s3, %s166
      %p168 = scmp.lt.s32.totalorder %s15, 1
      %s169 = scalar_select %p168, %s15, 1
      %s170 = smul.addr %s169, 4
      %s171 = smul.addr %s170, 8
      %s172 = scalar_lea.vmem %s0, %s171
      %p173 = scmp.lt.s32.totalorder %s15, 1
      %s174 = scalar_select %p173, %s15, 1
      %s175 = smul.addr %s174, 2
      %s176 = scalar_lea.vmem %s2, %s175
      %p177 = scmp.lt.s32.totalorder %s15, 1
      %s178 = scalar_select %p177, %s15, 1
      %s179 = smul.addr %s178, 4
      %s180 = smul.addr %s179, 8
      %s181 = scalar_lea.vmem %s3, %s180
      %v183 = vld [vmem:[%s172] sm:$0xff]
      %v184 = vld [vmem:[%s172 + $0x8] sm:$0xff]
      %v185 = vld [vmem:[%s172 + $0x10] sm:$0xff]
      %v186 = vld [vmem:[%s172 + $0x18] sm:$0xf]
      %v187 = vpack.c.bf16 %v184, %v183
      %v188 = vpack.c.bf16 %v186, %v185
      %v189 = vld [vmem:[%s1] sm:$0xf]
      %v190 = vld [vmem:[%s1 + $0x8] sm:$0x1]
      %v193 = vunpack.c.l.b16 %v189
      %v194 = vunpack.c.l.b16 %v190
      %v195 = vpack.c.b16 %v194, %v193
      %vm196 = vcmask 228352
      %v198 = vsel %vm196, %v195, 0
      %vm200 = vcmask 1045504
      %v202 = vsel %vm200, %v188, 0
      %204 = vmatprep.subr.bf16.mxu0 0
      %205 = vmatpush1.bf16.msra.mxu0 0
      %206 = vmatprep.subr.bf16.mxu0 0
      %207 = vmatpush1.bf16.msra.mxu0 0
      %208 = vmatprep.subr.bf16.mxu0 0
      %209 = vmatpush1.bf16.msra.mxu0 0
      %210 = vmatprep.subr.bf16.mxu0 0
      %211 = vmatpush1.bf16.msra.mxu0 0
      %212 = vmatprep.subr.bf16.mxu0 0
      %213 = vmatpush1.bf16.msra.mxu0 0
      %214 = vmatprep.subr.bf16.mxu0 0
      %215 = vmatpush1.bf16.msra.mxu0 0
      %216 = vmatprep.subr.bf16.mxu0 0
      %217 = vmatpush1.bf16.msra.mxu0 %v202
      %218 = vmatprep.subr.bf16.mxu0 0
      %219 = vmatpush1.bf16.msra.mxu0 %v187
      %220 = vmatprep.subr.bf16.mxu0 0
      %221 = vmatpush2.bf16.msra.mxu0 0
      %222 = vmatprep.subr.bf16.mxu0 0
      %223 = vmatpush2.bf16.msra.mxu0 0
      %224 = vmatprep.subr.bf16.mxu0 0
      %225 = vmatpush2.bf16.msra.mxu0 0
      %226 = vmatprep.subr.bf16.mxu0 0
      %227 = vmatpush2.bf16.msra.mxu0 0
      %228 = vmatprep.subr.bf16.mxu0 0
      %229 = vmatpush2.bf16.msra.mxu0 0
      %230 = vmatprep.subr.bf16.mxu0 0
      %231 = vmatpush2.bf16.msra.mxu0 0
      %232 = vmatprep.subr.bf16.mxu0 0
      %233 = vmatpush2.bf16.msra.mxu0 0
      %234 = vmatprep.subr.bf16.mxu0 0
      %235 = vmatpush2.bf16.msra.mxu0 0
      %236 = vmatprep.mubr.bf16.mxu0 0
      %237 = vmatmul.mubr.bf16.gmra.mxu0 %v198
      %v238 = vpop.f32.mrf.mxu0
      %v239 = vadd.f32 0.0, %v238
      %v240 = vpop.f32.mrf.mxu0
      %v241 = vpop.f32.mrf.mxu0
      %v242 = vadd.f32 0.0, %v241
      %v243 = vpop.f32.mrf.mxu0
      %244 = vdwg.mxu0
      %v245 = vpack.c.bf16 %v242, %v239
      %v246 = vld [vmem:[%s1 + $0x10] sm:$0xff]
      %v247 = vld [vmem:[%s1 + $0x18] sm:$0xff]
      %v248 = vld [vmem:[%s1 + $0x20] sm:$0xff]
      %v249 = vld [vmem:[%s1 + $0x28] sm:$0xff]
      %v250 = vld [vmem:[%s1 + $0x30] sm:$0xff]
      %v251 = vld [vmem:[%s1 + $0x38] sm:$0xff]
      %v252 = vld [vmem:[%s1 + $0x40] sm:$0xff]
      %v253 = vld [vmem:[%s1 + $0x48] sm:$0xff]
      %v254 = vld [vmem:[%s1 + $0x50] sm:$0xff]
      %v255 = vld [vmem:[%s1 + $0x58] sm:$0xff]
      %v256 = vld [vmem:[%s1 + $0x60] sm:$0x33]
      %v257 = vld [vmem:[%s1 + $0x68] sm:$0xf]
      %v258 = vld [vmem:[%s1 + $0x70] sm:$0x1]
      %v261 = vunpack.c.l.b16 %v257
      %v262 = vunpack.c.l.b16 %v258
      %v263 = vpack.c.b16 %v262, %v261
      %v265 = vsel %vm196, %v263, 0
      %267 = vmatprep.subr.bf16.mxu0 0
      %268 = vmatpush1.bf16.msra.mxu0 0
      %269 = vmatprep.subr.bf16.mxu0 0
      %270 = vmatpush1.bf16.msra.mxu0 0
      %271 = vmatprep.subr.bf16.mxu0 0
      %272 = vmatpush1.bf16.msra.mxu0 0
      %273 = vmatprep.subr.bf16.mxu0 0
      %274 = vmatpush1.bf16.msra.mxu0 0
      %275 = vmatprep.subr.bf16.mxu0 0
      %276 = vmatpush1.bf16.msra.mxu0 0
      %277 = vmatprep.subr.bf16.mxu0 0
      %278 = vmatpush1.bf16.msra.mxu0 0
      %279 = vmatprep.subr.bf16.mxu0 0
      %280 = vmatpush1.bf16.msra.mxu0 %v202
      %281 = vmatprep.subr.bf16.mxu0 0
      %282 = vmatpush1.bf16.msra.mxu0 %v187
      %283 = vmatprep.subr.bf16.mxu0 0
      %284 = vmatpush2.bf16.msra.mxu0 0
      %285 = vmatprep.subr.bf16.mxu0 0
      %286 = vmatpush2.bf16.msra.mxu0 0
      %287 = vmatprep.subr.bf16.mxu0 0
      %288 = vmatpush2.bf16.msra.mxu0 0
      %289 = vmatprep.subr.bf16.mxu0 0
      %290 = vmatpush2.bf16.msra.mxu0 0
      %291 = vmatprep.subr.bf16.mxu0 0
      %292 = vmatpush2.bf16.msra.mxu0 0
      %293 = vmatprep.subr.bf16.mxu0 0
      %294 = vmatpush2.bf16.msra.mxu0 0
      %295 = vmatprep.subr.bf16.mxu0 0
      %296 = vmatpush2.bf16.msra.mxu0 0
      %297 = vmatprep.subr.bf16.mxu0 0
      %298 = vmatpush2.bf16.msra.mxu0 0
      %299 = vmatprep.mubr.bf16.mxu0 0
      %300 = vmatmul.mubr.bf16.gmra.mxu0 %v265
      %v301 = vpop.f32.mrf.mxu0
      %v302 = vadd.f32 0.0, %v301
      %v303 = vpop.f32.mrf.mxu0
      %v304 = vpop.f32.mrf.mxu0
      %v305 = vadd.f32 0.0, %v304
      %v306 = vpop.f32.mrf.mxu0
      %307 = vdwg.mxu0
      %v308 = vpack.c.bf16 %v305, %v302
      %v309 = vld [vmem:[%s1 + $0x78] sm:$0xff]
      %v310 = vld [vmem:[%s1 + $0x80] sm:$0xff]
      %v311 = vld [vmem:[%s1 + $0x88] sm:$0xff]
      %v312 = vld [vmem:[%s1 + $0x90] sm:$0xff]
      %v313 = vld [vmem:[%s1 + $0x98] sm:$0xff]
      %v314 = vld [vmem:[%s1 + $0xa0] sm:$0xff]
      %v315 = vld [vmem:[%s1 + $0xa8] sm:$0xff]
      %v316 = vld [vmem:[%s1 + $0xb0] sm:$0xff]
      %v317 = vld [vmem:[%s1 + $0xb8] sm:$0xff]
      %v318 = vld [vmem:[%s1 + $0xc0] sm:$0xff]
      %v319 = vld [vmem:[%s1 + $0xc8] sm:$0x33]
      %v331 = vunpack.c.l.b16 %v309
      %v332 = vunpack.c.h.b16 %v309
      %v333 = vunpack.c.l.b16 %v310
      %v334 = vunpack.c.h.b16 %v310
      %v335 = vunpack.c.l.b16 %v311
      %v336 = vunpack.c.h.b16 %v311
      %v337 = vunpack.c.l.b16 %v312
      %v338 = vunpack.c.h.b16 %v312
      %v339 = vunpack.c.l.b16 %v313
      %v340 = vunpack.c.h.b16 %v313
      %v341 = vunpack.c.l.b16 %v314
      %v342 = vunpack.c.h.b16 %v314
      %v343 = vunpack.c.l.b16 %v315
      %v344 = vunpack.c.h.b16 %v315
      %v345 = vunpack.c.l.b16 %v316
      %v346 = vunpack.c.h.b16 %v316
      %v347 = vunpack.c.l.b16 %v317
      %v348 = vunpack.c.h.b16 %v317
      %v349 = vunpack.c.l.b16 %v318
      %v350 = vunpack.c.h.b16 %v318
      %v351 = vunpack.c.l.b16 %v319
      %v352 = vunpack.c.h.b16 %v319
      %v353 = vpack.c.b16 %v333, %v331
      %v354 = vpack.c.b16 %v334, %v332
      %v355 = vpack.c.b16 %v337, %v335
      %v356 = vpack.c.b16 %v338, %v336
      %v357 = vpack.c.b16 %v341, %v339
      %v358 = vpack.c.b16 %v342, %v340
      %v359 = vpack.c.b16 %v345, %v343
      %v360 = vpack.c.b16 %v346, %v344
      %v361 = vpack.c.b16 %v349, %v347
      %v362 = vpack.c.b16 %v350, %v348
      %v363 = vpack.c.b16 %v351, %v351
      %v364 = vpack.c.b16 %v352, %v352
      %vm375 = vcmask 687104
      %v377 = vsel %vm375, %v308, 0
      %vm379 = vcmask 1041408
      %v381 = vsel %vm379, %v363, 0
      %v384 = vsel %vm379, %v364, 0
      %386 = vmatprep.subr.bf16.mxu0 0
      %387 = vmatpush1.bf16.msra.mxu0 0
      %388 = vmatprep.subr.bf16.mxu0 0
      %389 = vmatpush1.bf16.msra.mxu0 0
      %390 = vmatprep.subr.bf16.mxu0 %v384
      %391 = vmatpush1.bf16.msra.mxu0 %v381
      %392 = vmatprep.subr.bf16.mxu0 %v362
      %393 = vmatpush1.bf16.msra.mxu0 %v361
      %394 = vmatprep.subr.bf16.mxu0 %v360
      %395 = vmatpush1.bf16.msra.mxu0 %v359
      %396 = vmatprep.subr.bf16.mxu0 %v358
      %397 = vmatpush1.bf16.msra.mxu0 %v357
      %398 = vmatprep.subr.bf16.mxu0 %v356
      %399 = vmatpush1.bf16.msra.mxu0 %v355
      %400 = vmatprep.subr.bf16.mxu0 %v354
      %401 = vmatpush1.bf16.msra.mxu0 %v353
      %402 = vmatprep.subr.bf16.mxu0 0
      %403 = vmatpush2.bf16.msra.mxu0 0
      %404 = vmatprep.subr.bf16.mxu0 0
      %405 = vmatpush2.bf16.msra.mxu0 0
      %406 = vmatprep.subr.bf16.mxu0 0
      %407 = vmatpush2.bf16.msra.mxu0 0
      %408 = vmatprep.subr.bf16.mxu0 0
      %409 = vmatpush2.bf16.msra.mxu0 0
      %410 = vmatprep.subr.bf16.mxu0 0
      %411 = vmatpush2.bf16.msra.mxu0 0
      %412 = vmatprep.subr.bf16.mxu0 0
      %413 = vmatpush2.bf16.msra.mxu0 0
      %414 = vmatprep.subr.bf16.mxu0 0
      %415 = vmatpush2.bf16.msra.mxu0 0
      %416 = vmatprep.subr.bf16.mxu0 0
      %417 = vmatpush2.bf16.msra.mxu0 0
      %418 = vmatprep.mubr.bf16.mxu0 0
      %419 = vmatmul.mubr.bf16.gmra.mxu0 %v377
      %v420 = vpop.f32.mrf.mxu0
      %v421 = vadd.f32 0.0, %v420
      %v422 = vpop.f32.mrf.mxu0
      %v423 = vadd.f32 0.0, %v422
      %v424 = vpop.f32.mrf.mxu0
      %v425 = vadd.f32 0.0, %v424
      %v426 = vpop.f32.mrf.mxu0
      %v427 = vadd.f32 0.0, %v426
      %428 = vdwg.mxu0
      %v440 = vunpack.c.l.b16 %v246
      %v441 = vunpack.c.h.b16 %v246
      %v442 = vunpack.c.l.b16 %v247
      %v443 = vunpack.c.h.b16 %v247
      %v444 = vunpack.c.l.b16 %v248
      %v445 = vunpack.c.h.b16 %v248
      %v446 = vunpack.c.l.b16 %v249
      %v447 = vunpack.c.h.b16 %v249
      %v448 = vunpack.c.l.b16 %v250
      %v449 = vunpack.c.h.b16 %v250
      %v450 = vunpack.c.l.b16 %v251
      %v451 = vunpack.c.h.b16 %v251
      %v452 = vunpack.c.l.b16 %v252
      %v453 = vunpack.c.h.b16 %v252
      %v454 = vunpack.c.l.b16 %v253
      %v455 = vunpack.c.h.b16 %v253
      %v456 = vunpack.c.l.b16 %v254
      %v457 = vunpack.c.h.b16 %v254
      %v458 = vunpack.c.l.b16 %v255
      %v459 = vunpack.c.h.b16 %v255
      %v460 = vunpack.c.l.b16 %v256
      %v461 = vunpack.c.h.b16 %v256
      %v462 = vpack.c.b16 %v442, %v440
      %v463 = vpack.c.b16 %v443, %v441
      %v464 = vpack.c.b16 %v446, %v444
      %v465 = vpack.c.b16 %v447, %v445
      %v466 = vpack.c.b16 %v450, %v448
      %v467 = vpack.c.b16 %v451, %v449
      %v468 = vpack.c.b16 %v454, %v452
      %v469 = vpack.c.b16 %v455, %v453
      %v470 = vpack.c.b16 %v458, %v456
      %v471 = vpack.c.b16 %v459, %v457
      %v472 = vpack.c.b16 %v460, %v460
      %v473 = vpack.c.b16 %v461, %v461
      %v485 = vsel %vm375, %v245, 0
      %v488 = vsel %vm379, %v472, 0
      %v491 = vsel %vm379, %v473, 0
      %493 = vmatprep.subr.bf16.mxu0 0
      %494 = vmatpush1.bf16.msra.mxu0 0
      %495 = vmatprep.subr.bf16.mxu0 0
      %496 = vmatpush1.bf16.msra.mxu0 0
      %497 = vmatprep.subr.bf16.mxu0 %v491
      %498 = vmatpush1.bf16.msra.mxu0 %v488
      %499 = vmatprep.subr.bf16.mxu0 %v471
      %500 = vmatpush1.bf16.msra.mxu0 %v470
      %501 = vmatprep.subr.bf16.mxu0 %v469
      %502 = vmatpush1.bf16.msra.mxu0 %v468
      %503 = vmatprep.subr.bf16.mxu0 %v467
      %504 = vmatpush1.bf16.msra.mxu0 %v466
      %505 = vmatprep.subr.bf16.mxu0 %v465
      %506 = vmatpush1.bf16.msra.mxu0 %v464
      %507 = vmatprep.subr.bf16.mxu0 %v463
      %508 = vmatpush1.bf16.msra.mxu0 %v462
      %509 = vmatprep.subr.bf16.mxu0 0
      %510 = vmatpush2.bf16.msra.mxu0 0
      %511 = vmatprep.subr.bf16.mxu0 0
      %512 = vmatpush2.bf16.msra.mxu0 0
      %513 = vmatprep.subr.bf16.mxu0 0
      %514 = vmatpush2.bf16.msra.mxu0 0
      %515 = vmatprep.subr.bf16.mxu0 0
      %516 = vmatpush2.bf16.msra.mxu0 0
      %517 = vmatprep.subr.bf16.mxu0 0
      %518 = vmatpush2.bf16.msra.mxu0 0
      %519 = vmatprep.subr.bf16.mxu0 0
      %520 = vmatpush2.bf16.msra.mxu0 0
      %521 = vmatprep.subr.bf16.mxu0 0
      %522 = vmatpush2.bf16.msra.mxu0 0
      %523 = vmatprep.subr.bf16.mxu0 0
      %524 = vmatpush2.bf16.msra.mxu0 0
      %525 = vmatprep.mubr.bf16.mxu0 0
      %526 = vmatmul.mubr.bf16.gmra.mxu0 %v485
      %v527 = vpop.f32.mrf.mxu0
      %v528 = vadd.f32 %v421, %v527
      %v529 = vpop.f32.mrf.mxu0
      %v530 = vadd.f32 %v423, %v529
      %v531 = vpop.f32.mrf.mxu0
      %v532 = vadd.f32 %v425, %v531
      %v533 = vpop.f32.mrf.mxu0
      %v534 = vadd.f32 %v427, %v533
      %535 = vdwg.mxu0
      %v536 = vld [vmem:[%s1 + $0xd0] sm:$0xf]
      %v537 = vld [vmem:[%s1 + $0xd8] sm:$0x1]
      %v540 = vunpack.c.l.b16 %v536
      %v541 = vunpack.c.l.b16 %v537
      %v542 = vpack.c.b16 %v541, %v540
      %v544 = vsel %vm196, %v542, 0
      %546 = vmatprep.subr.bf16.mxu0 0
      %547 = vmatpush1.bf16.msra.mxu0 0
      %548 = vmatprep.subr.bf16.mxu0 0
      %549 = vmatpush1.bf16.msra.mxu0 0
      %550 = vmatprep.subr.bf16.mxu0 0
      %551 = vmatpush1.bf16.msra.mxu0 0
      %552 = vmatprep.subr.bf16.mxu0 0
      %553 = vmatpush1.bf16.msra.mxu0 0
      %554 = vmatprep.subr.bf16.mxu0 0
      %555 = vmatpush1.bf16.msra.mxu0 0
      %556 = vmatprep.subr.bf16.mxu0 0
      %557 = vmatpush1.bf16.msra.mxu0 0
      %558 = vmatprep.subr.bf16.mxu0 0
      %559 = vmatpush1.bf16.msra.mxu0 %v202
      %560 = vmatprep.subr.bf16.mxu0 0
      %561 = vmatpush1.bf16.msra.mxu0 %v187
      %562 = vmatprep.subr.bf16.mxu0 0
      %563 = vmatpush2.bf16.msra.mxu0 0
      %564 = vmatprep.subr.bf16.mxu0 0
      %565 = vmatpush2.bf16.msra.mxu0 0
      %566 = vmatprep.subr.bf16.mxu0 0
      %567 = vmatpush2.bf16.msra.mxu0 0
      %568 = vmatprep.subr.bf16.mxu0 0
      %569 = vmatpush2.bf16.msra.mxu0 0
      %570 = vmatprep.subr.bf16.mxu0 0
      %571 = vmatpush2.bf16.msra.mxu0 0
      %572 = vmatprep.subr.bf16.mxu0 0
      %573 = vmatpush2.bf16.msra.mxu0 0
      %574 = vmatprep.subr.bf16.mxu0 0
      %575 = vmatpush2.bf16.msra.mxu0 0
      %576 = vmatprep.subr.bf16.mxu0 0
      %577 = vmatpush2.bf16.msra.mxu0 0
      %578 = vmatprep.mubr.bf16.mxu0 0
      %579 = vmatmul.mubr.bf16.gmra.mxu0 %v544
      %v580 = vpop.f32.mrf.mxu0
      %v581 = vadd.f32 0.0, %v580
      %v582 = vpop.f32.mrf.mxu0
      %v583 = vpop.f32.mrf.mxu0
      %v584 = vadd.f32 0.0, %v583
      %v585 = vpop.f32.mrf.mxu0
      %586 = vdwg.mxu0
      %v587 = vpack.c.bf16 %v584, %v581
      %v588 = vld [vmem:[%s1 + $0xe0] sm:$0xff]
      %v589 = vld [vmem:[%s1 + $0xe8] sm:$0xff]
      %v590 = vld [vmem:[%s1 + $0xf0] sm:$0xff]
      %v591 = vld [vmem:[%s1 + $0xf8] sm:$0xff]
      %v592 = vld [vmem:[%s1 + $0x100] sm:$0xff]
      %v593 = vld [vmem:[%s1 + $0x108] sm:$0xff]
      %v594 = vld [vmem:[%s1 + $0x110] sm:$0xff]
      %v595 = vld [vmem:[%s1 + $0x118] sm:$0xff]
      %v596 = vld [vmem:[%s1 + $0x120] sm:$0xff]
      %v597 = vld [vmem:[%s1 + $0x128] sm:$0xff]
      %v598 = vld [vmem:[%s1 + $0x130] sm:$0x33]
      %v610 = vunpack.c.l.b16 %v588
      %v611 = vunpack.c.h.b16 %v588
      %v612 = vunpack.c.l.b16 %v589
      %v613 = vunpack.c.h.b16 %v589
      %v614 = vunpack.c.l.b16 %v590
      %v615 = vunpack.c.h.b16 %v590
      %v616 = vunpack.c.l.b16 %v591
      %v617 = vunpack.c.h.b16 %v591
      %v618 = vunpack.c.l.b16 %v592
      %v619 = vunpack.c.h.b16 %v592
      %v620 = vunpack.c.l.b16 %v593
      %v621 = vunpack.c.h.b16 %v593
      %v622 = vunpack.c.l.b16 %v594
      %v623 = vunpack.c.h.b16 %v594
      %v624 = vunpack.c.l.b16 %v595
      %v625 = vunpack.c.h.b16 %v595
      %v626 = vunpack.c.l.b16 %v596
      %v627 = vunpack.c.h.b16 %v596
      %v628 = vunpack.c.l.b16 %v597
      %v629 = vunpack.c.h.b16 %v597
      %v630 = vunpack.c.l.b16 %v598
      %v631 = vunpack.c.h.b16 %v598
      %v632 = vpack.c.b16 %v612, %v610
      %v633 = vpack.c.b16 %v613, %v611
      %v634 = vpack.c.b16 %v616, %v614
      %v635 = vpack.c.b16 %v617, %v615
      %v636 = vpack.c.b16 %v620, %v618
      %v637 = vpack.c.b16 %v621, %v619
      %v638 = vpack.c.b16 %v624, %v622
      %v639 = vpack.c.b16 %v625, %v623
      %v640 = vpack.c.b16 %v628, %v626
      %v641 = vpack.c.b16 %v629, %v627
      %v642 = vpack.c.b16 %v630, %v630
      %v643 = vpack.c.b16 %v631, %v631
      %v655 = vsel %vm375, %v587, 0
      %v658 = vsel %vm379, %v642, 0
      %v661 = vsel %vm379, %v643, 0
      %663 = vmatprep.subr.bf16.mxu0 0
      %664 = vmatpush1.bf16.msra.mxu0 0
      %665 = vmatprep.subr.bf16.mxu0 0
      %666 = vmatpush1.bf16.msra.mxu0 0
      %667 = vmatprep.subr.bf16.mxu0 %v661
      %668 = vmatpush1.bf16.msra.mxu0 %v658
      %669 = vmatprep.subr.bf16.mxu0 %v641
      %670 = vmatpush1.bf16.msra.mxu0 %v640
      %671 = vmatprep.subr.bf16.mxu0 %v639
      %672 = vmatpush1.bf16.msra.mxu0 %v638
      %673 = vmatprep.subr.bf16.mxu0 %v637
      %674 = vmatpush1.bf16.msra.mxu0 %v636
      %675 = vmatprep.subr.bf16.mxu0 %v635
      %676 = vmatpush1.bf16.msra.mxu0 %v634
      %677 = vmatprep.subr.bf16.mxu0 %v633
      %678 = vmatpush1.bf16.msra.mxu0 %v632
      %679 = vmatprep.subr.bf16.mxu0 0
      %680 = vmatpush2.bf16.msra.mxu0 0
      %681 = vmatprep.subr.bf16.mxu0 0
      %682 = vmatpush2.bf16.msra.mxu0 0
      %683 = vmatprep.subr.bf16.mxu0 0
      %684 = vmatpush2.bf16.msra.mxu0 0
      %685 = vmatprep.subr.bf16.mxu0 0
      %686 = vmatpush2.bf16.msra.mxu0 0
      %687 = vmatprep.subr.bf16.mxu0 0
      %688 = vmatpush2.bf16.msra.mxu0 0
      %689 = vmatprep.subr.bf16.mxu0 0
      %690 = vmatpush2.bf16.msra.mxu0 0
      %691 = vmatprep.subr.bf16.mxu0 0
      %692 = vmatpush2.bf16.msra.mxu0 0
      %693 = vmatprep.subr.bf16.mxu0 0
      %694 = vmatpush2.bf16.msra.mxu0 0
      %695 = vmatprep.mubr.bf16.mxu0 0
      %696 = vmatmul.mubr.bf16.gmra.mxu0 %v655
      %v697 = vpop.f32.mrf.mxu0
      %v698 = vadd.f32 0.0, %v697
      %v699 = vpop.f32.mrf.mxu0
      %v700 = vadd.f32 0.0, %v699
      %v701 = vpop.f32.mrf.mxu0
      %v702 = vadd.f32 0.0, %v701
      %v703 = vpop.f32.mrf.mxu0
      %v704 = vadd.f32 0.0, %v703
      %705 = vdwg.mxu0
      %v706 = vadd.f32 %v528, %v698
      %v707 = vadd.f32 %v530, %v700
      %v708 = vadd.f32 %v532, %v702
      %v709 = vadd.f32 %v534, %v704
      %v710 = vld [vmem:[%s1 + $0x138] sm:$0x11]
      %v711 = vunpack.c.l.bf16 %v710
      %v712 = vunpack.c.h.bf16 %v710
      %v713 = vlaneseq
      %v714 = vshrl.u32 %v713, 7
      %v715 = vsub.s32 0, %v714
      %v716 = vrot.slane %v711, %v715
      %v717 = vlaneseq
      %v718 = vshrl.u32 %v717, 7
      %v719 = vsub.s32 0, %v718
      %v720 = vrot.slane %v712, %v719
      %v721 = vadd.f32 %v706, %v716
      %v722 = vadd.f32 %v707, %v720
      %v723 = vadd.f32 %v708, %v716
      %v724 = vadd.f32 %v709, %v720
      %v725 = vmax.f32 %v721, 0.0
      %v726 = vmax.f32 %v722, 0.0
      %v727 = vmax.f32 %v723, 0.0
      %v728 = vmax.f32 %v724, 0.0
      %v729 = vpack.c.bf16 %v727, %v725
      %v730 = vpack.c.bf16 %v728, %v726
      %v731 = vld [vmem:[%s1 + $0x140] sm:$0x7]
      %vm732 = vcmask 80896
      %v734 = vsel %vm732, %v731, 0
      %vm736 = vcmask 1044480
      %v738 = vsel %vm736, %v729, 0
      %v741 = vsel %vm736, %v730, 0
      %743 = vmatprep.subr.bf16.mxu0 0
      %744 = vmatpush1.bf16.msra.mxu0 0
      %745 = vmatprep.subr.bf16.mxu0 0
      %746 = vmatpush1.bf16.msra.mxu0 0
      %747 = vmatprep.subr.bf16.mxu0 0
      %748 = vmatpush1.bf16.msra.mxu0 0
      %749 = vmatprep.subr.bf16.mxu0 0
      %750 = vmatpush1.bf16.msra.mxu0 0
      %751 = vmatprep.subr.bf16.mxu0 0
      %752 = vmatpush1.bf16.msra.mxu0 0
      %753 = vmatprep.subr.bf16.mxu0 0
      %754 = vmatpush1.bf16.msra.mxu0 0
      %755 = vmatprep.subr.bf16.mxu0 0
      %756 = vmatpush1.bf16.msra.mxu0 0
      %757 = vmatprep.subr.bf16.mxu0 %v741
      %758 = vmatpush1.bf16.msra.mxu0 %v738
      %759 = vmatprep.subr.bf16.mxu0 0
      %760 = vmatpush2.bf16.msra.mxu0 0
      %761 = vmatprep.subr.bf16.mxu0 0
      %762 = vmatpush2.bf16.msra.mxu0 0
      %763 = vmatprep.subr.bf16.mxu0 0
      %764 = vmatpush2.bf16.msra.mxu0 0
      %765 = vmatprep.subr.bf16.mxu0 0
      %766 = vmatpush2.bf16.msra.mxu0 0
      %767 = vmatprep.subr.bf16.mxu0 0
      %768 = vmatpush2.bf16.msra.mxu0 0
      %769 = vmatprep.subr.bf16.mxu0 0
      %770 = vmatpush2.bf16.msra.mxu0 0
      %771 = vmatprep.subr.bf16.mxu0 0
      %772 = vmatpush2.bf16.msra.mxu0 0
      %773 = vmatprep.subr.bf16.mxu0 0
      %774 = vmatpush2.bf16.msra.mxu0 0
      %775 = vmatprep.mubr.bf16.mxu0 0
      %776 = vmatmul.mubr.bf16.gmra.mxu0 %v734
      %v777 = vpop.f32.mrf.mxu0
      %v778 = vadd.f32 0.0, %v777
      %v779 = vpop.f32.mrf.mxu0
      %v780 = vadd.f32 0.0, %v779
      %v781 = vpop.f32.mrf.mxu0
      %v782 = vpop.f32.mrf.mxu0
      %783 = vdwg.mxu0
      %v784 = vld [vmem:[%s1 + $0x148] sm:$0x7]
      %v786 = vsel %vm732, %v784, 0
      %788 = vmatprep.subr.bf16.mxu0 0
      %789 = vmatpush1.bf16.msra.mxu0 0
      %790 = vmatprep.subr.bf16.mxu0 0
      %791 = vmatpush1.bf16.msra.mxu0 0
      %792 = vmatprep.subr.bf16.mxu0 0
      %793 = vmatpush1.bf16.msra.mxu0 0
      %794 = vmatprep.subr.bf16.mxu0 0
      %795 = vmatpush1.bf16.msra.mxu0 0
      %796 = vmatprep.subr.bf16.mxu0 0
      %797 = vmatpush1.bf16.msra.mxu0 0
      %798 = vmatprep.subr.bf16.mxu0 0
      %799 = vmatpush1.bf16.msra.mxu0 0
      %800 = vmatprep.subr.bf16.mxu0 0
      %801 = vmatpush1.bf16.msra.mxu0 0
      %802 = vmatprep.subr.bf16.mxu0 %v741
      %803 = vmatpush1.bf16.msra.mxu0 %v738
      %804 = vmatprep.subr.bf16.mxu0 0
      %805 = vmatpush2.bf16.msra.mxu0 0
      %806 = vmatprep.subr.bf16.mxu0 0
      %807 = vmatpush2.bf16.msra.mxu0 0
      %808 = vmatprep.subr.bf16.mxu0 0
      %809 = vmatpush2.bf16.msra.mxu0 0
      %810 = vmatprep.subr.bf16.mxu0 0
      %811 = vmatpush2.bf16.msra.mxu0 0
      %812 = vmatprep.subr.bf16.mxu0 0
      %813 = vmatpush2.bf16.msra.mxu0 0
      %814 = vmatprep.subr.bf16.mxu0 0
      %815 = vmatpush2.bf16.msra.mxu0 0
      %816 = vmatprep.subr.bf16.mxu0 0
      %817 = vmatpush2.bf16.msra.mxu0 0
      %818 = vmatprep.subr.bf16.mxu0 0
      %819 = vmatpush2.bf16.msra.mxu0 0
      %820 = vmatprep.mubr.bf16.mxu0 0
      %821 = vmatmul.mubr.bf16.gmra.mxu0 %v786
      %v822 = vpop.f32.mrf.mxu0
      %v823 = vadd.f32 0.0, %v822
      %v824 = vpop.f32.mrf.mxu0
      %v825 = vadd.f32 0.0, %v824
      %v826 = vpop.f32.mrf.mxu0
      %v827 = vpop.f32.mrf.mxu0
      %828 = vdwg.mxu0
      %v829 = vmax.f32 %v778, %v823
      %v830 = vmax.f32 %v780, %v825
      %v831 = vpack.c.bf16 %v829, %v829
      %v832 = vpack.c.bf16 %v830, %v830
      %v833 = vld [vmem:[%s1 + $0x150] sm:$0xf]
      %v834 = vld [vmem:[%s1 + $0x158] sm:$0xf]
      %v835 = vld [vmem:[%s1 + $0x160] sm:$0xf]
      %v836 = vld [vmem:[%s1 + $0x168] sm:$0xf]
      %v837 = vld [vmem:[%s1 + $0x170] sm:$0xf]
      %v838 = vld [vmem:[%s1 + $0x178] sm:$0xf]
      %v839 = vld [vmem:[%s1 + $0x180] sm:$0xf]
      %v840 = vld [vmem:[%s1 + $0x188] sm:$0xf]
      %v841 = vld [vmem:[%s1 + $0x190] sm:$0xf]
      %v842 = vld [vmem:[%s1 + $0x198] sm:$0xf]
      %v843 = vld [vmem:[%s1 + $0x1a0] sm:$0xf]
      %v844 = vld [vmem:[%s1 + $0x1a8] sm:$0xf]
      %v845 = vld [vmem:[%s1 + $0x1b0] sm:$0xf]
      %v846 = vld [vmem:[%s1 + $0x1b8] sm:$0xf]
      %v847 = vld [vmem:[%s1 + $0x1c0] sm:$0xf]
      %v848 = vld [vmem:[%s1 + $0x1c8] sm:$0xf]
      %v849 = vld [vmem:[%s1 + $0x1d0] sm:$0xf]
      %v850 = vld [vmem:[%s1 + $0x1d8] sm:$0xf]
      %v851 = vld [vmem:[%s1 + $0x1e0] sm:$0xf]
      %v852 = vld [vmem:[%s1 + $0x1e8] sm:$0xf]
      %v873 = vunpack.c.l.b16 %v833
      %v874 = vunpack.c.l.b16 %v834
      %v875 = vunpack.c.l.b16 %v835
      %v876 = vunpack.c.l.b16 %v836
      %v877 = vunpack.c.l.b16 %v837
      %v878 = vunpack.c.l.b16 %v838
      %v879 = vunpack.c.l.b16 %v839
      %v880 = vunpack.c.l.b16 %v840
      %v881 = vunpack.c.l.b16 %v841
      %v882 = vunpack.c.l.b16 %v842
      %v883 = vunpack.c.l.b16 %v843
      %v884 = vunpack.c.l.b16 %v844
      %v885 = vunpack.c.l.b16 %v845
      %v886 = vunpack.c.l.b16 %v846
      %v887 = vunpack.c.l.b16 %v847
      %v888 = vunpack.c.l.b16 %v848
      %v889 = vunpack.c.l.b16 %v849
      %v890 = vunpack.c.l.b16 %v850
      %v891 = vunpack.c.l.b16 %v851
      %v892 = vunpack.c.l.b16 %v852
      %v893 = vpack.c.b16 %v874, %v873
      %v894 = vpack.c.b16 %v876, %v875
      %v895 = vpack.c.b16 %v878, %v877
      %v896 = vpack.c.b16 %v880, %v879
      %v897 = vpack.c.b16 %v882, %v881
      %v898 = vpack.c.b16 %v884, %v883
      %v899 = vpack.c.b16 %v886, %v885
      %v900 = vpack.c.b16 %v888, %v887
      %v901 = vpack.c.b16 %v890, %v889
      %v902 = vpack.c.b16 %v892, %v891
      %vm913 = vcmask 261120
      %v915 = vsel %vm913, %v832, 0
      %917 = vmatprep.subr.bf16.mxu0 0
      %918 = vmatpush1.bf16.msra.mxu0 %v900
      %919 = vmatprep.subr.bf16.mxu0 0
      %920 = vmatpush1.bf16.msra.mxu0 %v899
      %921 = vmatprep.subr.bf16.mxu0 0
      %922 = vmatpush1.bf16.msra.mxu0 %v898
      %923 = vmatprep.subr.bf16.mxu0 0
      %924 = vmatpush1.bf16.msra.mxu0 %v897
      %925 = vmatprep.subr.bf16.mxu0 0
      %926 = vmatpush1.bf16.msra.mxu0 %v896
      %927 = vmatprep.subr.bf16.mxu0 0
      %928 = vmatpush1.bf16.msra.mxu0 %v895
      %929 = vmatprep.subr.bf16.mxu0 0
      %930 = vmatpush1.bf16.msra.mxu0 %v894
      %931 = vmatprep.subr.bf16.mxu0 0
      %932 = vmatpush1.bf16.msra.mxu0 %v893
      %933 = vmatprep.subr.bf16.mxu0 0
      %934 = vmatpush2.bf16.msra.mxu0 0
      %935 = vmatprep.subr.bf16.mxu0 0
      %936 = vmatpush2.bf16.msra.mxu0 0
      %937 = vmatprep.subr.bf16.mxu0 0
      %938 = vmatpush2.bf16.msra.mxu0 0
      %939 = vmatprep.subr.bf16.mxu0 0
      %940 = vmatpush2.bf16.msra.mxu0 0
      %941 = vmatprep.subr.bf16.mxu0 0
      %942 = vmatpush2.bf16.msra.mxu0 0
      %943 = vmatprep.subr.bf16.mxu0 0
      %944 = vmatpush2.bf16.msra.mxu0 0
      %945 = vmatprep.subr.bf16.mxu0 0
      %946 = vmatpush2.bf16.msra.mxu0 %v902
      %947 = vmatprep.subr.bf16.mxu0 0
      %948 = vmatpush2.bf16.msra.mxu0 %v901
      %949 = vmatprep.mubr.bf16.mxu0 %v915
      %950 = vmatmul.mubr.bf16.gmra.mxu0 %v831
      %v951 = vpop.f32.mrf.mxu0
      %v952 = vadd.f32 0.0, %v951
      %v953 = vpop.f32.mrf.mxu0
      %v954 = vpop.f32.mrf.mxu0
      %v955 = vpop.f32.mrf.mxu0
      %956 = vdwg.mxu0
      %v957 = vld [vmem:[%s1 + $0x1f0] sm:$0xf]
      %v958 = vld [vmem:[%s1 + $0x1f8] sm:$0xf]
      %v959 = vld [vmem:[%s1 + $0x200] sm:$0xf]
      %v960 = vld [vmem:[%s1 + $0x208] sm:$0xf]
      %v961 = vld [vmem:[%s1 + $0x210] sm:$0xf]
      %v962 = vld [vmem:[%s1 + $0x218] sm:$0xf]
      %v963 = vld [vmem:[%s1 + $0x220] sm:$0xf]
      %v964 = vld [vmem:[%s1 + $0x228] sm:$0xf]
      %v965 = vld [vmem:[%s1 + $0x230] sm:$0xf]
      %v966 = vld [vmem:[%s1 + $0x238] sm:$0xf]
      %v967 = vld [vmem:[%s1 + $0x240] sm:$0xf]
      %v968 = vld [vmem:[%s1 + $0x248] sm:$0xf]
      %v969 = vld [vmem:[%s1 + $0x250] sm:$0xf]
      %v970 = vld [vmem:[%s1 + $0x258] sm:$0xf]
      %v971 = vld [vmem:[%s1 + $0x260] sm:$0xf]
      %v972 = vld [vmem:[%s1 + $0x268] sm:$0xf]
      %v973 = vld [vmem:[%s1 + $0x270] sm:$0xf]
      %v974 = vld [vmem:[%s1 + $0x278] sm:$0xf]
      %v975 = vld [vmem:[%s1 + $0x280] sm:$0xf]
      %v976 = vld [vmem:[%s1 + $0x288] sm:$0xf]
      %v997 = vunpack.c.l.b16 %v957
      %v998 = vunpack.c.l.b16 %v958
      %v999 = vunpack.c.l.b16 %v959
      %v1000 = vunpack.c.l.b16 %v960
      %v1001 = vunpack.c.l.b16 %v961
      %v1002 = vunpack.c.l.b16 %v962
      %v1003 = vunpack.c.l.b16 %v963
      %v1004 = vunpack.c.l.b16 %v964
      %v1005 = vunpack.c.l.b16 %v965
      %v1006 = vunpack.c.l.b16 %v966
      %v1007 = vunpack.c.l.b16 %v967
      %v1008 = vunpack.c.l.b16 %v968
      %v1009 = vunpack.c.l.b16 %v969
      %v1010 = vunpack.c.l.b16 %v970
      %v1011 = vunpack.c.l.b16 %v971
      %v1012 = vunpack.c.l.b16 %v972
      %v1013 = vunpack.c.l.b16 %v973
      %v1014 = vunpack.c.l.b16 %v974
      %v1015 = vunpack.c.l.b16 %v975
      %v1016 = vunpack.c.l.b16 %v976
      %v1017 = vpack.c.b16 %v998, %v997
      %v1018 = vpack.c.b16 %v1000, %v999
      %v1019 = vpack.c.b16 %v1002, %v1001
      %v1020 = vpack.c.b16 %v1004, %v1003
      %v1021 = vpack.c.b16 %v1006, %v1005
      %v1022 = vpack.c.b16 %v1008, %v1007
      %v1023 = vpack.c.b16 %v1010, %v1009
      %v1024 = vpack.c.b16 %v1012, %v1011
      %v1025 = vpack.c.b16 %v1014, %v1013
      %v1026 = vpack.c.b16 %v1016, %v1015
      %1037 = vmatprep.subr.bf16.mxu0 0
      %1038 = vmatpush1.bf16.msra.mxu0 %v1024
      %1039 = vmatprep.subr.bf16.mxu0 0
      %1040 = vmatpush1.bf16.msra.mxu0 %v1023
      %1041 = vmatprep.subr.bf16.mxu0 0
      %1042 = vmatpush1.bf16.msra.mxu0 %v1022
      %1043 = vmatprep.subr.bf16.mxu0 0
      %1044 = vmatpush1.bf16.msra.mxu0 %v1021
      %1045 = vmatprep.subr.bf16.mxu0 0
      %1046 = vmatpush1.bf16.msra.mxu0 %v1020
      %1047 = vmatprep.subr.bf16.mxu0 0
      %1048 = vmatpush1.bf16.msra.mxu0 %v1019
      %1049 = vmatprep.subr.bf16.mxu0 0
      %1050 = vmatpush1.bf16.msra.mxu0 %v1018
      %1051 = vmatprep.subr.bf16.mxu0 0
      %1052 = vmatpush1.bf16.msra.mxu0 %v1017
      %1053 = vmatprep.subr.bf16.mxu0 0
      %1054 = vmatpush2.bf16.msra.mxu0 0
      %1055 = vmatprep.subr.bf16.mxu0 0
      %1056 = vmatpush2.bf16.msra.mxu0 0
      %1057 = vmatprep.subr.bf16.mxu0 0
      %1058 = vmatpush2.bf16.msra.mxu0 0
      %1059 = vmatprep.subr.bf16.mxu0 0
      %1060 = vmatpush2.bf16.msra.mxu0 0
      %1061 = vmatprep.subr.bf16.mxu0 0
      %1062 = vmatpush2.bf16.msra.mxu0 0
      %1063 = vmatprep.subr.bf16.mxu0 0
      %1064 = vmatpush2.bf16.msra.mxu0 0
      %1065 = vmatprep.subr.bf16.mxu0 0
      %1066 = vmatpush2.bf16.msra.mxu0 %v1026
      %1067 = vmatprep.subr.bf16.mxu0 0
      %1068 = vmatpush2.bf16.msra.mxu0 %v1025
      %1069 = vmatprep.mubr.bf16.mxu0 %v915
      %1070 = vmatmul.mubr.bf16.gmra.mxu0 %v831
      %v1071 = vpop.f32.mrf.mxu0
      %v1072 = vadd.f32 0.0, %v1071
      %v1073 = vpop.f32.mrf.mxu0
      %v1074 = vpop.f32.mrf.mxu0
      %v1075 = vpop.f32.mrf.mxu0
      %1076 = vdwg.mxu0
      %v1077 = vmax.f32 %v952, %v1072
      %v1078 = vpack.c.bf16 %v1077, %v1077
      %v1079 = vld [vmem:[%s1 + $0x290] sm:$0x3]
      %vm1080 = vcmask 39936
      %v1082 = vsel %vm1080, %v1079, 0
      %vm1084 = vcmask 1042432
      %v1085 = vsel %vm379, 4294967295, 65535
      %v1086 = vsel %vm1084, %v1085, 0
      %v1088 = vand.u32 %v1078, %v1086
      %1090 = vmatprep.subr.bf16.mxu0 0
      %1091 = vmatpush1.bf16.msra.mxu0 0
      %1092 = vmatprep.subr.bf16.mxu0 0
      %1093 = vmatpush1.bf16.msra.mxu0 0
      %1094 = vmatprep.subr.bf16.mxu0 0
      %1095 = vmatpush1.bf16.msra.mxu0 0
      %1096 = vmatprep.subr.bf16.mxu0 0
      %1097 = vmatpush1.bf16.msra.mxu0 0
      %1098 = vmatprep.subr.bf16.mxu0 0
      %1099 = vmatpush1.bf16.msra.mxu0 0
      %1100 = vmatprep.subr.bf16.mxu0 0
      %1101 = vmatpush1.bf16.msra.mxu0 0
      %1102 = vmatprep.subr.bf16.mxu0 0
      %1103 = vmatpush1.bf16.msra.mxu0 0
      %1104 = vmatprep.subr.bf16.mxu0 0
      %1105 = vmatpush1.bf16.msra.mxu0 %v1088
      %1106 = vmatprep.subr.bf16.mxu0 0
      %1107 = vmatpush2.bf16.msra.mxu0 0
      %1108 = vmatprep.subr.bf16.mxu0 0
      %1109 = vmatpush2.bf16.msra.mxu0 0
      %1110 = vmatprep.subr.bf16.mxu0 0
      %1111 = vmatpush2.bf16.msra.mxu0 0
      %1112 = vmatprep.subr.bf16.mxu0 0
      %1113 = vmatpush2.bf16.msra.mxu0 0
      %1114 = vmatprep.subr.bf16.mxu0 0
      %1115 = vmatpush2.bf16.msra.mxu0 0
      %1116 = vmatprep.subr.bf16.mxu0 0
      %1117 = vmatpush2.bf16.msra.mxu0 0
      %1118 = vmatprep.subr.bf16.mxu0 0
      %1119 = vmatpush2.bf16.msra.mxu0 0
      %1120 = vmatprep.subr.bf16.mxu0 0
      %1121 = vmatpush2.bf16.msra.mxu0 0
      %1122 = vmatprep.mubr.bf16.mxu0 0
      %1123 = vmatmul.mubr.bf16.gmra.mxu0 %v1082
      %v1124 = vpop.f32.mrf.mxu0
      %v1125 = vadd.f32 0.0, %v1124
      %v1126 = vpop.f32.mrf.mxu0
      %v1127 = vpop.f32.mrf.mxu0
      %v1128 = vpop.f32.mrf.mxu0
      %1129 = vdwg.mxu0
      %v1130 = vpack.c.bf16 %v1125, %v1125
      %v1131 = vld [vmem:[%s1 + $0x298] sm:$0xf]
      %v1132 = vld [vmem:[%s1 + $0x2a0] sm:$0xf]
      %v1133 = vld [vmem:[%s1 + $0x2a8] sm:$0xf]
      %v1134 = vld [vmem:[%s1 + $0x2b0] sm:$0xf]
      %v1135 = vld [vmem:[%s1 + $0x2b8] sm:$0xf]
      %v1136 = vld [vmem:[%s1 + $0x2c0] sm:$0xf]
      %v1137 = vld [vmem:[%s1 + $0x2c8] sm:$0xf]
      %v1138 = vld [vmem:[%s1 + $0x2d0] sm:$0xf]
      %v1139 = vld [vmem:[%s1 + $0x2d8] sm:$0xf]
      %v1140 = vld [vmem:[%s1 + $0x2e0] sm:$0xf]
      %v1141 = vld [vmem:[%s1 + $0x2e8] sm:$0x3]
      %v1143 = vsel %vm1080, %v1141, 0
      %1145 = vmatprep.subr.bf16.mxu0 0
      %1146 = vmatpush1.bf16.msra.mxu0 0
      %1147 = vmatprep.subr.bf16.mxu0 0
      %1148 = vmatpush1.bf16.msra.mxu0 0
      %1149 = vmatprep.subr.bf16.mxu0 0
      %1150 = vmatpush1.bf16.msra.mxu0 0
      %1151 = vmatprep.subr.bf16.mxu0 0
      %1152 = vmatpush1.bf16.msra.mxu0 0
      %1153 = vmatprep.subr.bf16.mxu0 0
      %1154 = vmatpush1.bf16.msra.mxu0 0
      %1155 = vmatprep.subr.bf16.mxu0 0
      %1156 = vmatpush1.bf16.msra.mxu0 0
      %1157 = vmatprep.subr.bf16.mxu0 0
      %1158 = vmatpush1.bf16.msra.mxu0 0
      %1159 = vmatprep.subr.bf16.mxu0 0
      %1160 = vmatpush1.bf16.msra.mxu0 %v1088
      %1161 = vmatprep.subr.bf16.mxu0 0
      %1162 = vmatpush2.bf16.msra.mxu0 0
      %1163 = vmatprep.subr.bf16.mxu0 0
      %1164 = vmatpush2.bf16.msra.mxu0 0
      %1165 = vmatprep.subr.bf16.mxu0 0
      %1166 = vmatpush2.bf16.msra.mxu0 0
      %1167 = vmatprep.subr.bf16.mxu0 0
      %1168 = vmatpush2.bf16.msra.mxu0 0
      %1169 = vmatprep.subr.bf16.mxu0 0
      %1170 = vmatpush2.bf16.msra.mxu0 0
      %1171 = vmatprep.subr.bf16.mxu0 0
      %1172 = vmatpush2.bf16.msra.mxu0 0
      %1173 = vmatprep.subr.bf16.mxu0 0
      %1174 = vmatpush2.bf16.msra.mxu0 0
      %1175 = vmatprep.subr.bf16.mxu0 0
      %1176 = vmatpush2.bf16.msra.mxu0 0
      %1177 = vmatprep.mubr.bf16.mxu0 0
      %1178 = vmatmul.mubr.bf16.gmra.mxu0 %v1143
      %v1179 = vpop.f32.mrf.mxu0
      %v1180 = vadd.f32 0.0, %v1179
      %v1181 = vpop.f32.mrf.mxu0
      %v1182 = vpop.f32.mrf.mxu0
      %v1183 = vpop.f32.mrf.mxu0
      %1184 = vdwg.mxu0
      %v1185 = vpack.c.bf16 %v1180, %v1180
      %v1186 = vld [vmem:[%s1 + $0x2f0] sm:$0xf]
      %v1187 = vld [vmem:[%s1 + $0x2f8] sm:$0xf]
      %v1188 = vld [vmem:[%s1 + $0x300] sm:$0xf]
      %v1189 = vld [vmem:[%s1 + $0x308] sm:$0xf]
      %v1190 = vld [vmem:[%s1 + $0x310] sm:$0xf]
      %v1191 = vld [vmem:[%s1 + $0x318] sm:$0xf]
      %v1192 = vld [vmem:[%s1 + $0x320] sm:$0xf]
      %v1193 = vld [vmem:[%s1 + $0x328] sm:$0xf]
      %v1194 = vld [vmem:[%s1 + $0x330] sm:$0xf]
      %v1195 = vld [vmem:[%s1 + $0x338] sm:$0xf]
      %v1206 = vunpack.c.l.b16 %v1186
      %v1207 = vunpack.c.l.b16 %v1187
      %v1208 = vunpack.c.l.b16 %v1188
      %v1209 = vunpack.c.l.b16 %v1189
      %v1210 = vunpack.c.l.b16 %v1190
      %v1211 = vunpack.c.l.b16 %v1191
      %v1212 = vunpack.c.l.b16 %v1192
      %v1213 = vunpack.c.l.b16 %v1193
      %v1214 = vunpack.c.l.b16 %v1194
      %v1215 = vunpack.c.l.b16 %v1195
      %v1216 = vpack.c.b16 %v1207, %v1206
      %v1217 = vpack.c.b16 %v1209, %v1208
      %v1218 = vpack.c.b16 %v1211, %v1210
      %v1219 = vpack.c.b16 %v1213, %v1212
      %v1220 = vpack.c.b16 %v1215, %v1214
      %vm1226 = vcmask 654336
      %v1228 = vsel %vm1226, %v1185, 0
      %1230 = vmatprep.subr.bf16.mxu0 0
      %1231 = vmatpush1.bf16.msra.mxu0 0
      %1232 = vmatprep.subr.bf16.mxu0 0
      %1233 = vmatpush1.bf16.msra.mxu0 0
      %1234 = vmatprep.subr.bf16.mxu0 0
      %1235 = vmatpush1.bf16.msra.mxu0 0
      %1236 = vmatprep.subr.bf16.mxu0 0
      %1237 = vmatpush1.bf16.msra.mxu0 %v1220
      %1238 = vmatprep.subr.bf16.mxu0 0
      %1239 = vmatpush1.bf16.msra.mxu0 %v1219
      %1240 = vmatprep.subr.bf16.mxu0 0
      %1241 = vmatpush1.bf16.msra.mxu0 %v1218
      %1242 = vmatprep.subr.bf16.mxu0 0
      %1243 = vmatpush1.bf16.msra.mxu0 %v1217
      %1244 = vmatprep.subr.bf16.mxu0 0
      %1245 = vmatpush1.bf16.msra.mxu0 %v1216
      %1246 = vmatprep.subr.bf16.mxu0 0
      %1247 = vmatpush2.bf16.msra.mxu0 0
      %1248 = vmatprep.subr.bf16.mxu0 0
      %1249 = vmatpush2.bf16.msra.mxu0 0
      %1250 = vmatprep.subr.bf16.mxu0 0
      %1251 = vmatpush2.bf16.msra.mxu0 0
      %1252 = vmatprep.subr.bf16.mxu0 0
      %1253 = vmatpush2.bf16.msra.mxu0 0
      %1254 = vmatprep.subr.bf16.mxu0 0
      %1255 = vmatpush2.bf16.msra.mxu0 0
      %1256 = vmatprep.subr.bf16.mxu0 0
      %1257 = vmatpush2.bf16.msra.mxu0 0
      %1258 = vmatprep.subr.bf16.mxu0 0
      %1259 = vmatpush2.bf16.msra.mxu0 0
      %1260 = vmatprep.subr.bf16.mxu0 0
      %1261 = vmatpush2.bf16.msra.mxu0 0
      %1262 = vmatprep.mubr.bf16.mxu0 0
      %1263 = vmatmul.mubr.bf16.gmra.mxu0 %v1228
      %v1264 = vpop.f32.mrf.mxu0
      %v1265 = vadd.f32 0.0, %v1264
      %v1266 = vpop.f32.mrf.mxu0
      %v1267 = vpop.f32.mrf.mxu0
      %v1268 = vpop.f32.mrf.mxu0
      %1269 = vdwg.mxu0
      %v1280 = vunpack.c.l.b16 %v1131
      %v1281 = vunpack.c.l.b16 %v1132
      %v1282 = vunpack.c.l.b16 %v1133
      %v1283 = vunpack.c.l.b16 %v1134
      %v1284 = vunpack.c.l.b16 %v1135
      %v1285 = vunpack.c.l.b16 %v1136
      %v1286 = vunpack.c.l.b16 %v1137
      %v1287 = vunpack.c.l.b16 %v1138
      %v1288 = vunpack.c.l.b16 %v1139
      %v1289 = vunpack.c.l.b16 %v1140
      %v1290 = vpack.c.b16 %v1281, %v1280
      %v1291 = vpack.c.b16 %v1283, %v1282
      %v1292 = vpack.c.b16 %v1285, %v1284
      %v1293 = vpack.c.b16 %v1287, %v1286
      %v1294 = vpack.c.b16 %v1289, %v1288
      %v1301 = vsel %vm1226, %v1130, 0
      %1303 = vmatprep.subr.bf16.mxu0 0
      %1304 = vmatpush1.bf16.msra.mxu0 0
      %1305 = vmatprep.subr.bf16.mxu0 0
      %1306 = vmatpush1.bf16.msra.mxu0 0
      %1307 = vmatprep.subr.bf16.mxu0 0
      %1308 = vmatpush1.bf16.msra.mxu0 0
      %1309 = vmatprep.subr.bf16.mxu0 0
      %1310 = vmatpush1.bf16.msra.mxu0 %v1294
      %1311 = vmatprep.subr.bf16.mxu0 0
      %1312 = vmatpush1.bf16.msra.mxu0 %v1293
      %1313 = vmatprep.subr.bf16.mxu0 0
      %1314 = vmatpush1.bf16.msra.mxu0 %v1292
      %1315 = vmatprep.subr.bf16.mxu0 0
      %1316 = vmatpush1.bf16.msra.mxu0 %v1291
      %1317 = vmatprep.subr.bf16.mxu0 0
      %1318 = vmatpush1.bf16.msra.mxu0 %v1290
      %1319 = vmatprep.subr.bf16.mxu0 0
      %1320 = vmatpush2.bf16.msra.mxu0 0
      %1321 = vmatprep.subr.bf16.mxu0 0
      %1322 = vmatpush2.bf16.msra.mxu0 0
      %1323 = vmatprep.subr.bf16.mxu0 0
      %1324 = vmatpush2.bf16.msra.mxu0 0
      %1325 = vmatprep.subr.bf16.mxu0 0
      %1326 = vmatpush2.bf16.msra.mxu0 0
      %1327 = vmatprep.subr.bf16.mxu0 0
      %1328 = vmatpush2.bf16.msra.mxu0 0
      %1329 = vmatprep.subr.bf16.mxu0 0
      %1330 = vmatpush2.bf16.msra.mxu0 0
      %1331 = vmatprep.subr.bf16.mxu0 0
      %1332 = vmatpush2.bf16.msra.mxu0 0
      %1333 = vmatprep.subr.bf16.mxu0 0
      %1334 = vmatpush2.bf16.msra.mxu0 0
      %1335 = vmatprep.mubr.bf16.mxu0 0
      %1336 = vmatmul.mubr.bf16.gmra.mxu0 %v1301
      %v1337 = vpop.f32.mrf.mxu0
      %v1338 = vadd.f32 %v1265, %v1337
      %v1339 = vpop.f32.mrf.mxu0
      %v1340 = vpop.f32.mrf.mxu0
      %v1341 = vpop.f32.mrf.mxu0
      %1342 = vdwg.mxu0
      %v1343 = vld [vmem:[%s1 + $0x340] sm:$0x3]
      %v1345 = vsel %vm1080, %v1343, 0
      %1347 = vmatprep.subr.bf16.mxu0 0
      %1348 = vmatpush1.bf16.msra.mxu0 0
      %1349 = vmatprep.subr.bf16.mxu0 0
      %1350 = vmatpush1.bf16.msra.mxu0 0
      %1351 = vmatprep.subr.bf16.mxu0 0
      %1352 = vmatpush1.bf16.msra.mxu0 0
      %1353 = vmatprep.subr.bf16.mxu0 0
      %1354 = vmatpush1.bf16.msra.mxu0 0
      %1355 = vmatprep.subr.bf16.mxu0 0
      %1356 = vmatpush1.bf16.msra.mxu0 0
      %1357 = vmatprep.subr.bf16.mxu0 0
      %1358 = vmatpush1.bf16.msra.mxu0 0
      %1359 = vmatprep.subr.bf16.mxu0 0
      %1360 = vmatpush1.bf16.msra.mxu0 0
      %1361 = vmatprep.subr.bf16.mxu0 0
      %1362 = vmatpush1.bf16.msra.mxu0 %v1088
      %1363 = vmatprep.subr.bf16.mxu0 0
      %1364 = vmatpush2.bf16.msra.mxu0 0
      %1365 = vmatprep.subr.bf16.mxu0 0
      %1366 = vmatpush2.bf16.msra.mxu0 0
      %1367 = vmatprep.subr.bf16.mxu0 0
      %1368 = vmatpush2.bf16.msra.mxu0 0
      %1369 = vmatprep.subr.bf16.mxu0 0
      %1370 = vmatpush2.bf16.msra.mxu0 0
      %1371 = vmatprep.subr.bf16.mxu0 0
      %1372 = vmatpush2.bf16.msra.mxu0 0
      %1373 = vmatprep.subr.bf16.mxu0 0
      %1374 = vmatpush2.bf16.msra.mxu0 0
      %1375 = vmatprep.subr.bf16.mxu0 0
      %1376 = vmatpush2.bf16.msra.mxu0 0
      %1377 = vmatprep.subr.bf16.mxu0 0
      %1378 = vmatpush2.bf16.msra.mxu0 0
      %1379 = vmatprep.mubr.bf16.mxu0 0
      %1380 = vmatmul.mubr.bf16.gmra.mxu0 %v1345
      %v1381 = vpop.f32.mrf.mxu0
      %v1382 = vadd.f32 0.0, %v1381
      %v1383 = vpop.f32.mrf.mxu0
      %v1384 = vpop.f32.mrf.mxu0
      %v1385 = vpop.f32.mrf.mxu0
      %1386 = vdwg.mxu0
      %v1387 = vpack.c.bf16 %v1382, %v1382
      %v1388 = vld [vmem:[%s1 + $0x348] sm:$0xf]
      %v1389 = vld [vmem:[%s1 + $0x350] sm:$0xf]
      %v1390 = vld [vmem:[%s1 + $0x358] sm:$0xf]
      %v1391 = vld [vmem:[%s1 + $0x360] sm:$0xf]
      %v1392 = vld [vmem:[%s1 + $0x368] sm:$0xf]
      %v1393 = vld [vmem:[%s1 + $0x370] sm:$0xf]
      %v1394 = vld [vmem:[%s1 + $0x378] sm:$0xf]
      %v1395 = vld [vmem:[%s1 + $0x380] sm:$0xf]
      %v1396 = vld [vmem:[%s1 + $0x388] sm:$0xf]
      %v1397 = vld [vmem:[%s1 + $0x390] sm:$0xf]
      %v1408 = vunpack.c.l.b16 %v1388
      %v1409 = vunpack.c.l.b16 %v1389
      %v1410 = vunpack.c.l.b16 %v1390
      %v1411 = vunpack.c.l.b16 %v1391
      %v1412 = vunpack.c.l.b16 %v1392
      %v1413 = vunpack.c.l.b16 %v1393
      %v1414 = vunpack.c.l.b16 %v1394
      %v1415 = vunpack.c.l.b16 %v1395
      %v1416 = vunpack.c.l.b16 %v1396
      %v1417 = vunpack.c.l.b16 %v1397
      %v1418 = vpack.c.b16 %v1409, %v1408
      %v1419 = vpack.c.b16 %v1411, %v1410
      %v1420 = vpack.c.b16 %v1413, %v1412
      %v1421 = vpack.c.b16 %v1415, %v1414
      %v1422 = vpack.c.b16 %v1417, %v1416
      %v1429 = vsel %vm1226, %v1387, 0
      %1431 = vmatprep.subr.bf16.mxu0 0
      %1432 = vmatpush1.bf16.msra.mxu0 0
      %1433 = vmatprep.subr.bf16.mxu0 0
      %1434 = vmatpush1.bf16.msra.mxu0 0
      %1435 = vmatprep.subr.bf16.mxu0 0
      %1436 = vmatpush1.bf16.msra.mxu0 0
      %1437 = vmatprep.subr.bf16.mxu0 0
      %1438 = vmatpush1.bf16.msra.mxu0 %v1422
      %1439 = vmatprep.subr.bf16.mxu0 0
      %1440 = vmatpush1.bf16.msra.mxu0 %v1421
      %1441 = vmatprep.subr.bf16.mxu0 0
      %1442 = vmatpush1.bf16.msra.mxu0 %v1420
      %1443 = vmatprep.subr.bf16.mxu0 0
      %1444 = vmatpush1.bf16.msra.mxu0 %v1419
      %1445 = vmatprep.subr.bf16.mxu0 0
      %1446 = vmatpush1.bf16.msra.mxu0 %v1418
      %1447 = vmatprep.subr.bf16.mxu0 0
      %1448 = vmatpush2.bf16.msra.mxu0 0
      %1449 = vmatprep.subr.bf16.mxu0 0
      %1450 = vmatpush2.bf16.msra.mxu0 0
      %1451 = vmatprep.subr.bf16.mxu0 0
      %1452 = vmatpush2.bf16.msra.mxu0 0
      %1453 = vmatprep.subr.bf16.mxu0 0
      %1454 = vmatpush2.bf16.msra.mxu0 0
      %1455 = vmatprep.subr.bf16.mxu0 0
      %1456 = vmatpush2.bf16.msra.mxu0 0
      %1457 = vmatprep.subr.bf16.mxu0 0
      %1458 = vmatpush2.bf16.msra.mxu0 0
      %1459 = vmatprep.subr.bf16.mxu0 0
      %1460 = vmatpush2.bf16.msra.mxu0 0
      %1461 = vmatprep.subr.bf16.mxu0 0
      %1462 = vmatpush2.bf16.msra.mxu0 0
      %1463 = vmatprep.mubr.bf16.mxu0 0
      %1464 = vmatmul.mubr.bf16.gmra.mxu0 %v1429
      %v1465 = vpop.f32.mrf.mxu0
      %v1466 = vadd.f32 0.0, %v1465
      %v1467 = vpop.f32.mrf.mxu0
      %v1468 = vpop.f32.mrf.mxu0
      %v1469 = vpop.f32.mrf.mxu0
      %1470 = vdwg.mxu0
      %v1471 = vadd.f32 %v1338, %v1466
      %v1472 = vld [vmem:[%s1 + $0x398] sm:$0x1]
      %v1473 = vunpack.c.l.bf16 %v1472
      %v1474 = vlaneseq
      %v1475 = vshrl.u32 %v1474, 7
      %v1476 = vsub.s32 0, %v1475
      %v1477 = vrot.slane %v1473, %v1476
      %v1478 = vadd.f32 %v1471, %v1477
      %v1479 = vmax.f32 %v1478, 0.0
      %v1480 = vpack.c.bf16 %v1479, %v1479
      %v1481 = vld [vmem:[%s1 + $0x3a0] sm:$0x1]
      %vm1482 = vcmask 23552
      %v1484 = vsel %vm1482, %v1481, 0
      %vm1486 = vcmask 1040384
      %v1487 = vsel %vm1486, 4294967295, 65535
      %v1488 = vsel %vm379, %v1487, 0
      %v1490 = vand.u32 %v1480, %v1488
      %1492 = vmatprep.subr.bf16.mxu0 0
      %1493 = vmatpush1.bf16.msra.mxu0 0
      %1494 = vmatprep.subr.bf16.mxu0 0
      %1495 = vmatpush1.bf16.msra.mxu0 0
      %1496 = vmatprep.subr.bf16.mxu0 0
      %1497 = vmatpush1.bf16.msra.mxu0 0
      %1498 = vmatprep.subr.bf16.mxu0 0
      %1499 = vmatpush1.bf16.msra.mxu0 0
      %1500 = vmatprep.subr.bf16.mxu0 0
      %1501 = vmatpush1.bf16.msra.mxu0 0
      %1502 = vmatprep.subr.bf16.mxu0 0
      %1503 = vmatpush1.bf16.msra.mxu0 0
      %1504 = vmatprep.subr.bf16.mxu0 0
      %1505 = vmatpush1.bf16.msra.mxu0 0
      %1506 = vmatprep.subr.bf16.mxu0 0
      %1507 = vmatpush1.bf16.msra.mxu0 %v1490
      %1508 = vmatprep.subr.bf16.mxu0 0
      %1509 = vmatpush2.bf16.msra.mxu0 0
      %1510 = vmatprep.subr.bf16.mxu0 0
      %1511 = vmatpush2.bf16.msra.mxu0 0
      %1512 = vmatprep.subr.bf16.mxu0 0
      %1513 = vmatpush2.bf16.msra.mxu0 0
      %1514 = vmatprep.subr.bf16.mxu0 0
      %1515 = vmatpush2.bf16.msra.mxu0 0
      %1516 = vmatprep.subr.bf16.mxu0 0
      %1517 = vmatpush2.bf16.msra.mxu0 0
      %1518 = vmatprep.subr.bf16.mxu0 0
      %1519 = vmatpush2.bf16.msra.mxu0 0
      %1520 = vmatprep.subr.bf16.mxu0 0
      %1521 = vmatpush2.bf16.msra.mxu0 0
      %1522 = vmatprep.subr.bf16.mxu0 0
      %1523 = vmatpush2.bf16.msra.mxu0 0
      %1524 = vmatprep.mubr.bf16.mxu0 0
      %1525 = vmatmul.mubr.bf16.gmra.mxu0 %v1484
      %v1526 = vpop.f32.mrf.mxu0
      %v1527 = vadd.f32 0.0, %v1526
      %v1528 = vpop.f32.mrf.mxu0
      %v1529 = vpop.f32.mrf.mxu0
      %v1530 = vpop.f32.mrf.mxu0
      %1531 = vdwg.mxu0
      %v1532 = vld [vmem:[%s1 + $0x3a8] sm:$0x1]
      %v1534 = vsel %vm1482, %v1532, 0
      %1536 = vmatprep.subr.bf16.mxu0 0
      %1537 = vmatpush1.bf16.msra.mxu0 0
      %1538 = vmatprep.subr.bf16.mxu0 0
      %1539 = vmatpush1.bf16.msra.mxu0 0
      %1540 = vmatprep.subr.bf16.mxu0 0
      %1541 = vmatpush1.bf16.msra.mxu0 0
      %1542 = vmatprep.subr.bf16.mxu0 0
      %1543 = vmatpush1.bf16.msra.mxu0 0
      %1544 = vmatprep.subr.bf16.mxu0 0
      %1545 = vmatpush1.bf16.msra.mxu0 0
      %1546 = vmatprep.subr.bf16.mxu0 0
      %1547 = vmatpush1.bf16.msra.mxu0 0
      %1548 = vmatprep.subr.bf16.mxu0 0
      %1549 = vmatpush1.bf16.msra.mxu0 0
      %1550 = vmatprep.subr.bf16.mxu0 0
      %1551 = vmatpush1.bf16.msra.mxu0 %v1490
      %1552 = vmatprep.subr.bf16.mxu0 0
      %1553 = vmatpush2.bf16.msra.mxu0 0
      %1554 = vmatprep.subr.bf16.mxu0 0
      %1555 = vmatpush2.bf16.msra.mxu0 0
      %1556 = vmatprep.subr.bf16.mxu0 0
      %1557 = vmatpush2.bf16.msra.mxu0 0
      %1558 = vmatprep.subr.bf16.mxu0 0
      %1559 = vmatpush2.bf16.msra.mxu0 0
      %1560 = vmatprep.subr.bf16.mxu0 0
      %1561 = vmatpush2.bf16.msra.mxu0 0
      %1562 = vmatprep.subr.bf16.mxu0 0
      %1563 = vmatpush2.bf16.msra.mxu0 0
      %1564 = vmatprep.subr.bf16.mxu0 0
      %1565 = vmatpush2.bf16.msra.mxu0 0
      %1566 = vmatprep.subr.bf16.mxu0 0
      %1567 = vmatpush2.bf16.msra.mxu0 0
      %1568 = vmatprep.mubr.bf16.mxu0 0
      %1569 = vmatmul.mubr.bf16.gmra.mxu0 %v1534
      %v1570 = vpop.f32.mrf.mxu0
      %v1571 = vadd.f32 0.0, %v1570
      %v1572 = vpop.f32.mrf.mxu0
      %v1573 = vpop.f32.mrf.mxu0
      %v1574 = vpop.f32.mrf.mxu0
      %1575 = vdwg.mxu0
      %v1576 = vmax.f32 %v1527, %v1571
      %v1577 = vpack.c.bf16 %v1576, %v1576
      %v1578 = vld [vmem:[%s1 + $0x3b0] sm:$0xf]
      %v1579 = vld [vmem:[%s1 + $0x3b8] sm:$0xf]
      %v1580 = vld [vmem:[%s1 + $0x3c0] sm:$0xf]
      %v1584 = vunpack.c.l.b16 %v1578
      %v1585 = vunpack.c.l.b16 %v1579
      %v1586 = vunpack.c.l.b16 %v1580
      %v1587 = vpack.c.b16 %v1585, %v1584
      %v1588 = vpack.c.b16 %v1586, %v1586
      %vm1590 = vcmask 195584
      %v1592 = vsel %vm1590, %v1577, 0
      %vm1594 = vcmask 1043456
      %v1596 = vsel %vm1594, %v1588, 0
      %1598 = vmatprep.subr.bf16.mxu0 0
      %1599 = vmatpush1.bf16.msra.mxu0 0
      %1600 = vmatprep.subr.bf16.mxu0 0
      %1601 = vmatpush1.bf16.msra.mxu0 0
      %1602 = vmatprep.subr.bf16.mxu0 0
      %1603 = vmatpush1.bf16.msra.mxu0 0
      %1604 = vmatprep.subr.bf16.mxu0 0
      %1605 = vmatpush1.bf16.msra.mxu0 0
      %1606 = vmatprep.subr.bf16.mxu0 0
      %1607 = vmatpush1.bf16.msra.mxu0 0
      %1608 = vmatprep.subr.bf16.mxu0 0
      %1609 = vmatpush1.bf16.msra.mxu0 0
      %1610 = vmatprep.subr.bf16.mxu0 0
      %1611 = vmatpush1.bf16.msra.mxu0 %v1596
      %1612 = vmatprep.subr.bf16.mxu0 0
      %1613 = vmatpush1.bf16.msra.mxu0 %v1587
      %1614 = vmatprep.subr.bf16.mxu0 0
      %1615 = vmatpush2.bf16.msra.mxu0 0
      %1616 = vmatprep.subr.bf16.mxu0 0
      %1617 = vmatpush2.bf16.msra.mxu0 0
      %1618 = vmatprep.subr.bf16.mxu0 0
      %1619 = vmatpush2.bf16.msra.mxu0 0
      %1620 = vmatprep.subr.bf16.mxu0 0
      %1621 = vmatpush2.bf16.msra.mxu0 0
      %1622 = vmatprep.subr.bf16.mxu0 0
      %1623 = vmatpush2.bf16.msra.mxu0 0
      %1624 = vmatprep.subr.bf16.mxu0 0
      %1625 = vmatpush2.bf16.msra.mxu0 0
      %1626 = vmatprep.subr.bf16.mxu0 0
      %1627 = vmatpush2.bf16.msra.mxu0 0
      %1628 = vmatprep.subr.bf16.mxu0 0
      %1629 = vmatpush2.bf16.msra.mxu0 0
      %1630 = vmatprep.mubr.bf16.mxu0 0
      %1631 = vmatmul.mubr.bf16.gmra.mxu0 %v1592
      %v1632 = vpop.f32.mrf.mxu0
      %v1633 = vadd.f32 0.0, %v1632
      %v1634 = vpop.f32.mrf.mxu0
      %v1635 = vpop.f32.mrf.mxu0
      %v1636 = vpop.f32.mrf.mxu0
      %1637 = vdwg.mxu0
      %v1638 = vld [vmem:[%s1 + $0x3c8] sm:$0xf]
      %v1639 = vld [vmem:[%s1 + $0x3d0] sm:$0xf]
      %v1640 = vld [vmem:[%s1 + $0x3d8] sm:$0xf]
      %v1644 = vunpack.c.l.b16 %v1638
      %v1645 = vunpack.c.l.b16 %v1639
      %v1646 = vunpack.c.l.b16 %v1640
      %v1647 = vpack.c.b16 %v1645, %v1644
      %v1648 = vpack.c.b16 %v1646, %v1646
      %v1651 = vsel %vm1594, %v1648, 0
      %1653 = vmatprep.subr.bf16.mxu0 0
      %1654 = vmatpush1.bf16.msra.mxu0 0
      %1655 = vmatprep.subr.bf16.mxu0 0
      %1656 = vmatpush1.bf16.msra.mxu0 0
      %1657 = vmatprep.subr.bf16.mxu0 0
      %1658 = vmatpush1.bf16.msra.mxu0 0
      %1659 = vmatprep.subr.bf16.mxu0 0
      %1660 = vmatpush1.bf16.msra.mxu0 0
      %1661 = vmatprep.subr.bf16.mxu0 0
      %1662 = vmatpush1.bf16.msra.mxu0 0
      %1663 = vmatprep.subr.bf16.mxu0 0
      %1664 = vmatpush1.bf16.msra.mxu0 0
      %1665 = vmatprep.subr.bf16.mxu0 0
      %1666 = vmatpush1.bf16.msra.mxu0 %v1651
      %1667 = vmatprep.subr.bf16.mxu0 0
      %1668 = vmatpush1.bf16.msra.mxu0 %v1647
      %1669 = vmatprep.subr.bf16.mxu0 0
      %1670 = vmatpush2.bf16.msra.mxu0 0
      %1671 = vmatprep.subr.bf16.mxu0 0
      %1672 = vmatpush2.bf16.msra.mxu0 0
      %1673 = vmatprep.subr.bf16.mxu0 0
      %1674 = vmatpush2.bf16.msra.mxu0 0
      %1675 = vmatprep.subr.bf16.mxu0 0
      %1676 = vmatpush2.bf16.msra.mxu0 0
      %1677 = vmatprep.subr.bf16.mxu0 0
      %1678 = vmatpush2.bf16.msra.mxu0 0
      %1679 = vmatprep.subr.bf16.mxu0 0
      %1680 = vmatpush2.bf16.msra.mxu0 0
      %1681 = vmatprep.subr.bf16.mxu0 0
      %1682 = vmatpush2.bf16.msra.mxu0 0
      %1683 = vmatprep.subr.bf16.mxu0 0
      %1684 = vmatpush2.bf16.msra.mxu0 0
      %1685 = vmatprep.mubr.bf16.mxu0 0
      %1686 = vmatmul.mubr.bf16.gmra.mxu0 %v1592
      %v1687 = vpop.f32.mrf.mxu0
      %v1688 = vadd.f32 0.0, %v1687
      %v1689 = vpop.f32.mrf.mxu0
      %v1690 = vpop.f32.mrf.mxu0
      %v1691 = vpop.f32.mrf.mxu0
      %1692 = vdwg.mxu0
      %v1693 = vmax.f32 %v1633, %v1688
      %v1694 = vpack.c.bf16 %v1693, %v1693
      %vm1695 = vcmask 123904
      %1696 = vst.msk [vmem:[%s176] sm:$0x3] %vm1695, %v1693
      %v1697 = vld [vmem:[%s1 + $0x3e0] sm:$0x7]
      %vm1698 = vcmask 15360
      %v1700 = vsel %vm1698, %v1697, 0
      %v1703 = vsel %vm1486, %v1694, 0
      %1705 = vmatprep.subr.bf16.mxu0 0
      %1706 = vmatpush1.bf16.msra.mxu0 0
      %1707 = vmatprep.subr.bf16.mxu0 0
      %1708 = vmatpush1.bf16.msra.mxu0 0
      %1709 = vmatprep.subr.bf16.mxu0 0
      %1710 = vmatpush1.bf16.msra.mxu0 0
      %1711 = vmatprep.subr.bf16.mxu0 0
      %1712 = vmatpush1.bf16.msra.mxu0 0
      %1713 = vmatprep.subr.bf16.mxu0 0
      %1714 = vmatpush1.bf16.msra.mxu0 0
      %1715 = vmatprep.subr.bf16.mxu0 0
      %1716 = vmatpush1.bf16.msra.mxu0 0
      %1717 = vmatprep.subr.bf16.mxu0 0
      %1718 = vmatpush1.bf16.msra.mxu0 0
      %1719 = vmatprep.subr.bf16.mxu0 0
      %1720 = vmatpush1.bf16.msra.mxu0 %v1703
      %1721 = vmatprep.subr.bf16.mxu0 0
      %1722 = vmatpush2.bf16.msra.mxu0 0
      %1723 = vmatprep.subr.bf16.mxu0 0
      %1724 = vmatpush2.bf16.msra.mxu0 0
      %1725 = vmatprep.subr.bf16.mxu0 0
      %1726 = vmatpush2.bf16.msra.mxu0 0
      %1727 = vmatprep.subr.bf16.mxu0 0
      %1728 = vmatpush2.bf16.msra.mxu0 0
      %1729 = vmatprep.subr.bf16.mxu0 0
      %1730 = vmatpush2.bf16.msra.mxu0 0
      %1731 = vmatprep.subr.bf16.mxu0 0
      %1732 = vmatpush2.bf16.msra.mxu0 0
      %1733 = vmatprep.subr.bf16.mxu0 0
      %1734 = vmatpush2.bf16.msra.mxu0 0
      %1735 = vmatprep.subr.bf16.mxu0 0
      %1736 = vmatpush2.bf16.msra.mxu0 0
      %1737 = vmatprep.mubr.bf16.mxu0 0
      %1738 = vmatmul.mubr.bf16.gmra.mxu0 %v1700
      %v1739 = vpop.f32.mrf.mxu0
      %v1740 = vadd.f32 0.0, %v1739
      %v1741 = vpop.f32.mrf.mxu0
      %v1742 = vpop.f32.mrf.mxu0
      %v1743 = vpop.f32.mrf.mxu0
      %1744 = vdwg.mxu0
      %v1745 = vpack.c.bf16 %v1740, %v1740
      %v1746 = vld [vmem:[%s1 + $0x3e8] sm:$0xf]
      %v1747 = vld [vmem:[%s1 + $0x3f0] sm:$0xf]
      %v1748 = vld [vmem:[%s1 + $0x3f8] sm:$0x7]
      %v1750 = vsel %vm1698, %v1748, 0
      %1752 = vmatprep.subr.bf16.mxu0 0
      %1753 = vmatpush1.bf16.msra.mxu0 0
      %1754 = vmatprep.subr.bf16.mxu0 0
      %1755 = vmatpush1.bf16.msra.mxu0 0
      %1756 = vmatprep.subr.bf16.mxu0 0
      %1757 = vmatpush1.bf16.msra.mxu0 0
      %1758 = vmatprep.subr.bf16.mxu0 0
      %1759 = vmatpush1.bf16.msra.mxu0 0
      %1760 = vmatprep.subr.bf16.mxu0 0
      %1761 = vmatpush1.bf16.msra.mxu0 0
      %1762 = vmatprep.subr.bf16.mxu0 0
      %1763 = vmatpush1.bf16.msra.mxu0 0
      %1764 = vmatprep.subr.bf16.mxu0 0
      %1765 = vmatpush1.bf16.msra.mxu0 0
      %1766 = vmatprep.subr.bf16.mxu0 0
      %1767 = vmatpush1.bf16.msra.mxu0 %v1703
      %1768 = vmatprep.subr.bf16.mxu0 0
      %1769 = vmatpush2.bf16.msra.mxu0 0
      %1770 = vmatprep.subr.bf16.mxu0 0
      %1771 = vmatpush2.bf16.msra.mxu0 0
      %1772 = vmatprep.subr.bf16.mxu0 0
      %1773 = vmatpush2.bf16.msra.mxu0 0
      %1774 = vmatprep.subr.bf16.mxu0 0
      %1775 = vmatpush2.bf16.msra.mxu0 0
      %1776 = vmatprep.subr.bf16.mxu0 0
      %1777 = vmatpush2.bf16.msra.mxu0 0
      %1778 = vmatprep.subr.bf16.mxu0 0
      %1779 = vmatpush2.bf16.msra.mxu0 0
      %1780 = vmatprep.subr.bf16.mxu0 0
      %1781 = vmatpush2.bf16.msra.mxu0 0
      %1782 = vmatprep.subr.bf16.mxu0 0
      %1783 = vmatpush2.bf16.msra.mxu0 0
      %1784 = vmatprep.mubr.bf16.mxu0 0
      %1785 = vmatmul.mubr.bf16.gmra.mxu0 %v1750
      %v1786 = vpop.f32.mrf.mxu0
      %v1787 = vadd.f32 0.0, %v1786
      %v1788 = vpop.f32.mrf.mxu0
      %v1789 = vpop.f32.mrf.mxu0
      %v1790 = vpop.f32.mrf.mxu0
      %1791 = vdwg.mxu0
      %v1792 = vpack.c.bf16 %v1787, %v1787
      %v1793 = vld [vmem:[%s1 + $0x400] sm:$0xf]
      %v1794 = vld [vmem:[%s1 + $0x408] sm:$0xf]
      %v1797 = vunpack.c.l.b16 %v1793
      %v1798 = vunpack.c.l.b16 %v1794
      %v1799 = vpack.c.b16 %v1798, %v1797
      %vm1801 = vcmask 130048
      %v1803 = vsel %vm1801, %v1792, 0
      %1805 = vmatprep.subr.bf16.mxu0 0
      %1806 = vmatpush1.bf16.msra.mxu0 0
      %1807 = vmatprep.subr.bf16.mxu0 0
      %1808 = vmatpush1.bf16.msra.mxu0 0
      %1809 = vmatprep.subr.bf16.mxu0 0
      %1810 = vmatpush1.bf16.msra.mxu0 0
      %1811 = vmatprep.subr.bf16.mxu0 0
      %1812 = vmatpush1.bf16.msra.mxu0 0
      %1813 = vmatprep.subr.bf16.mxu0 0
      %1814 = vmatpush1.bf16.msra.mxu0 0
      %1815 = vmatprep.subr.bf16.mxu0 0
      %1816 = vmatpush1.bf16.msra.mxu0 0
      %1817 = vmatprep.subr.bf16.mxu0 0
      %1818 = vmatpush1.bf16.msra.mxu0 0
      %1819 = vmatprep.subr.bf16.mxu0 0
      %1820 = vmatpush1.bf16.msra.mxu0 %v1799
      %1821 = vmatprep.subr.bf16.mxu0 0
      %1822 = vmatpush2.bf16.msra.mxu0 0
      %1823 = vmatprep.subr.bf16.mxu0 0
      %1824 = vmatpush2.bf16.msra.mxu0 0
      %1825 = vmatprep.subr.bf16.mxu0 0
      %1826 = vmatpush2.bf16.msra.mxu0 0
      %1827 = vmatprep.subr.bf16.mxu0 0
      %1828 = vmatpush2.bf16.msra.mxu0 0
      %1829 = vmatprep.subr.bf16.mxu0 0
      %1830 = vmatpush2.bf16.msra.mxu0 0
      %1831 = vmatprep.subr.bf16.mxu0 0
      %1832 = vmatpush2.bf16.msra.mxu0 0
      %1833 = vmatprep.subr.bf16.mxu0 0
      %1834 = vmatpush2.bf16.msra.mxu0 0
      %1835 = vmatprep.subr.bf16.mxu0 0
      %1836 = vmatpush2.bf16.msra.mxu0 0
      %1837 = vmatprep.mubr.bf16.mxu0 0
      %1838 = vmatmul.mubr.bf16.gmra.mxu0 %v1803
      %v1839 = vpop.f32.mrf.mxu0
      %v1840 = vadd.f32 0.0, %v1839
      %v1841 = vpop.f32.mrf.mxu0
      %v1842 = vpop.f32.mrf.mxu0
      %v1843 = vpop.f32.mrf.mxu0
      %1844 = vdwg.mxu0
      %v1847 = vunpack.c.l.b16 %v1746
      %v1848 = vunpack.c.l.b16 %v1747
      %v1849 = vpack.c.b16 %v1848, %v1847
      %v1852 = vsel %vm1801, %v1745, 0
      %1854 = vmatprep.subr.bf16.mxu0 0
      %1855 = vmatpush1.bf16.msra.mxu0 0
      %1856 = vmatprep.subr.bf16.mxu0 0
      %1857 = vmatpush1.bf16.msra.mxu0 0
      %1858 = vmatprep.subr.bf16.mxu0 0
      %1859 = vmatpush1.bf16.msra.mxu0 0
      %1860 = vmatprep.subr.bf16.mxu0 0
      %1861 = vmatpush1.bf16.msra.mxu0 0
      %1862 = vmatprep.subr.bf16.mxu0 0
      %1863 = vmatpush1.bf16.msra.mxu0 0
      %1864 = vmatprep.subr.bf16.mxu0 0
      %1865 = vmatpush1.bf16.msra.mxu0 0
      %1866 = vmatprep.subr.bf16.mxu0 0
      %1867 = vmatpush1.bf16.msra.mxu0 0
      %1868 = vmatprep.subr.bf16.mxu0 0
      %1869 = vmatpush1.bf16.msra.mxu0 %v1849
      %1870 = vmatprep.subr.bf16.mxu0 0
      %1871 = vmatpush2.bf16.msra.mxu0 0
      %1872 = vmatprep.subr.bf16.mxu0 0
      %1873 = vmatpush2.bf16.msra.mxu0 0
      %1874 = vmatprep.subr.bf16.mxu0 0
      %1875 = vmatpush2.bf16.msra.mxu0 0
      %1876 = vmatprep.subr.bf16.mxu0 0
      %1877 = vmatpush2.bf16.msra.mxu0 0
      %1878 = vmatprep.subr.bf16.mxu0 0
      %1879 = vmatpush2.bf16.msra.mxu0 0
      %1880 = vmatprep.subr.bf16.mxu0 0
      %1881 = vmatpush2.bf16.msra.mxu0 0
      %1882 = vmatprep.subr.bf16.mxu0 0
      %1883 = vmatpush2.bf16.msra.mxu0 0
      %1884 = vmatprep.subr.bf16.mxu0 0
      %1885 = vmatpush2.bf16.msra.mxu0 0
      %1886 = vmatprep.mubr.bf16.mxu0 0
      %1887 = vmatmul.mubr.bf16.gmra.mxu0 %v1852
      %v1888 = vpop.f32.mrf.mxu0
      %v1889 = vadd.f32 %v1840, %v1888
      %v1890 = vpop.f32.mrf.mxu0
      %v1891 = vpop.f32.mrf.mxu0
      %v1892 = vpop.f32.mrf.mxu0
      %1893 = vdwg.mxu0
      %v1894 = vld [vmem:[%s1 + $0x410] sm:$0x7]
      %v1896 = vsel %vm1698, %v1894, 0
      %1898 = vmatprep.subr.bf16.mxu0 0
      %1899 = vmatpush1.bf16.msra.mxu0 0
      %1900 = vmatprep.subr.bf16.mxu0 0
      %1901 = vmatpush1.bf16.msra.mxu0 0
      %1902 = vmatprep.subr.bf16.mxu0 0
      %1903 = vmatpush1.bf16.msra.mxu0 0
      %1904 = vmatprep.subr.bf16.mxu0 0
      %1905 = vmatpush1.bf16.msra.mxu0 0
      %1906 = vmatprep.subr.bf16.mxu0 0
      %1907 = vmatpush1.bf16.msra.mxu0 0
      %1908 = vmatprep.subr.bf16.mxu0 0
      %1909 = vmatpush1.bf16.msra.mxu0 0
      %1910 = vmatprep.subr.bf16.mxu0 0
      %1911 = vmatpush1.bf16.msra.mxu0 0
      %1912 = vmatprep.subr.bf16.mxu0 0
      %1913 = vmatpush1.bf16.msra.mxu0 %v1703
      %1914 = vmatprep.subr.bf16.mxu0 0
      %1915 = vmatpush2.bf16.msra.mxu0 0
      %1916 = vmatprep.subr.bf16.mxu0 0
      %1917 = vmatpush2.bf16.msra.mxu0 0
      %1918 = vmatprep.subr.bf16.mxu0 0
      %1919 = vmatpush2.bf16.msra.mxu0 0
      %1920 = vmatprep.subr.bf16.mxu0 0
      %1921 = vmatpush2.bf16.msra.mxu0 0
      %1922 = vmatprep.subr.bf16.mxu0 0
      %1923 = vmatpush2.bf16.msra.mxu0 0
      %1924 = vmatprep.subr.bf16.mxu0 0
      %1925 = vmatpush2.bf16.msra.mxu0 0
      %1926 = vmatprep.subr.bf16.mxu0 0
      %1927 = vmatpush2.bf16.msra.mxu0 0
      %1928 = vmatprep.subr.bf16.mxu0 0
      %1929 = vmatpush2.bf16.msra.mxu0 0
      %1930 = vmatprep.mubr.bf16.mxu0 0
      %1931 = vmatmul.mubr.bf16.gmra.mxu0 %v1896
      %v1932 = vpop.f32.mrf.mxu0
      %v1933 = vadd.f32 0.0, %v1932
      %v1934 = vpop.f32.mrf.mxu0
      %v1935 = vpop.f32.mrf.mxu0
      %v1936 = vpop.f32.mrf.mxu0
      %1937 = vdwg.mxu0
      %v1938 = vpack.c.bf16 %v1933, %v1933
      %v1939 = vld [vmem:[%s1 + $0x418] sm:$0xf]
      %v1940 = vld [vmem:[%s1 + $0x420] sm:$0xf]
      %v1943 = vunpack.c.l.b16 %v1939
      %v1944 = vunpack.c.l.b16 %v1940
      %v1945 = vpack.c.b16 %v1944, %v1943
      %v1948 = vsel %vm1801, %v1938, 0
      %1950 = vmatprep.subr.bf16.mxu0 0
      %1951 = vmatpush1.bf16.msra.mxu0 0
      %1952 = vmatprep.subr.bf16.mxu0 0
      %1953 = vmatpush1.bf16.msra.mxu0 0
      %1954 = vmatprep.subr.bf16.mxu0 0
      %1955 = vmatpush1.bf16.msra.mxu0 0
      %1956 = vmatprep.subr.bf16.mxu0 0
      %1957 = vmatpush1.bf16.msra.mxu0 0
      %1958 = vmatprep.subr.bf16.mxu0 0
      %1959 = vmatpush1.bf16.msra.mxu0 0
      %1960 = vmatprep.subr.bf16.mxu0 0
      %1961 = vmatpush1.bf16.msra.mxu0 0
      %1962 = vmatprep.subr.bf16.mxu0 0
      %1963 = vmatpush1.bf16.msra.mxu0 0
      %1964 = vmatprep.subr.bf16.mxu0 0
      %1965 = vmatpush1.bf16.msra.mxu0 %v1945
      %1966 = vmatprep.subr.bf16.mxu0 0
      %1967 = vmatpush2.bf16.msra.mxu0 0
      %1968 = vmatprep.subr.bf16.mxu0 0
      %1969 = vmatpush2.bf16.msra.mxu0 0
      %1970 = vmatprep.subr.bf16.mxu0 0
      %1971 = vmatpush2.bf16.msra.mxu0 0
      %1972 = vmatprep.subr.bf16.mxu0 0
      %1973 = vmatpush2.bf16.msra.mxu0 0
      %1974 = vmatprep.subr.bf16.mxu0 0
      %1975 = vmatpush2.bf16.msra.mxu0 0
      %1976 = vmatprep.subr.bf16.mxu0 0
      %1977 = vmatpush2.bf16.msra.mxu0 0
      %1978 = vmatprep.subr.bf16.mxu0 0
      %1979 = vmatpush2.bf16.msra.mxu0 0
      %1980 = vmatprep.subr.bf16.mxu0 0
      %1981 = vmatpush2.bf16.msra.mxu0 0
      %1982 = vmatprep.mubr.bf16.mxu0 0
      %1983 = vmatmul.mubr.bf16.gmra.mxu0 %v1948
      %v1984 = vpop.f32.mrf.mxu0
      %v1985 = vadd.f32 0.0, %v1984
      %v1986 = vpop.f32.mrf.mxu0
      %v1987 = vpop.f32.mrf.mxu0
      %v1988 = vpop.f32.mrf.mxu0
      %1989 = vdwg.mxu0
      %v1990 = vadd.f32 %v1889, %v1985
      %v1991 = vld [vmem:[%s1 + $0x428] sm:$0x1]
      %v1992 = vunpack.c.l.bf16 %v1991
      %v1993 = vlaneseq
      %v1994 = vshrl.u32 %v1993, 7
      %v1995 = vsub.s32 0, %v1994
      %v1996 = vrot.slane %v1992, %v1995
      %v1997 = vadd.f32 %v1990, %v1996
      %v1998 = vmax.f32 %v1997, 0.0
      %v1999 = vpack.c.bf16 %v1998, %v1998
      %v2000 = vld [vmem:[%s1 + $0x430] sm:$0xf]
      %v2001 = vld [vmem:[%s1 + $0x438] sm:$0xf]
      %v2004 = vunpack.c.l.b16 %v2000
      %v2005 = vunpack.c.l.b16 %v2001
      %v2006 = vpack.c.b16 %v2005, %v2004
      %v2008 = vsel %vm1080, %v2006, 0
      %v2011 = vand.u32 %v1999, %v1086
      %2013 = vmatprep.subr.bf16.mxu0 0
      %2014 = vmatpush1.bf16.msra.mxu0 0
      %2015 = vmatprep.subr.bf16.mxu0 0
      %2016 = vmatpush1.bf16.msra.mxu0 0
      %2017 = vmatprep.subr.bf16.mxu0 0
      %2018 = vmatpush1.bf16.msra.mxu0 0
      %2019 = vmatprep.subr.bf16.mxu0 0
      %2020 = vmatpush1.bf16.msra.mxu0 0
      %2021 = vmatprep.subr.bf16.mxu0 0
      %2022 = vmatpush1.bf16.msra.mxu0 0
      %2023 = vmatprep.subr.bf16.mxu0 0
      %2024 = vmatpush1.bf16.msra.mxu0 0
      %2025 = vmatprep.subr.bf16.mxu0 0
      %2026 = vmatpush1.bf16.msra.mxu0 0
      %2027 = vmatprep.subr.bf16.mxu0 0
      %2028 = vmatpush1.bf16.msra.mxu0 %v2011
      %2029 = vmatprep.subr.bf16.mxu0 0
      %2030 = vmatpush2.bf16.msra.mxu0 0
      %2031 = vmatprep.subr.bf16.mxu0 0
      %2032 = vmatpush2.bf16.msra.mxu0 0
      %2033 = vmatprep.subr.bf16.mxu0 0
      %2034 = vmatpush2.bf16.msra.mxu0 0
      %2035 = vmatprep.subr.bf16.mxu0 0
      %2036 = vmatpush2.bf16.msra.mxu0 0
      %2037 = vmatprep.subr.bf16.mxu0 0
      %2038 = vmatpush2.bf16.msra.mxu0 0
      %2039 = vmatprep.subr.bf16.mxu0 0
      %2040 = vmatpush2.bf16.msra.mxu0 0
      %2041 = vmatprep.subr.bf16.mxu0 0
      %2042 = vmatpush2.bf16.msra.mxu0 0
      %2043 = vmatprep.subr.bf16.mxu0 0
      %2044 = vmatpush2.bf16.msra.mxu0 0
      %2045 = vmatprep.mubr.bf16.mxu0 0
      %2046 = vmatmul.mubr.bf16.gmra.mxu0 %v2008
      %v2047 = vpop.f32.mrf.mxu0
      %v2048 = vadd.f32 0.0, %v2047
      %v2049 = vpop.f32.mrf.mxu0
      %v2050 = vpop.f32.mrf.mxu0
      %v2051 = vadd.f32 0.0, %v2050
      %v2052 = vpop.f32.mrf.mxu0
      %2053 = vdwg.mxu0
      %v2054 = vpack.c.bf16 %v2051, %v2048
      %v2055 = vld [vmem:[%s1 + $0x440] sm:$0xf]
      %v2056 = vld [vmem:[%s1 + $0x448] sm:$0xf]
      %v2057 = vld [vmem:[%s1 + $0x450] sm:$0xf]
      %v2058 = vld [vmem:[%s1 + $0x458] sm:$0xf]
      %v2059 = vld [vmem:[%s1 + $0x460] sm:$0xf]
      %v2060 = vld [vmem:[%s1 + $0x468] sm:$0xf]
      %v2061 = vld [vmem:[%s1 + $0x470] sm:$0xf]
      %v2062 = vld [vmem:[%s1 + $0x478] sm:$0xf]
      %v2063 = vld [vmem:[%s1 + $0x480] sm:$0xf]
      %v2064 = vld [vmem:[%s1 + $0x488] sm:$0xf]
      %v2065 = vld [vmem:[%s1 + $0x490] sm:$0xf]
      %v2066 = vld [vmem:[%s1 + $0x498] sm:$0xf]
      %v2069 = vunpack.c.l.b16 %v2065
      %v2070 = vunpack.c.l.b16 %v2066
      %v2071 = vpack.c.b16 %v2070, %v2069
      %v2073 = vsel %vm1080, %v2071, 0
      %2075 = vmatprep.subr.bf16.mxu0 0
      %2076 = vmatpush1.bf16.msra.mxu0 0
      %2077 = vmatprep.subr.bf16.mxu0 0
      %2078 = vmatpush1.bf16.msra.mxu0 0
      %2079 = vmatprep.subr.bf16.mxu0 0
      %2080 = vmatpush1.bf16.msra.mxu0 0
      %2081 = vmatprep.subr.bf16.mxu0 0
      %2082 = vmatpush1.bf16.msra.mxu0 0
      %2083 = vmatprep.subr.bf16.mxu0 0
      %2084 = vmatpush1.bf16.msra.mxu0 0
      %2085 = vmatprep.subr.bf16.mxu0 0
      %2086 = vmatpush1.bf16.msra.mxu0 0
      %2087 = vmatprep.subr.bf16.mxu0 0
      %2088 = vmatpush1.bf16.msra.mxu0 0
      %2089 = vmatprep.subr.bf16.mxu0 0
      %2090 = vmatpush1.bf16.msra.mxu0 %v2011
      %2091 = vmatprep.subr.bf16.mxu0 0
      %2092 = vmatpush2.bf16.msra.mxu0 0
      %2093 = vmatprep.subr.bf16.mxu0 0
      %2094 = vmatpush2.bf16.msra.mxu0 0
      %2095 = vmatprep.subr.bf16.mxu0 0
      %2096 = vmatpush2.bf16.msra.mxu0 0
      %2097 = vmatprep.subr.bf16.mxu0 0
      %2098 = vmatpush2.bf16.msra.mxu0 0
      %2099 = vmatprep.subr.bf16.mxu0 0
      %2100 = vmatpush2.bf16.msra.mxu0 0
      %2101 = vmatprep.subr.bf16.mxu0 0
      %2102 = vmatpush2.bf16.msra.mxu0 0
      %2103 = vmatprep.subr.bf16.mxu0 0
      %2104 = vmatpush2.bf16.msra.mxu0 0
      %2105 = vmatprep.subr.bf16.mxu0 0
      %2106 = vmatpush2.bf16.msra.mxu0 0
      %2107 = vmatprep.mubr.bf16.mxu0 0
      %2108 = vmatmul.mubr.bf16.gmra.mxu0 %v2073
      %v2109 = vpop.f32.mrf.mxu0
      %v2110 = vadd.f32 0.0, %v2109
      %v2111 = vpop.f32.mrf.mxu0
      %v2112 = vpop.f32.mrf.mxu0
      %v2113 = vadd.f32 0.0, %v2112
      %v2114 = vpop.f32.mrf.mxu0
      %2115 = vdwg.mxu0
      %v2116 = vpack.c.bf16 %v2113, %v2110
      %v2117 = vld [vmem:[%s1 + $0x4a0] sm:$0xf]
      %v2118 = vld [vmem:[%s1 + $0x4a8] sm:$0xf]
      %v2119 = vld [vmem:[%s1 + $0x4b0] sm:$0xf]
      %v2120 = vld [vmem:[%s1 + $0x4b8] sm:$0xf]
      %v2121 = vld [vmem:[%s1 + $0x4c0] sm:$0xf]
      %v2122 = vld [vmem:[%s1 + $0x4c8] sm:$0xf]
      %v2123 = vld [vmem:[%s1 + $0x4d0] sm:$0xf]
      %v2124 = vld [vmem:[%s1 + $0x4d8] sm:$0xf]
      %v2125 = vld [vmem:[%s1 + $0x4e0] sm:$0xf]
      %v2126 = vld [vmem:[%s1 + $0x4e8] sm:$0xf]
      %v2137 = vunpack.c.l.b16 %v2117
      %v2138 = vunpack.c.l.b16 %v2118
      %v2139 = vunpack.c.l.b16 %v2119
      %v2140 = vunpack.c.l.b16 %v2120
      %v2141 = vunpack.c.l.b16 %v2121
      %v2142 = vunpack.c.l.b16 %v2122
      %v2143 = vunpack.c.l.b16 %v2123
      %v2144 = vunpack.c.l.b16 %v2124
      %v2145 = vunpack.c.l.b16 %v2125
      %v2146 = vunpack.c.l.b16 %v2126
      %v2147 = vpack.c.b16 %v2138, %v2137
      %v2148 = vpack.c.b16 %v2140, %v2139
      %v2149 = vpack.c.b16 %v2142, %v2141
      %v2150 = vpack.c.b16 %v2144, %v2143
      %v2151 = vpack.c.b16 %v2146, %v2145
      %v2158 = vsel %vm1226, %v2116, 0
      %2160 = vmatprep.subr.bf16.mxu0 0
      %2161 = vmatpush1.bf16.msra.mxu0 0
      %2162 = vmatprep.subr.bf16.mxu0 0
      %2163 = vmatpush1.bf16.msra.mxu0 0
      %2164 = vmatprep.subr.bf16.mxu0 0
      %2165 = vmatpush1.bf16.msra.mxu0 0
      %2166 = vmatprep.subr.bf16.mxu0 0
      %2167 = vmatpush1.bf16.msra.mxu0 %v2151
      %2168 = vmatprep.subr.bf16.mxu0 0
      %2169 = vmatpush1.bf16.msra.mxu0 %v2150
      %2170 = vmatprep.subr.bf16.mxu0 0
      %2171 = vmatpush1.bf16.msra.mxu0 %v2149
      %2172 = vmatprep.subr.bf16.mxu0 0
      %2173 = vmatpush1.bf16.msra.mxu0 %v2148
      %2174 = vmatprep.subr.bf16.mxu0 0
      %2175 = vmatpush1.bf16.msra.mxu0 %v2147
      %2176 = vmatprep.subr.bf16.mxu0 0
      %2177 = vmatpush2.bf16.msra.mxu0 0
      %2178 = vmatprep.subr.bf16.mxu0 0
      %2179 = vmatpush2.bf16.msra.mxu0 0
      %2180 = vmatprep.subr.bf16.mxu0 0
      %2181 = vmatpush2.bf16.msra.mxu0 0
      %2182 = vmatprep.subr.bf16.mxu0 0
      %2183 = vmatpush2.bf16.msra.mxu0 0
      %2184 = vmatprep.subr.bf16.mxu0 0
      %2185 = vmatpush2.bf16.msra.mxu0 0
      %2186 = vmatprep.subr.bf16.mxu0 0
      %2187 = vmatpush2.bf16.msra.mxu0 0
      %2188 = vmatprep.subr.bf16.mxu0 0
      %2189 = vmatpush2.bf16.msra.mxu0 0
      %2190 = vmatprep.subr.bf16.mxu0 0
      %2191 = vmatpush2.bf16.msra.mxu0 0
      %2192 = vmatprep.mubr.bf16.mxu0 0
      %2193 = vmatmul.mubr.bf16.gmra.mxu0 %v2158
      %v2194 = vpop.f32.mrf.mxu0
      %v2195 = vadd.f32 0.0, %v2194
      %v2196 = vpop.f32.mrf.mxu0
      %v2197 = vpop.f32.mrf.mxu0
      %v2198 = vadd.f32 0.0, %v2197
      %v2199 = vpop.f32.mrf.mxu0
      %2200 = vdwg.mxu0
      %v2211 = vunpack.c.l.b16 %v2055
      %v2212 = vunpack.c.l.b16 %v2056
      %v2213 = vunpack.c.l.b16 %v2057
      %v2214 = vunpack.c.l.b16 %v2058
      %v2215 = vunpack.c.l.b16 %v2059
      %v2216 = vunpack.c.l.b16 %v2060
      %v2217 = vunpack.c.l.b16 %v2061
      %v2218 = vunpack.c.l.b16 %v2062
      %v2219 = vunpack.c.l.b16 %v2063
      %v2220 = vunpack.c.l.b16 %v2064
      %v2221 = vpack.c.b16 %v2212, %v2211
      %v2222 = vpack.c.b16 %v2214, %v2213
      %v2223 = vpack.c.b16 %v2216, %v2215
      %v2224 = vpack.c.b16 %v2218, %v2217
      %v2225 = vpack.c.b16 %v2220, %v2219
      %v2232 = vsel %vm1226, %v2054, 0
      %2234 = vmatprep.subr.bf16.mxu0 0
      %2235 = vmatpush1.bf16.msra.mxu0 0
      %2236 = vmatprep.subr.bf16.mxu0 0
      %2237 = vmatpush1.bf16.msra.mxu0 0
      %2238 = vmatprep.subr.bf16.mxu0 0
      %2239 = vmatpush1.bf16.msra.mxu0 0
      %2240 = vmatprep.subr.bf16.mxu0 0
      %2241 = vmatpush1.bf16.msra.mxu0 %v2225
      %2242 = vmatprep.subr.bf16.mxu0 0
      %2243 = vmatpush1.bf16.msra.mxu0 %v2224
      %2244 = vmatprep.subr.bf16.mxu0 0
      %2245 = vmatpush1.bf16.msra.mxu0 %v2223
      %2246 = vmatprep.subr.bf16.mxu0 0
      %2247 = vmatpush1.bf16.msra.mxu0 %v2222
      %2248 = vmatprep.subr.bf16.mxu0 0
      %2249 = vmatpush1.bf16.msra.mxu0 %v2221
      %2250 = vmatprep.subr.bf16.mxu0 0
      %2251 = vmatpush2.bf16.msra.mxu0 0
      %2252 = vmatprep.subr.bf16.mxu0 0
      %2253 = vmatpush2.bf16.msra.mxu0 0
      %2254 = vmatprep.subr.bf16.mxu0 0
      %2255 = vmatpush2.bf16.msra.mxu0 0
      %2256 = vmatprep.subr.bf16.mxu0 0
      %2257 = vmatpush2.bf16.msra.mxu0 0
      %2258 = vmatprep.subr.bf16.mxu0 0
      %2259 = vmatpush2.bf16.msra.mxu0 0
      %2260 = vmatprep.subr.bf16.mxu0 0
      %2261 = vmatpush2.bf16.msra.mxu0 0
      %2262 = vmatprep.subr.bf16.mxu0 0
      %2263 = vmatpush2.bf16.msra.mxu0 0
      %2264 = vmatprep.subr.bf16.mxu0 0
      %2265 = vmatpush2.bf16.msra.mxu0 0
      %2266 = vmatprep.mubr.bf16.mxu0 0
      %2267 = vmatmul.mubr.bf16.gmra.mxu0 %v2232
      %v2268 = vpop.f32.mrf.mxu0
      %v2269 = vadd.f32 %v2195, %v2268
      %v2270 = vpop.f32.mrf.mxu0
      %v2271 = vpop.f32.mrf.mxu0
      %v2272 = vadd.f32 %v2198, %v2271
      %v2273 = vpop.f32.mrf.mxu0
      %2274 = vdwg.mxu0
      %v2275 = vld [vmem:[%s1 + $0x4f0] sm:$0xf]
      %v2276 = vld [vmem:[%s1 + $0x4f8] sm:$0xf]
      %v2279 = vunpack.c.l.b16 %v2275
      %v2280 = vunpack.c.l.b16 %v2276
      %v2281 = vpack.c.b16 %v2280, %v2279
      %v2283 = vsel %vm1080, %v2281, 0
      %2285 = vmatprep.subr.bf16.mxu0 0
      %2286 = vmatpush1.bf16.msra.mxu0 0
      %2287 = vmatprep.subr.bf16.mxu0 0
      %2288 = vmatpush1.bf16.msra.mxu0 0
      %2289 = vmatprep.subr.bf16.mxu0 0
      %2290 = vmatpush1.bf16.msra.mxu0 0
      %2291 = vmatprep.subr.bf16.mxu0 0
      %2292 = vmatpush1.bf16.msra.mxu0 0
      %2293 = vmatprep.subr.bf16.mxu0 0
      %2294 = vmatpush1.bf16.msra.mxu0 0
      %2295 = vmatprep.subr.bf16.mxu0 0
      %2296 = vmatpush1.bf16.msra.mxu0 0
      %2297 = vmatprep.subr.bf16.mxu0 0
      %2298 = vmatpush1.bf16.msra.mxu0 0
      %2299 = vmatprep.subr.bf16.mxu0 0
      %2300 = vmatpush1.bf16.msra.mxu0 %v2011
      %2301 = vmatprep.subr.bf16.mxu0 0
      %2302 = vmatpush2.bf16.msra.mxu0 0
      %2303 = vmatprep.subr.bf16.mxu0 0
      %2304 = vmatpush2.bf16.msra.mxu0 0
      %2305 = vmatprep.subr.bf16.mxu0 0
      %2306 = vmatpush2.bf16.msra.mxu0 0
      %2307 = vmatprep.subr.bf16.mxu0 0
      %2308 = vmatpush2.bf16.msra.mxu0 0
      %2309 = vmatprep.subr.bf16.mxu0 0
      %2310 = vmatpush2.bf16.msra.mxu0 0
      %2311 = vmatprep.subr.bf16.mxu0 0
      %2312 = vmatpush2.bf16.msra.mxu0 0
      %2313 = vmatprep.subr.bf16.mxu0 0
      %2314 = vmatpush2.bf16.msra.mxu0 0
      %2315 = vmatprep.subr.bf16.mxu0 0
      %2316 = vmatpush2.bf16.msra.mxu0 0
      %2317 = vmatprep.mubr.bf16.mxu0 0
      %2318 = vmatmul.mubr.bf16.gmra.mxu0 %v2283
      %v2319 = vpop.f32.mrf.mxu0
      %v2320 = vadd.f32 0.0, %v2319
      %v2321 = vpop.f32.mrf.mxu0
      %v2322 = vpop.f32.mrf.mxu0
      %v2323 = vadd.f32 0.0, %v2322
      %v2324 = vpop.f32.mrf.mxu0
      %2325 = vdwg.mxu0
      %v2326 = vpack.c.bf16 %v2323, %v2320
      %v2327 = vld [vmem:[%s1 + $0x500] sm:$0xf]
      %v2328 = vld [vmem:[%s1 + $0x508] sm:$0xf]
      %v2329 = vld [vmem:[%s1 + $0x510] sm:$0xf]
      %v2330 = vld [vmem:[%s1 + $0x518] sm:$0xf]
      %v2331 = vld [vmem:[%s1 + $0x520] sm:$0xf]
      %v2332 = vld [vmem:[%s1 + $0x528] sm:$0xf]
      %v2333 = vld [vmem:[%s1 + $0x530] sm:$0xf]
      %v2334 = vld [vmem:[%s1 + $0x538] sm:$0xf]
      %v2335 = vld [vmem:[%s1 + $0x540] sm:$0xf]
      %v2336 = vld [vmem:[%s1 + $0x548] sm:$0xf]
      %v2347 = vunpack.c.l.b16 %v2327
      %v2348 = vunpack.c.l.b16 %v2328
      %v2349 = vunpack.c.l.b16 %v2329
      %v2350 = vunpack.c.l.b16 %v2330
      %v2351 = vunpack.c.l.b16 %v2331
      %v2352 = vunpack.c.l.b16 %v2332
      %v2353 = vunpack.c.l.b16 %v2333
      %v2354 = vunpack.c.l.b16 %v2334
      %v2355 = vunpack.c.l.b16 %v2335
      %v2356 = vunpack.c.l.b16 %v2336
      %v2357 = vpack.c.b16 %v2348, %v2347
      %v2358 = vpack.c.b16 %v2350, %v2349
      %v2359 = vpack.c.b16 %v2352, %v2351
      %v2360 = vpack.c.b16 %v2354, %v2353
      %v2361 = vpack.c.b16 %v2356, %v2355
      %v2368 = vsel %vm1226, %v2326, 0
      %2370 = vmatprep.subr.bf16.mxu0 0
      %2371 = vmatpush1.bf16.msra.mxu0 0
      %2372 = vmatprep.subr.bf16.mxu0 0
      %2373 = vmatpush1.bf16.msra.mxu0 0
      %2374 = vmatprep.subr.bf16.mxu0 0
      %2375 = vmatpush1.bf16.msra.mxu0 0
      %2376 = vmatprep.subr.bf16.mxu0 0
      %2377 = vmatpush1.bf16.msra.mxu0 %v2361
      %2378 = vmatprep.subr.bf16.mxu0 0
      %2379 = vmatpush1.bf16.msra.mxu0 %v2360
      %2380 = vmatprep.subr.bf16.mxu0 0
      %2381 = vmatpush1.bf16.msra.mxu0 %v2359
      %2382 = vmatprep.subr.bf16.mxu0 0
      %2383 = vmatpush1.bf16.msra.mxu0 %v2358
      %2384 = vmatprep.subr.bf16.mxu0 0
      %2385 = vmatpush1.bf16.msra.mxu0 %v2357
      %2386 = vmatprep.subr.bf16.mxu0 0
      %2387 = vmatpush2.bf16.msra.mxu0 0
      %2388 = vmatprep.subr.bf16.mxu0 0
      %2389 = vmatpush2.bf16.msra.mxu0 0
      %2390 = vmatprep.subr.bf16.mxu0 0
      %2391 = vmatpush2.bf16.msra.mxu0 0
      %2392 = vmatprep.subr.bf16.mxu0 0
      %2393 = vmatpush2.bf16.msra.mxu0 0
      %2394 = vmatprep.subr.bf16.mxu0 0
      %2395 = vmatpush2.bf16.msra.mxu0 0
      %2396 = vmatprep.subr.bf16.mxu0 0
      %2397 = vmatpush2.bf16.msra.mxu0 0
      %2398 = vmatprep.subr.bf16.mxu0 0
      %2399 = vmatpush2.bf16.msra.mxu0 0
      %2400 = vmatprep.subr.bf16.mxu0 0
      %2401 = vmatpush2.bf16.msra.mxu0 0
      %2402 = vmatprep.mubr.bf16.mxu0 0
      %2403 = vmatmul.mubr.bf16.gmra.mxu0 %v2368
      %v2404 = vpop.f32.mrf.mxu0
      %v2405 = vadd.f32 0.0, %v2404
      %v2406 = vpop.f32.mrf.mxu0
      %v2407 = vpop.f32.mrf.mxu0
      %v2408 = vadd.f32 0.0, %v2407
      %v2409 = vpop.f32.mrf.mxu0
      %2410 = vdwg.mxu0
      %v2411 = vadd.f32 %v2269, %v2405
      %v2412 = vadd.f32 %v2272, %v2408
      %v2413 = vld [vmem:[%s1 + $0x550] sm:$0xf]
      %v2414 = vld [vmem:[%s1 + $0x558] sm:$0xf]
      %v2417 = vunpack.c.l.b16 %v2413
      %v2418 = vunpack.c.l.b16 %v2414
      %v2419 = vpack.c.b16 %v2418, %v2417
      %v2421 = vsel %vm1080, %v2419, 0
      %2423 = vmatprep.subr.bf16.mxu0 0
      %2424 = vmatpush1.bf16.msra.mxu0 0
      %2425 = vmatprep.subr.bf16.mxu0 0
      %2426 = vmatpush1.bf16.msra.mxu0 0
      %2427 = vmatprep.subr.bf16.mxu0 0
      %2428 = vmatpush1.bf16.msra.mxu0 0
      %2429 = vmatprep.subr.bf16.mxu0 0
      %2430 = vmatpush1.bf16.msra.mxu0 0
      %2431 = vmatprep.subr.bf16.mxu0 0
      %2432 = vmatpush1.bf16.msra.mxu0 0
      %2433 = vmatprep.subr.bf16.mxu0 0
      %2434 = vmatpush1.bf16.msra.mxu0 0
      %2435 = vmatprep.subr.bf16.mxu0 0
      %2436 = vmatpush1.bf16.msra.mxu0 0
      %2437 = vmatprep.subr.bf16.mxu0 0
      %2438 = vmatpush1.bf16.msra.mxu0 %v2011
      %2439 = vmatprep.subr.bf16.mxu0 0
      %2440 = vmatpush2.bf16.msra.mxu0 0
      %2441 = vmatprep.subr.bf16.mxu0 0
      %2442 = vmatpush2.bf16.msra.mxu0 0
      %2443 = vmatprep.subr.bf16.mxu0 0
      %2444 = vmatpush2.bf16.msra.mxu0 0
      %2445 = vmatprep.subr.bf16.mxu0 0
      %2446 = vmatpush2.bf16.msra.mxu0 0
      %2447 = vmatprep.subr.bf16.mxu0 0
      %2448 = vmatpush2.bf16.msra.mxu0 0
      %2449 = vmatprep.subr.bf16.mxu0 0
      %2450 = vmatpush2.bf16.msra.mxu0 0
      %2451 = vmatprep.subr.bf16.mxu0 0
      %2452 = vmatpush2.bf16.msra.mxu0 0
      %2453 = vmatprep.subr.bf16.mxu0 0
      %2454 = vmatpush2.bf16.msra.mxu0 0
      %2455 = vmatprep.mubr.bf16.mxu0 0
      %2456 = vmatmul.mubr.bf16.gmra.mxu0 %v2421
      %v2457 = vpop.f32.mrf.mxu0
      %v2458 = vadd.f32 0.0, %v2457
      %v2459 = vpop.f32.mrf.mxu0
      %v2460 = vpop.f32.mrf.mxu0
      %v2461 = vadd.f32 0.0, %v2460
      %v2462 = vpop.f32.mrf.mxu0
      %2463 = vdwg.mxu0
      %v2464 = vpack.c.bf16 %v2461, %v2458
      %v2465 = vld [vmem:[%s1 + $0x560] sm:$0xf]
      %v2466 = vld [vmem:[%s1 + $0x568] sm:$0xf]
      %v2467 = vld [vmem:[%s1 + $0x570] sm:$0xf]
      %v2468 = vld [vmem:[%s1 + $0x578] sm:$0xf]
      %v2469 = vld [vmem:[%s1 + $0x580] sm:$0xf]
      %v2470 = vld [vmem:[%s1 + $0x588] sm:$0xf]
      %v2471 = vld [vmem:[%s1 + $0x590] sm:$0xf]
      %v2472 = vld [vmem:[%s1 + $0x598] sm:$0xf]
      %v2473 = vld [vmem:[%s1 + $0x5a0] sm:$0xf]
      %v2474 = vld [vmem:[%s1 + $0x5a8] sm:$0xf]
      %v2485 = vunpack.c.l.b16 %v2465
      %v2486 = vunpack.c.l.b16 %v2466
      %v2487 = vunpack.c.l.b16 %v2467
      %v2488 = vunpack.c.l.b16 %v2468
      %v2489 = vunpack.c.l.b16 %v2469
      %v2490 = vunpack.c.l.b16 %v2470
      %v2491 = vunpack.c.l.b16 %v2471
      %v2492 = vunpack.c.l.b16 %v2472
      %v2493 = vunpack.c.l.b16 %v2473
      %v2494 = vunpack.c.l.b16 %v2474
      %v2495 = vpack.c.b16 %v2486, %v2485
      %v2496 = vpack.c.b16 %v2488, %v2487
      %v2497 = vpack.c.b16 %v2490, %v2489
      %v2498 = vpack.c.b16 %v2492, %v2491
      %v2499 = vpack.c.b16 %v2494, %v2493
      %v2506 = vsel %vm1226, %v2464, 0
      %2508 = vmatprep.subr.bf16.mxu0 0
      %2509 = vmatpush1.bf16.msra.mxu0 0
      %2510 = vmatprep.subr.bf16.mxu0 0
      %2511 = vmatpush1.bf16.msra.mxu0 0
      %2512 = vmatprep.subr.bf16.mxu0 0
      %2513 = vmatpush1.bf16.msra.mxu0 0
      %2514 = vmatprep.subr.bf16.mxu0 0
      %2515 = vmatpush1.bf16.msra.mxu0 %v2499
      %2516 = vmatprep.subr.bf16.mxu0 0
      %2517 = vmatpush1.bf16.msra.mxu0 %v2498
      %2518 = vmatprep.subr.bf16.mxu0 0
      %2519 = vmatpush1.bf16.msra.mxu0 %v2497
      %2520 = vmatprep.subr.bf16.mxu0 0
      %2521 = vmatpush1.bf16.msra.mxu0 %v2496
      %2522 = vmatprep.subr.bf16.mxu0 0
      %2523 = vmatpush1.bf16.msra.mxu0 %v2495
      %2524 = vmatprep.subr.bf16.mxu0 0
      %2525 = vmatpush2.bf16.msra.mxu0 0
      %2526 = vmatprep.subr.bf16.mxu0 0
      %2527 = vmatpush2.bf16.msra.mxu0 0
      %2528 = vmatprep.subr.bf16.mxu0 0
      %2529 = vmatpush2.bf16.msra.mxu0 0
      %2530 = vmatprep.subr.bf16.mxu0 0
      %2531 = vmatpush2.bf16.msra.mxu0 0
      %2532 = vmatprep.subr.bf16.mxu0 0
      %2533 = vmatpush2.bf16.msra.mxu0 0
      %2534 = vmatprep.subr.bf16.mxu0 0
      %2535 = vmatpush2.bf16.msra.mxu0 0
      %2536 = vmatprep.subr.bf16.mxu0 0
      %2537 = vmatpush2.bf16.msra.mxu0 0
      %2538 = vmatprep.subr.bf16.mxu0 0
      %2539 = vmatpush2.bf16.msra.mxu0 0
      %2540 = vmatprep.mubr.bf16.mxu0 0
      %2541 = vmatmul.mubr.bf16.gmra.mxu0 %v2506
      %v2542 = vpop.f32.mrf.mxu0
      %v2543 = vadd.f32 0.0, %v2542
      %v2544 = vpop.f32.mrf.mxu0
      %v2545 = vpop.f32.mrf.mxu0
      %v2546 = vadd.f32 0.0, %v2545
      %v2547 = vpop.f32.mrf.mxu0
      %2548 = vdwg.mxu0
      %v2549 = vadd.f32 %v2411, %v2543
      %v2550 = vadd.f32 %v2412, %v2546
      %v2551 = vld [vmem:[%s1 + $0x5b0] sm:$0xf]
      %v2552 = vld [vmem:[%s1 + $0x5b8] sm:$0xf]
      %v2555 = vunpack.c.l.b16 %v2551
      %v2556 = vunpack.c.l.b16 %v2552
      %v2557 = vpack.c.b16 %v2556, %v2555
      %v2559 = vsel %vm1080, %v2557, 0
      %2561 = vmatprep.subr.bf16.mxu0 0
      %2562 = vmatpush1.bf16.msra.mxu0 0
      %2563 = vmatprep.subr.bf16.mxu0 0
      %2564 = vmatpush1.bf16.msra.mxu0 0
      %2565 = vmatprep.subr.bf16.mxu0 0
      %2566 = vmatpush1.bf16.msra.mxu0 0
      %2567 = vmatprep.subr.bf16.mxu0 0
      %2568 = vmatpush1.bf16.msra.mxu0 0
      %2569 = vmatprep.subr.bf16.mxu0 0
      %2570 = vmatpush1.bf16.msra.mxu0 0
      %2571 = vmatprep.subr.bf16.mxu0 0
      %2572 = vmatpush1.bf16.msra.mxu0 0
      %2573 = vmatprep.subr.bf16.mxu0 0
      %2574 = vmatpush1.bf16.msra.mxu0 0
      %2575 = vmatprep.subr.bf16.mxu0 0
      %2576 = vmatpush1.bf16.msra.mxu0 %v2011
      %2577 = vmatprep.subr.bf16.mxu0 0
      %2578 = vmatpush2.bf16.msra.mxu0 0
      %2579 = vmatprep.subr.bf16.mxu0 0
      %2580 = vmatpush2.bf16.msra.mxu0 0
      %2581 = vmatprep.subr.bf16.mxu0 0
      %2582 = vmatpush2.bf16.msra.mxu0 0
      %2583 = vmatprep.subr.bf16.mxu0 0
      %2584 = vmatpush2.bf16.msra.mxu0 0
      %2585 = vmatprep.subr.bf16.mxu0 0
      %2586 = vmatpush2.bf16.msra.mxu0 0
      %2587 = vmatprep.subr.bf16.mxu0 0
      %2588 = vmatpush2.bf16.msra.mxu0 0
      %2589 = vmatprep.subr.bf16.mxu0 0
      %2590 = vmatpush2.bf16.msra.mxu0 0
      %2591 = vmatprep.subr.bf16.mxu0 0
      %2592 = vmatpush2.bf16.msra.mxu0 0
      %2593 = vmatprep.mubr.bf16.mxu0 0
      %2594 = vmatmul.mubr.bf16.gmra.mxu0 %v2559
      %v2595 = vpop.f32.mrf.mxu0
      %v2596 = vadd.f32 0.0, %v2595
      %v2597 = vpop.f32.mrf.mxu0
      %v2598 = vpop.f32.mrf.mxu0
      %v2599 = vadd.f32 0.0, %v2598
      %v2600 = vpop.f32.mrf.mxu0
      %2601 = vdwg.mxu0
      %v2602 = vpack.c.bf16 %v2599, %v2596
      %v2603 = vld [vmem:[%s1 + $0x5c0] sm:$0xf]
      %v2604 = vld [vmem:[%s1 + $0x5c8] sm:$0xf]
      %v2605 = vld [vmem:[%s1 + $0x5d0] sm:$0xf]
      %v2606 = vld [vmem:[%s1 + $0x5d8] sm:$0xf]
      %v2607 = vld [vmem:[%s1 + $0x5e0] sm:$0xf]
      %v2608 = vld [vmem:[%s1 + $0x5e8] sm:$0xf]
      %v2609 = vld [vmem:[%s1 + $0x5f0] sm:$0xf]
      %v2610 = vld [vmem:[%s1 + $0x5f8] sm:$0xf]
      %v2611 = vld [vmem:[%s1 + $0x600] sm:$0xf]
      %v2612 = vld [vmem:[%s1 + $0x608] sm:$0xf]
      %v2623 = vunpack.c.l.b16 %v2603
      %v2624 = vunpack.c.l.b16 %v2604
      %v2625 = vunpack.c.l.b16 %v2605
      %v2626 = vunpack.c.l.b16 %v2606
      %v2627 = vunpack.c.l.b16 %v2607
      %v2628 = vunpack.c.l.b16 %v2608
      %v2629 = vunpack.c.l.b16 %v2609
      %v2630 = vunpack.c.l.b16 %v2610
      %v2631 = vunpack.c.l.b16 %v2611
      %v2632 = vunpack.c.l.b16 %v2612
      %v2633 = vpack.c.b16 %v2624, %v2623
      %v2634 = vpack.c.b16 %v2626, %v2625
      %v2635 = vpack.c.b16 %v2628, %v2627
      %v2636 = vpack.c.b16 %v2630, %v2629
      %v2637 = vpack.c.b16 %v2632, %v2631
      %v2644 = vsel %vm1226, %v2602, 0
      %2646 = vmatprep.subr.bf16.mxu0 0
      %2647 = vmatpush1.bf16.msra.mxu0 0
      %2648 = vmatprep.subr.bf16.mxu0 0
      %2649 = vmatpush1.bf16.msra.mxu0 0
      %2650 = vmatprep.subr.bf16.mxu0 0
      %2651 = vmatpush1.bf16.msra.mxu0 0
      %2652 = vmatprep.subr.bf16.mxu0 0
      %2653 = vmatpush1.bf16.msra.mxu0 %v2637
      %2654 = vmatprep.subr.bf16.mxu0 0
      %2655 = vmatpush1.bf16.msra.mxu0 %v2636
      %2656 = vmatprep.subr.bf16.mxu0 0
      %2657 = vmatpush1.bf16.msra.mxu0 %v2635
      %2658 = vmatprep.subr.bf16.mxu0 0
      %2659 = vmatpush1.bf16.msra.mxu0 %v2634
      %2660 = vmatprep.subr.bf16.mxu0 0
      %2661 = vmatpush1.bf16.msra.mxu0 %v2633
      %2662 = vmatprep.subr.bf16.mxu0 0
      %2663 = vmatpush2.bf16.msra.mxu0 0
      %2664 = vmatprep.subr.bf16.mxu0 0
      %2665 = vmatpush2.bf16.msra.mxu0 0
      %2666 = vmatprep.subr.bf16.mxu0 0
      %2667 = vmatpush2.bf16.msra.mxu0 0
      %2668 = vmatprep.subr.bf16.mxu0 0
      %2669 = vmatpush2.bf16.msra.mxu0 0
      %2670 = vmatprep.subr.bf16.mxu0 0
      %2671 = vmatpush2.bf16.msra.mxu0 0
      %2672 = vmatprep.subr.bf16.mxu0 0
      %2673 = vmatpush2.bf16.msra.mxu0 0
      %2674 = vmatprep.subr.bf16.mxu0 0
      %2675 = vmatpush2.bf16.msra.mxu0 0
      %2676 = vmatprep.subr.bf16.mxu0 0
      %2677 = vmatpush2.bf16.msra.mxu0 0
      %2678 = vmatprep.mubr.bf16.mxu0 0
      %2679 = vmatmul.mubr.bf16.gmra.mxu0 %v2644
      %v2680 = vpop.f32.mrf.mxu0
      %v2681 = vadd.f32 0.0, %v2680
      %v2682 = vpop.f32.mrf.mxu0
      %v2683 = vpop.f32.mrf.mxu0
      %v2684 = vadd.f32 0.0, %v2683
      %v2685 = vpop.f32.mrf.mxu0
      %2686 = vdwg.mxu0
      %v2687 = vadd.f32 %v2549, %v2681
      %v2688 = vadd.f32 %v2550, %v2684
      %v2689 = vld [vmem:[%s1 + $0x610] sm:$0x1]
      %v2690 = vunpack.c.l.bf16 %v2689
      %v2691 = vlaneseq
      %v2692 = vshrl.u32 %v2691, 7
      %v2693 = vsub.s32 0, %v2692
      %v2694 = vrot.slane %v2690, %v2693
      %v2695 = vadd.f32 %v2687, %v2694
      %v2696 = vadd.f32 %v2688, %v2694
      %v2697 = vmax.f32 %v2695, 0.0
      %v2698 = vmax.f32 %v2696, 0.0
      %v2699 = vpack.c.bf16 %v2698, %v2697
      %v2700 = vld [vmem:[%s1 + $0x618] sm:$0xf]
      %v2701 = vld [vmem:[%s1 + $0x620] sm:$0xf]
      %v2702 = vld [vmem:[%s1 + $0x628] sm:$0xf]
      %v2703 = vld [vmem:[%s1 + $0x630] sm:$0x3]
      %v2708 = vunpack.c.l.b16 %v2700
      %v2709 = vunpack.c.l.b16 %v2701
      %v2710 = vunpack.c.l.b16 %v2702
      %v2711 = vunpack.c.l.b16 %v2703
      %v2712 = vpack.c.b16 %v2709, %v2708
      %v2713 = vpack.c.b16 %v2711, %v2710
      %vm2714 = vcmask 121856
      %v2716 = vsel %vm2714, %v2712, 0
      %v2719 = vsel %vm2714, %v2713, 0
      %vm2721 = vcmask 1046528
      %vm2722 = vcmask 1047552
      %v2723 = vsel %vm2721, 4294967295, 65535
      %v2724 = vsel %vm2722, %v2723, 0
      %v2726 = vand.u32 %v2699, %v2724
      %2728 = vmatprep.subr.bf16.mxu0 0
      %2729 = vmatpush1.bf16.msra.mxu0 0
      %2730 = vmatprep.subr.bf16.mxu0 0
      %2731 = vmatpush1.bf16.msra.mxu0 0
      %2732 = vmatprep.subr.bf16.mxu0 0
      %2733 = vmatpush1.bf16.msra.mxu0 0
      %2734 = vmatprep.subr.bf16.mxu0 0
      %2735 = vmatpush1.bf16.msra.mxu0 0
      %2736 = vmatprep.subr.bf16.mxu0 0
      %2737 = vmatpush1.bf16.msra.mxu0 0
      %2738 = vmatprep.subr.bf16.mxu0 0
      %2739 = vmatpush1.bf16.msra.mxu0 0
      %2740 = vmatprep.subr.bf16.mxu0 0
      %2741 = vmatpush1.bf16.msra.mxu0 0
      %2742 = vmatprep.subr.bf16.mxu0 0
      %2743 = vmatpush1.bf16.msra.mxu0 %v2726
      %2744 = vmatprep.subr.bf16.mxu0 0
      %2745 = vmatpush2.bf16.msra.mxu0 0
      %2746 = vmatprep.subr.bf16.mxu0 0
      %2747 = vmatpush2.bf16.msra.mxu0 0
      %2748 = vmatprep.subr.bf16.mxu0 0
      %2749 = vmatpush2.bf16.msra.mxu0 0
      %2750 = vmatprep.subr.bf16.mxu0 0
      %2751 = vmatpush2.bf16.msra.mxu0 0
      %2752 = vmatprep.subr.bf16.mxu0 0
      %2753 = vmatpush2.bf16.msra.mxu0 0
      %2754 = vmatprep.subr.bf16.mxu0 0
      %2755 = vmatpush2.bf16.msra.mxu0 0
      %2756 = vmatprep.subr.bf16.mxu0 0
      %2757 = vmatpush2.bf16.msra.mxu0 0
      %2758 = vmatprep.subr.bf16.mxu0 0
      %2759 = vmatpush2.bf16.msra.mxu0 0
      %2760 = vmatprep.mubr.bf16.mxu0 0
      %2761 = vmatmul.mubr.bf16.gmra.mxu0 %v2716
      %v2762 = vpop.f32.mrf.mxu0
      %v2763 = vadd.f32 0.0, %v2762
      %v2764 = vpop.f32.mrf.mxu0
      %v2765 = vpop.f32.mrf.mxu0
      %v2766 = vadd.f32 0.0, %v2765
      %v2767 = vpop.f32.mrf.mxu0
      %2768 = vmatprep.mubr.bf16.mxu0 0
      %2769 = vmatmul.mubr.bf16.gmra.mxu0 %v2719
      %v2770 = vpop.f32.mrf.mxu0
      %v2771 = vadd.f32 0.0, %v2770
      %v2772 = vpop.f32.mrf.mxu0
      %v2773 = vpop.f32.mrf.mxu0
      %v2774 = vadd.f32 0.0, %v2773
      %v2775 = vpop.f32.mrf.mxu0
      %2776 = vdwg.mxu0
      %v2777 = vpack.c.bf16 %v2766, %v2763
      %v2778 = vpack.c.bf16 %v2774, %v2771
      %v2779 = vld [vmem:[%s1 + $0x638] sm:$0xf]
      %v2780 = vld [vmem:[%s1 + $0x640] sm:$0xf]
      %v2781 = vld [vmem:[%s1 + $0x648] sm:$0xf]
      %v2782 = vld [vmem:[%s1 + $0x650] sm:$0xf]
      %v2783 = vld [vmem:[%s1 + $0x658] sm:$0xf]
      %v2784 = vld [vmem:[%s1 + $0x660] sm:$0xf]
      %v2785 = vld [vmem:[%s1 + $0x668] sm:$0xf]
      %v2786 = vld [vmem:[%s1 + $0x670] sm:$0xf]
      %v2787 = vld [vmem:[%s1 + $0x678] sm:$0xf]
      %v2788 = vld [vmem:[%s1 + $0x680] sm:$0xf]
      %v2789 = vld [vmem:[%s1 + $0x688] sm:$0xf]
      %v2790 = vld [vmem:[%s1 + $0x690] sm:$0xf]
      %v2791 = vld [vmem:[%s1 + $0x698] sm:$0xf]
      %v2792 = vld [vmem:[%s1 + $0x6a0] sm:$0xf]
      %v2793 = vld [vmem:[%s1 + $0x6a8] sm:$0xf]
      %v2794 = vld [vmem:[%s1 + $0x6b0] sm:$0xf]
      %v2795 = vld [vmem:[%s1 + $0x6b8] sm:$0xf]
      %v2796 = vld [vmem:[%s1 + $0x6c0] sm:$0xf]
      %v2797 = vld [vmem:[%s1 + $0x6c8] sm:$0x3]
      %v2802 = vunpack.c.l.b16 %v2794
      %v2803 = vunpack.c.l.b16 %v2795
      %v2804 = vunpack.c.l.b16 %v2796
      %v2805 = vunpack.c.l.b16 %v2797
      %v2806 = vpack.c.b16 %v2803, %v2802
      %v2807 = vpack.c.b16 %v2805, %v2804
      %v2809 = vsel %vm2714, %v2806, 0
      %v2812 = vsel %vm2714, %v2807, 0
      %2814 = vmatprep.subr.bf16.mxu0 0
      %2815 = vmatpush1.bf16.msra.mxu0 0
      %2816 = vmatprep.subr.bf16.mxu0 0
      %2817 = vmatpush1.bf16.msra.mxu0 0
      %2818 = vmatprep.subr.bf16.mxu0 0
      %2819 = vmatpush1.bf16.msra.mxu0 0
      %2820 = vmatprep.subr.bf16.mxu0 0
      %2821 = vmatpush1.bf16.msra.mxu0 0
      %2822 = vmatprep.subr.bf16.mxu0 0
      %2823 = vmatpush1.bf16.msra.mxu0 0
      %2824 = vmatprep.subr.bf16.mxu0 0
      %2825 = vmatpush1.bf16.msra.mxu0 0
      %2826 = vmatprep.subr.bf16.mxu0 0
      %2827 = vmatpush1.bf16.msra.mxu0 0
      %2828 = vmatprep.subr.bf16.mxu0 0
      %2829 = vmatpush1.bf16.msra.mxu0 %v2726
      %2830 = vmatprep.subr.bf16.mxu0 0
      %2831 = vmatpush2.bf16.msra.mxu0 0
      %2832 = vmatprep.subr.bf16.mxu0 0
      %2833 = vmatpush2.bf16.msra.mxu0 0
      %2834 = vmatprep.subr.bf16.mxu0 0
      %2835 = vmatpush2.bf16.msra.mxu0 0
      %2836 = vmatprep.subr.bf16.mxu0 0
      %2837 = vmatpush2.bf16.msra.mxu0 0
      %2838 = vmatprep.subr.bf16.mxu0 0
      %2839 = vmatpush2.bf16.msra.mxu0 0
      %2840 = vmatprep.subr.bf16.mxu0 0
      %2841 = vmatpush2.bf16.msra.mxu0 0
      %2842 = vmatprep.subr.bf16.mxu0 0
      %2843 = vmatpush2.bf16.msra.mxu0 0
      %2844 = vmatprep.subr.bf16.mxu0 0
      %2845 = vmatpush2.bf16.msra.mxu0 0
      %2846 = vmatprep.mubr.bf16.mxu0 0
      %2847 = vmatmul.mubr.bf16.gmra.mxu0 %v2809
      %v2848 = vpop.f32.mrf.mxu0
      %v2849 = vadd.f32 0.0, %v2848
      %v2850 = vpop.f32.mrf.mxu0
      %v2851 = vpop.f32.mrf.mxu0
      %v2852 = vadd.f32 0.0, %v2851
      %v2853 = vpop.f32.mrf.mxu0
      %2854 = vmatprep.mubr.bf16.mxu0 0
      %2855 = vmatmul.mubr.bf16.gmra.mxu0 %v2812
      %v2856 = vpop.f32.mrf.mxu0
      %v2857 = vadd.f32 0.0, %v2856
      %v2858 = vpop.f32.mrf.mxu0
      %v2859 = vpop.f32.mrf.mxu0
      %v2860 = vadd.f32 0.0, %v2859
      %v2861 = vpop.f32.mrf.mxu0
      %2862 = vdwg.mxu0
      %v2863 = vpack.c.bf16 %v2852, %v2849
      %v2864 = vpack.c.bf16 %v2860, %v2857
      %v2865 = vld [vmem:[%s1 + $0x6d0] sm:$0xf]
      %v2866 = vld [vmem:[%s1 + $0x6d8] sm:$0xf]
      %v2867 = vld [vmem:[%s1 + $0x6e0] sm:$0xf]
      %v2868 = vld [vmem:[%s1 + $0x6e8] sm:$0xf]
      %v2869 = vld [vmem:[%s1 + $0x6f0] sm:$0xf]
      %v2870 = vld [vmem:[%s1 + $0x6f8] sm:$0xf]
      %v2871 = vld [vmem:[%s1 + $0x700] sm:$0xf]
      %v2872 = vld [vmem:[%s1 + $0x708] sm:$0xf]
      %v2873 = vld [vmem:[%s1 + $0x710] sm:$0xf]
      %v2874 = vld [vmem:[%s1 + $0x718] sm:$0xf]
      %v2875 = vld [vmem:[%s1 + $0x720] sm:$0xf]
      %v2876 = vld [vmem:[%s1 + $0x728] sm:$0xf]
      %v2877 = vld [vmem:[%s1 + $0x730] sm:$0xf]
      %v2878 = vld [vmem:[%s1 + $0x738] sm:$0xf]
      %v2879 = vld [vmem:[%s1 + $0x740] sm:$0xf]
      %v2895 = vunpack.c.l.b16 %v2865
      %v2896 = vunpack.c.l.b16 %v2866
      %v2897 = vunpack.c.l.b16 %v2867
      %v2898 = vunpack.c.l.b16 %v2868
      %v2899 = vunpack.c.l.b16 %v2869
      %v2900 = vunpack.c.l.b16 %v2870
      %v2901 = vunpack.c.l.b16 %v2871
      %v2902 = vunpack.c.l.b16 %v2872
      %v2903 = vunpack.c.l.b16 %v2873
      %v2904 = vunpack.c.l.b16 %v2874
      %v2905 = vunpack.c.l.b16 %v2875
      %v2906 = vunpack.c.l.b16 %v2876
      %v2907 = vunpack.c.l.b16 %v2877
      %v2908 = vunpack.c.l.b16 %v2878
      %v2909 = vunpack.c.l.b16 %v2879
      %v2910 = vpack.c.b16 %v2896, %v2895
      %v2911 = vpack.c.b16 %v2898, %v2897
      %v2912 = vpack.c.b16 %v2900, %v2899
      %v2913 = vpack.c.b16 %v2902, %v2901
      %v2914 = vpack.c.b16 %v2904, %v2903
      %v2915 = vpack.c.b16 %v2906, %v2905
      %v2916 = vpack.c.b16 %v2908, %v2907
      %v2917 = vpack.c.b16 %v2909, %v2909
      %vm2925 = vcmask 982016
      %v2927 = vsel %vm2925, %v2863, 0
      %v2930 = vsel %vm2925, %v2864, 0
      %v2933 = vsel %vm1594, %v2917, 0
      %2935 = vmatprep.subr.bf16.mxu0 0
      %2936 = vmatpush1.bf16.msra.mxu0 %v2933
      %2937 = vmatprep.subr.bf16.mxu0 0
      %2938 = vmatpush1.bf16.msra.mxu0 %v2916
      %2939 = vmatprep.subr.bf16.mxu0 0
      %2940 = vmatpush1.bf16.msra.mxu0 %v2915
      %2941 = vmatprep.subr.bf16.mxu0 0
      %2942 = vmatpush1.bf16.msra.mxu0 %v2914
      %2943 = vmatprep.subr.bf16.mxu0 0
      %2944 = vmatpush1.bf16.msra.mxu0 %v2913
      %2945 = vmatprep.subr.bf16.mxu0 0
      %2946 = vmatpush1.bf16.msra.mxu0 %v2912
      %2947 = vmatprep.subr.bf16.mxu0 0
      %2948 = vmatpush1.bf16.msra.mxu0 %v2911
      %2949 = vmatprep.subr.bf16.mxu0 0
      %2950 = vmatpush1.bf16.msra.mxu0 %v2910
      %2951 = vmatprep.subr.bf16.mxu0 0
      %2952 = vmatpush2.bf16.msra.mxu0 0
      %2953 = vmatprep.subr.bf16.mxu0 0
      %2954 = vmatpush2.bf16.msra.mxu0 0
      %2955 = vmatprep.subr.bf16.mxu0 0
      %2956 = vmatpush2.bf16.msra.mxu0 0
      %2957 = vmatprep.subr.bf16.mxu0 0
      %2958 = vmatpush2.bf16.msra.mxu0 0
      %2959 = vmatprep.subr.bf16.mxu0 0
      %2960 = vmatpush2.bf16.msra.mxu0 0
      %2961 = vmatprep.subr.bf16.mxu0 0
      %2962 = vmatpush2.bf16.msra.mxu0 0
      %2963 = vmatprep.subr.bf16.mxu0 0
      %2964 = vmatpush2.bf16.msra.mxu0 0
      %2965 = vmatprep.subr.bf16.mxu0 0
      %2966 = vmatpush2.bf16.msra.mxu0 0
      %2967 = vmatprep.mubr.bf16.mxu0 0
      %2968 = vmatmul.mubr.bf16.gmra.mxu0 %v2927
      %v2969 = vpop.f32.mrf.mxu0
      %v2970 = vadd.f32 0.0, %v2969
      %v2971 = vpop.f32.mrf.mxu0
      %v2972 = vpop.f32.mrf.mxu0
      %v2973 = vadd.f32 0.0, %v2972
      %v2974 = vpop.f32.mrf.mxu0
      %2975 = vmatprep.mubr.bf16.mxu0 0
      %2976 = vmatmul.mubr.bf16.gmra.mxu0 %v2930
      %v2977 = vpop.f32.mrf.mxu0
      %v2978 = vadd.f32 0.0, %v2977
      %v2979 = vpop.f32.mrf.mxu0
      %v2980 = vpop.f32.mrf.mxu0
      %v2981 = vadd.f32 0.0, %v2980
      %v2982 = vpop.f32.mrf.mxu0
      %2983 = vdwg.mxu0
      %v2999 = vunpack.c.l.b16 %v2779
      %v3000 = vunpack.c.l.b16 %v2780
      %v3001 = vunpack.c.l.b16 %v2781
      %v3002 = vunpack.c.l.b16 %v2782
      %v3003 = vunpack.c.l.b16 %v2783
      %v3004 = vunpack.c.l.b16 %v2784
      %v3005 = vunpack.c.l.b16 %v2785
      %v3006 = vunpack.c.l.b16 %v2786
      %v3007 = vunpack.c.l.b16 %v2787
      %v3008 = vunpack.c.l.b16 %v2788
      %v3009 = vunpack.c.l.b16 %v2789
      %v3010 = vunpack.c.l.b16 %v2790
      %v3011 = vunpack.c.l.b16 %v2791
      %v3012 = vunpack.c.l.b16 %v2792
      %v3013 = vunpack.c.l.b16 %v2793
      %v3014 = vpack.c.b16 %v3000, %v2999
      %v3015 = vpack.c.b16 %v3002, %v3001
      %v3016 = vpack.c.b16 %v3004, %v3003
      %v3017 = vpack.c.b16 %v3006, %v3005
      %v3018 = vpack.c.b16 %v3008, %v3007
      %v3019 = vpack.c.b16 %v3010, %v3009
      %v3020 = vpack.c.b16 %v3012, %v3011
      %v3021 = vpack.c.b16 %v3013, %v3013
      %v3030 = vsel %vm2925, %v2777, 0
      %v3033 = vsel %vm2925, %v2778, 0
      %v3036 = vsel %vm1594, %v3021, 0
      %3038 = vmatprep.subr.bf16.mxu0 0
      %3039 = vmatpush1.bf16.msra.mxu0 %v3036
      %3040 = vmatprep.subr.bf16.mxu0 0
      %3041 = vmatpush1.bf16.msra.mxu0 %v3020
      %3042 = vmatprep.subr.bf16.mxu0 0
      %3043 = vmatpush1.bf16.msra.mxu0 %v3019
      %3044 = vmatprep.subr.bf16.mxu0 0
      %3045 = vmatpush1.bf16.msra.mxu0 %v3018
      %3046 = vmatprep.subr.bf16.mxu0 0
      %3047 = vmatpush1.bf16.msra.mxu0 %v3017
      %3048 = vmatprep.subr.bf16.mxu0 0
      %3049 = vmatpush1.bf16.msra.mxu0 %v3016
      %3050 = vmatprep.subr.bf16.mxu0 0
      %3051 = vmatpush1.bf16.msra.mxu0 %v3015
      %3052 = vmatprep.subr.bf16.mxu0 0
      %3053 = vmatpush1.bf16.msra.mxu0 %v3014
      %3054 = vmatprep.subr.bf16.mxu0 0
      %3055 = vmatpush2.bf16.msra.mxu0 0
      %3056 = vmatprep.subr.bf16.mxu0 0
      %3057 = vmatpush2.bf16.msra.mxu0 0
      %3058 = vmatprep.subr.bf16.mxu0 0
      %3059 = vmatpush2.bf16.msra.mxu0 0
      %3060 = vmatprep.subr.bf16.mxu0 0
      %3061 = vmatpush2.bf16.msra.mxu0 0
      %3062 = vmatprep.subr.bf16.mxu0 0
      %3063 = vmatpush2.bf16.msra.mxu0 0
      %3064 = vmatprep.subr.bf16.mxu0 0
      %3065 = vmatpush2.bf16.msra.mxu0 0
      %3066 = vmatprep.subr.bf16.mxu0 0
      %3067 = vmatpush2.bf16.msra.mxu0 0
      %3068 = vmatprep.subr.bf16.mxu0 0
      %3069 = vmatpush2.bf16.msra.mxu0 0
      %3070 = vmatprep.mubr.bf16.mxu0 0
      %3071 = vmatmul.mubr.bf16.gmra.mxu0 %v3030
      %v3072 = vpop.f32.mrf.mxu0
      %v3073 = vadd.f32 %v2970, %v3072
      %v3074 = vpop.f32.mrf.mxu0
      %v3075 = vpop.f32.mrf.mxu0
      %v3076 = vadd.f32 %v2973, %v3075
      %v3077 = vpop.f32.mrf.mxu0
      %3078 = vmatprep.mubr.bf16.mxu0 0
      %3079 = vmatmul.mubr.bf16.gmra.mxu0 %v3033
      %v3080 = vpop.f32.mrf.mxu0
      %v3081 = vadd.f32 %v2978, %v3080
      %v3082 = vpop.f32.mrf.mxu0
      %v3083 = vpop.f32.mrf.mxu0
      %v3084 = vadd.f32 %v2981, %v3083
      %v3085 = vpop.f32.mrf.mxu0
      %3086 = vdwg.mxu0
      %v3087 = vld [vmem:[%s1 + $0x748] sm:$0x1]
      %v3088 = vunpack.c.l.bf16 %v3087
      %v3089 = vlaneseq
      %v3090 = vshrl.u32 %v3089, 7
      %v3091 = vsub.s32 0, %v3090
      %v3092 = vrot.slane %v3088, %v3091
      %v3093 = vadd.f32 %v3073, %v3092
      %v3094 = vadd.f32 %v3076, %v3092
      %v3095 = vadd.f32 %v3081, %v3092
      %v3096 = vadd.f32 %v3084, %v3092
      %v3097 = vtanh.pop %v3093
      %v3098 = vtanh.pop %v3094
      %v3099 = vtanh.pop %v3095
      %v3100 = vtanh.pop %v3096
      %3101 = vst.msk [vmem:[%s181] sm:$0xff] %vm375, %v3097
      %3102 = vst.msk [vmem:[%s181 + $0x8] sm:$0xff] %vm375, %v3098
      %3103 = vst.msk [vmem:[%s181 + $0x10] sm:$0xff] %vm375, %v3099
      %vm3104 = vcmask 683008
      %3105 = vst.msk [vmem:[%s181 + $0x18] sm:$0xf] %vm3104, %v3100
      %p3106 = scmp.lt.s32.totalorder %s15, 1
      %s3107 = scalar_select %p3106, %s15, 1
      %s3108 = smul.addr %s3107, 2
      %s3109 = scalar_lea.vmem %s2, %s3108
      %p3110 = scmp.lt.s32.totalorder %s15, 1
      %s3111 = scalar_select %p3110, %s15, 1
      %s3112 = smul.addr %s3111, 4
      %s3113 = smul.addr %s3112, 8
      %s3114 = scalar_lea.vmem %s3, %s3113
      // Predicated region
      $region29: #{forward.1} parent=27 // pred_check
        %p3115 = pneg %p80
      $region30: #{forward.1} parent=27 // pred_check_branch
        %3117 = sbr.rel (%p3115) target = $region32
      $region31: #{forward.1} parent=27 // pred_region
        _
      $region32: #{forward.1} parent=27 // pred_fallthru
        _
      // Predicated region
      $region33: #{forward.1} parent=27 // pred_check
        %p3118 = pneg %p106
      $region34: #{forward.1} parent=27 // pred_check_branch
        %3120 = sbr.rel (%p3118) target = $region36
      $region35: #{forward.1} parent=27 // pred_region
        _
      $region36: #{forward.1} parent=27 // pred_fallthru
        _
    $region28: #{forward.1} parent=5 // pred_fallthru
      _
    %p3121 = scmp.le.s32.totalorder 2, %s10
    // Predicated region
    $region37: #{forward.1} parent=5 // pred_check
      %p3122 = pneg %p3121
    $region38: #{forward.1} parent=5 // pred_check_branch
      %3124 = sbr.rel (%p3122) target = $region40
    $region39: #{forward.1} parent=5 // pred_region
      %s3125 = ssub.s32 %s10, 2
      // Predicated region
      $region41: #{forward.1} parent=39 // pred_check
        %p3126 = pneg %p86
      $region42: #{forward.1} parent=39 // pred_check_branch
        %3128 = sbr.rel (%p3126) target = $region44
      $region43: #{forward.1} parent=39 // pred_region
        %p3129 = scmp.lt.s32.totalorder %s16, 1
        %s3130 = scalar_select %p3129, %s16, 1
        %s3131 = smul.addr %s3130, 2
        %s3132 = scalar_lea.vmem %s2, %s3131
      $region44: #{forward.1} parent=39 // pred_fallthru
        _
      // Predicated region
      $region45: #{forward.1} parent=39 // pred_check
        %p3133 = pneg %p112
      $region46: #{forward.1} parent=39 // pred_check_branch
        %3135 = sbr.rel (%p3133) target = $region48
      $region47: #{forward.1} parent=39 // pred_region
        %p3136 = scmp.lt.s32.totalorder %s16, 1
        %s3137 = scalar_select %p3136, %s16, 1
        %s3138 = smul.addr %s3137, 4
        %s3139 = smul.addr %s3138, 8
        %s3140 = scalar_lea.vmem %s3, %s3139
      $region48: #{forward.1} parent=39 // pred_fallthru
        _
    $region40: #{forward.1} parent=5 // pred_fallthru
      _
  $region6: #{forward.1} parent=0 // loop_footer
    %s14 = sadd.s32 1, %s10
  $region7: #{forward.1} parent=0 // loop_footer_branch
    %9 = sbr.rel target = $region3
  $region8: #{forward.1} parent=0 // loop_exit
    _

</llo_original>
